<compile_context>
chip_gen: v6e
topology: v6e:2x2x1
jax: 0.10.0
libtpu: 0.0.40
codegen_flags: <defaults>
</compile_context>

<pallas_src>
from functools import partial

import jax
import jax.numpy as jnp
from jax.experimental import pallas as pl
from jax.experimental.pallas import tpu as pltpu


# ---------------------------------------------------------------------------
# Fused Covpool + Newton-Schulz matrix square root (isqrtm)
# ---------------------------------------------------------------------------
def _covpool_isqrt_kernel(x_ref, o_ref, *, iterN, m):
    """x_ref: (K, d, M) f32 block.  o_ref: (K, d, d) f32 block."""
    x = x_ref[...]                                    # (K, d, M) f32
    K, d, _ = x.shape
    inv_m = 1.0 / m

    # Per-channel means in f32 (both orientations come from lane reductions,
    # so no explicit (d,1)->(1,d) relayout/transposes are needed).
    mu_c = jnp.sum(x, axis=2, keepdims=True) * inv_m          # (K, d, 1)
    mu_r = jnp.sum(x, axis=2) * inv_m                         # (K, d) lanes

    # Raw second moment on the MXU: bf16 operands, f32 accumulation.
    # Contracts the last (M) axis of both operands (A @ B^T form); Mosaic
    # masks the unaligned M=H*W lanes of the block.
    xb = x.astype(jnp.bfloat16)
    gram = jnp.einsum("kim,kjm->kij", xb, xb,
                      preferred_element_type=jnp.float32)     # (K, d, d) f32

    # covpool:  cov = X ((1/M)I - (1/M^2) 11^T) X^T = (1/M) X X^T - mu mu^T
    cov = gram * inv_m - mu_c * mu_r[:, None, :]

    eye = jnp.eye(d, dtype=jnp.float32)
    # normA = (1/3) * sum(cov * 3I) = trace(cov), per sample (mask, no gather).
    trA = jnp.sum(jnp.sum(cov * eye, axis=2, keepdims=True),
                  axis=1, keepdims=True)                      # (K, 1, 1)
    # Cheap insurance against a degenerate zero-trace sample (the PyTorch
    # reference would produce NaN there); no effect on normal inputs.
    trA = jnp.maximum(trA, 1e-20)
    A = cov * (1.0 / trA)

    # Hoisted once (JAX does not CSE broadcast_in_dim inside the loop).
    I3 = jnp.broadcast_to(3.0 * eye, (K, d, d))

    def bmm(a, b):
        # bf16 operands + f32 accumulation: native MXU rate, pinned precision.
        return jnp.einsum("bij,bjk->bik",
                          a.astype(jnp.bfloat16), b.astype(jnp.bfloat16),
                          preferred_element_type=jnp.float32)

    ZY = 0.5 * (I3 - A)
    if iterN < 2:
        YZY = bmm(A, ZY)
    else:
        Y = bmm(A, ZY)
        Z = ZY
        for _ in range(1, iterN - 1):
            ZY = 0.5 * (I3 - bmm(Z, Y))
            Y, Z = bmm(Y, ZY), bmm(ZY, Z)
        YZY = 0.5 * bmm(Y, I3 - bmm(Z, Y))

    o_ref[...] = YZY * jnp.sqrt(trA)


def covpool_isqrt(x_bdm, *, iterN, k_block):
    """x_bdm: (B, d, M) f32.  Returns (B, d, d) f32."""
    B, d, M = x_bdm.shape
    grid_b = pl.cdiv(B, k_block)          # tail block is masked by Pallas
    kernel = partial(_covpool_isqrt_kernel, iterN=iterN, m=M)
    return pl.pallas_call(
        kernel,
        out_shape=jax.ShapeDtypeStruct((B, d, d), jnp.float32),
        grid_spec=pltpu.PrefetchScalarGridSpec(
            num_scalar_prefetch=0,
            grid=(grid_b,),
            # Last block dim equals the full array M (unaligned is allowed
            # when block dim == array dim); d=128 is sublane-aligned.
            in_specs=[pl.BlockSpec((k_block, d, M), lambda b: (b, 0, 0))],
            out_specs=pl.BlockSpec((k_block, d, d), lambda b: (b, 0, 0)),
        ),
        compiler_params=pltpu.CompilerParams(
            dimension_semantics=("parallel",),
            vmem_limit_bytes=32 * 1024 * 1024),   # raises v5e's 16 MiB default
    )(x_bdm)


# ---------------------------------------------------------------------------
# A_MPNCOV.forward: covpool -> isqrtm(3) -> tritovec
# ---------------------------------------------------------------------------
def a_mpncov_forward(x, iterN=3, k_block=8):
    """x: (B, d, H, W) f32. Returns (B, d*(d+1)//2, 1) f32 (matches PyTorch)."""
    B, d, H, W = x.shape
    M = H * W
    x = x.reshape(B, d, M)    # contiguous-dim merge: no HBM copy under jit

    # Keep at least two grid steps when B allows it, so the "parallel" batch
    # axis can still be sharded across v7x's two TensorCores.
    if B > 1:
        k_block = max(1, min(k_block, (B + 1) // 2))
    else:
        k_block = 1

    y = covpool_isqrt(x, iterN=iterN, k_block=k_block)        # (B, d, d) f32

    # Tritovec: row-major upper-triangular (incl. diagonal) gather.
    # TODO(synk): the triu gather (torch nonzero + advanced indexing) is left
    # as plain XLA indexing glue; no clean lane-dense Pallas gather at this
    # size and it is negligible for small B.
    iu_r, iu_c = jnp.triu_indices(d)
    flat = y.reshape(B, d * d)
    return flat[:, iu_r * d + iu_c][..., None]                # (B, d*(d+1)//2, 1)


# ---------------------------------------------------------------------------
# Pure-JAX f32 reference (mirrors the PyTorch module) for validation.
# ---------------------------------------------------------------------------
def _reference_forward(x, iterN=3):
    B, d, H, W = x.shape
    M = H * W
    xr = x.reshape(B, d, M).astype(jnp.float32)
    mu = jnp.mean(xr, axis=2, keepdims=True)
    xc = xr - mu
    hp = jax.lax.Precision.HIGHEST
    cov = jnp.einsum("bim,bjm->bij", xc, xc,
                     preferred_element_type=jnp.float32, precision=hp) / M
    eye = jnp.eye(d, dtype=jnp.float32)
    trA = jnp.trace(cov, axis1=1, axis2=2)[:, None, None]
    A = cov / trA
    I3 = 3.0 * eye

    def mm(a, b):
        return jnp.einsum("bij,bjk->bik", a, b,
                          preferred_element_type=jnp.float32, precision=hp)

    ZY = 0.5 * (I3 - A)
    if iterN < 2:
        YZY = mm(A, ZY)
    else:
        Y = mm(A, ZY)
        Z = ZY
        for _ in range(1, iterN - 1):
            ZY = 0.5 * (I3 - mm(Z, Y))
            Y, Z = mm(Y, ZY), mm(ZY, Z)
        YZY = 0.5 * mm(Y, I3 - mm(Z, Y))
    y = YZY * jnp.sqrt(trA)
    iu_r, iu_c = jnp.triu_indices(d)
    return y.reshape(B, d * d)[:, iu_r * d + iu_c][..., None]


if __name__ == "__main__":
    key = jax.random.PRNGKey(0)
    # d=128 keeps the (d, d) NS tiles MXU/lane-dense; 14x14 spatial exercises
    # the unaligned M=196 lane masking; B=5 gives 2 grid steps with a masked
    # tail batch block.
    B, d, H, W = 5, 128, 14, 14
    x = jax.random.normal(key, (B, d, H, W), dtype=jnp.float32)

    fwd = jax.jit(partial(a_mpncov_forward, iterN=3, k_block=8))
    out = jax.block_until_ready(fwd(x))

    assert out.shape == (B, d * (d + 1) // 2, 1), out.shape
    assert bool(jnp.all(jnp.isfinite(out)))

    # Validate the bf16-MXU kernel against the f32 reference (loose tolerance).
    ref = jax.block_until_ready(_reference_forward(x, iterN=3))
    err = float(jnp.max(jnp.abs(out - ref)))
    scale = float(jnp.max(jnp.abs(ref))) + 1e-12
    assert err <= 8e-2 * scale, (err, scale)

    print("KERNEL_OK")
</pallas_src>

<mosaic_0001>
module attributes {stable_mosaic.version = 11 : i64} {
  func.func private @main(%arg0: i32) attributes {dimension_semantics = [#tpu.dimension_semantics<core_parallel>], iteration_bounds = array<i64: 2>, tpu.core_type = #tpu.core_type<sc_scalar_subcore>, window_params = []} {
    return
  }
}

module attributes {stable_mosaic.version = 11 : i64} {
  func.func private @main(%arg0: i32) attributes {dimension_semantics = [#tpu.dimension_semantics<core_parallel>], iteration_bounds = array<i64: 2>, tpu.core_type = #tpu.core_type<sc_scalar_subcore>, window_params = []} {
    return
  }
}

module attributes {stable_mosaic.version = 11 : i64} {
  func.func @_covpool_isqrt_kernel(%arg0: i32, %arg1: memref<3x128x196xf32, #tpu.memory_space<vmem>>, %arg2: memref<3x128x128xf32, #tpu.memory_space<vmem>>) attributes {dimension_semantics = [#tpu.dimension_semantics<parallel>], iteration_bounds = array<i64: 2>, scalar_prefetch = 0 : i64, scratch_operands = 0 : i64, tpu.core_type = #tpu.core_type<tc>, window_params = [{transform_indices = @transform_0, window_bounds = array<i64: 3, 128, 196>}, {transform_indices = @transform_1, window_bounds = array<i64: 3, 128, 128>}]} {
    %c0 = arith.constant 0 : index
    %c0_0 = arith.constant 0 : index
    %c0_1 = arith.constant 0 : index
    %0 = vector.load %arg1[%c0, %c0_0, %c0_1] : memref<3x128x196xf32, #tpu.memory_space<vmem>>, vector<3x128x196xf32>
    %cst = arith.constant dense<0.000000e+00> : vector<3x128xf32>
    %1 = vector.multi_reduction <add>, %0, %cst [2] : vector<3x128x196xf32> to vector<3x128xf32>
    %2 = vector.shape_cast %1 : vector<3x128xf32> to vector<3x128x1xf32>
    %cst_2 = arith.constant 0.00510204071 : f32
    %3 = vector.broadcast %cst_2 : f32 to vector<3x128x1xf32>
    %4 = arith.mulf %2, %3 : vector<3x128x1xf32>
    %cst_3 = arith.constant dense<0.000000e+00> : vector<3x128xf32>
    %5 = vector.multi_reduction <add>, %0, %cst_3 [2] : vector<3x128x196xf32> to vector<3x128xf32>
    %cst_4 = arith.constant 0.00510204071 : f32
    %6 = vector.broadcast %cst_4 : f32 to vector<3x128xf32>
    %7 = arith.mulf %5, %6 : vector<3x128xf32>
    %8 = arith.truncf %0 : vector<3x128x196xf32> to vector<3x128x196xbf16>
    "tpu.trace_start"() <{level = 10 : i32, message = "kim,kjm->kij"}> : () -> ()
    %cst_5 = arith.constant dense<0.000000e+00> : vector<3x128x128xf32>
    %9 = tpu.matmul %8, %8, %cst_5 {dimension_numbers = #tpu.dot_dimension_numbers<[2], [2], [1], [1], [0, 0, 0, 1, 1, 1], [0], [0]>} : vector<3x128x196xbf16>, vector<3x128x196xbf16>, vector<3x128x128xf32> -> vector<3x128x128xf32>
    "tpu.trace_stop"() : () -> ()
    %cst_6 = arith.constant 0.00510204071 : f32
    %10 = vector.broadcast %cst_6 : f32 to vector<3x128x128xf32>
    %11 = arith.mulf %9, %10 : vector<3x128x128xf32>
    %12 = vector.shape_cast %7 : vector<3x128xf32> to vector<3x1x128xf32>
    %13 = vector.broadcast %4 : vector<3x128x1xf32> to vector<3x128x128xf32>
    %14 = vector.broadcast %12 : vector<3x1x128xf32> to vector<3x128x128xf32>
    %15 = arith.mulf %13, %14 : vector<3x128x128xf32>
    %16 = arith.subf %11, %15 : vector<3x128x128xf32>
    %17 = tpu.iota {dimensions = array<i32: 0>} : vector<128x128xi32>
    %18 = tpu.iota {dimensions = array<i32: 1>} : vector<128x128xi32>
    %c0_i32 = arith.constant 0 : i32
    %19 = vector.broadcast %c0_i32 : i32 to vector<128x128xi32>
    %20 = arith.addi %17, %19 : vector<128x128xi32>
    %21 = arith.cmpi eq, %20, %18 : vector<128x128xi32>
    %22 = arith.extui %21 : vector<128x128xi1> to vector<128x128xi32>
    %23 = arith.sitofp %22 : vector<128x128xi32> to vector<128x128xf32>
    %24 = vector.shape_cast %23 : vector<128x128xf32> to vector<1x128x128xf32>
    %25 = vector.broadcast %24 : vector<1x128x128xf32> to vector<3x128x128xf32>
    %26 = arith.mulf %16, %25 : vector<3x128x128xf32>
    %cst_7 = arith.constant dense<0.000000e+00> : vector<3x128xf32>
    %27 = vector.multi_reduction <add>, %26, %cst_7 [2] : vector<3x128x128xf32> to vector<3x128xf32>
    %28 = vector.shape_cast %27 : vector<3x128xf32> to vector<3x128x1xf32>
    %cst_8 = arith.constant dense<0.000000e+00> : vector<3x1xf32>
    %29 = vector.multi_reduction <add>, %28, %cst_8 [1] : vector<3x128x1xf32> to vector<3x1xf32>
    %30 = vector.shape_cast %29 : vector<3x1xf32> to vector<3x1x1xf32>
    %cst_9 = arith.constant 9.99999968E-21 : f32
    %31 = vector.broadcast %cst_9 : f32 to vector<3x1x1xf32>
    %32 = arith.maximumf %30, %31 : vector<3x1x1xf32>
    %cst_10 = arith.constant 1.000000e+00 : f32
    %33 = vector.broadcast %cst_10 : f32 to vector<3x1x1xf32>
    %34 = arith.divf %33, %32 : vector<3x1x1xf32>
    %35 = vector.broadcast %34 : vector<3x1x1xf32> to vector<3x128x128xf32>
    %36 = arith.mulf %16, %35 : vector<3x128x128xf32>
    %cst_11 = arith.constant 3.000000e+00 : f32
    %37 = vector.broadcast %cst_11 : f32 to vector<128x128xf32>
    %38 = arith.mulf %37, %23 : vector<128x128xf32>
    %39 = vector.shape_cast %38 : vector<128x128xf32> to vector<1x128x128xf32>
    %40 = vector.broadcast %39 : vector<1x128x128xf32> to vector<3x128x128xf32>
    %41 = arith.subf %40, %36 : vector<3x128x128xf32>
    %cst_12 = arith.constant 5.000000e-01 : f32
    %42 = vector.broadcast %cst_12 : f32 to vector<3x128x128xf32>
    %43 = arith.mulf %42, %41 : vector<3x128x128xf32>
    %44 = arith.truncf %36 : vector<3x128x128xf32> to vector<3x128x128xbf16>
    %45 = arith.truncf %43 : vector<3x128x128xf32> to vector<3x128x128xbf16>
    "tpu.trace_start"() <{level = 10 : i32, message = "bij,bjk->bik"}> : () -> ()
    %cst_13 = arith.constant dense<0.000000e+00> : vector<3x128x128xf32>
    %46 = tpu.matmul %44, %45, %cst_13 {dimension_numbers = #tpu.dot_dimension_numbers<[2], [1], [1], [2], [0, 0, 0, 1, 1, 2], [0], [0]>} : vector<3x128x128xbf16>, vector<3x128x128xbf16>, vector<3x128x128xf32> -> vector<3x128x128xf32>
    "tpu.trace_stop"() : () -> ()
    %47 = arith.truncf %43 : vector<3x128x128xf32> to vector<3x128x128xbf16>
    %48 = arith.truncf %46 : vector<3x128x128xf32> to vector<3x128x128xbf16>
    "tpu.trace_start"() <{level = 10 : i32, message = "bij,bjk->bik"}> : () -> ()
    %cst_14 = arith.constant dense<0.000000e+00> : vector<3x128x128xf32>
    %49 = tpu.matmul %47, %48, %cst_14 {dimension_numbers = #tpu.dot_dimension_numbers<[2], [1], [1], [2], [0, 0, 0, 1, 1, 2], [0], [0]>} : vector<3x128x128xbf16>, vector<3x128x128xbf16>, vector<3x128x128xf32> -> vector<3x128x128xf32>
    "tpu.trace_stop"() : () -> ()
    %50 = arith.subf %40, %49 : vector<3x128x128xf32>
    %cst_15 = arith.constant 5.000000e-01 : f32
    %51 = vector.broadcast %cst_15 : f32 to vector<3x128x128xf32>
    %52 = arith.mulf %51, %50 : vector<3x128x128xf32>
    %53 = arith.truncf %46 : vector<3x128x128xf32> to vector<3x128x128xbf16>
    %54 = arith.truncf %52 : vector<3x128x128xf32> to vector<3x128x128xbf16>
    "tpu.trace_start"() <{level = 10 : i32, message = "bij,bjk->bik"}> : () -> ()
    %cst_16 = arith.constant dense<0.000000e+00> : vector<3x128x128xf32>
    %55 = tpu.matmul %53, %54, %cst_16 {dimension_numbers = #tpu.dot_dimension_numbers<[2], [1], [1], [2], [0, 0, 0, 1, 1, 2], [0], [0]>} : vector<3x128x128xbf16>, vector<3x128x128xbf16>, vector<3x128x128xf32> -> vector<3x128x128xf32>
    "tpu.trace_stop"() : () -> ()
    %56 = arith.truncf %52 : vector<3x128x128xf32> to vector<3x128x128xbf16>
    %57 = arith.truncf %43 : vector<3x128x128xf32> to vector<3x128x128xbf16>
    "tpu.trace_start"() <{level = 10 : i32, message = "bij,bjk->bik"}> : () -> ()
    %cst_17 = arith.constant dense<0.000000e+00> : vector<3x128x128xf32>
    %58 = tpu.matmul %56, %57, %cst_17 {dimension_numbers = #tpu.dot_dimension_numbers<[2], [1], [1], [2], [0, 0, 0, 1, 1, 2], [0], [0]>} : vector<3x128x128xbf16>, vector<3x128x128xbf16>, vector<3x128x128xf32> -> vector<3x128x128xf32>
    "tpu.trace_stop"() : () -> ()
    %59 = arith.truncf %58 : vector<3x128x128xf32> to vector<3x128x128xbf16>
    %60 = arith.truncf %55 : vector<3x128x128xf32> to vector<3x128x128xbf16>
    "tpu.trace_start"() <{level = 10 : i32, message = "bij,bjk->bik"}> : () -> ()
    %cst_18 = arith.constant dense<0.000000e+00> : vector<3x128x128xf32>
    %61 = tpu.matmul %59, %60, %cst_18 {dimension_numbers = #tpu.dot_dimension_numbers<[2], [1], [1], [2], [0, 0, 0, 1, 1, 2], [0], [0]>} : vector<3x128x128xbf16>, vector<3x128x128xbf16>, vector<3x128x128xf32> -> vector<3x128x128xf32>
    "tpu.trace_stop"() : () -> ()
    %62 = arith.subf %40, %61 : vector<3x128x128xf32>
    %63 = arith.truncf %55 : vector<3x128x128xf32> to vector<3x128x128xbf16>
    %64 = arith.truncf %62 : vector<3x128x128xf32> to vector<3x128x128xbf16>
    "tpu.trace_start"() <{level = 10 : i32, message = "bij,bjk->bik"}> : () -> ()
    %cst_19 = arith.constant dense<0.000000e+00> : vector<3x128x128xf32>
    %65 = tpu.matmul %63, %64, %cst_19 {dimension_numbers = #tpu.dot_dimension_numbers<[2], [1], [1], [2], [0, 0, 0, 1, 1, 2], [0], [0]>} : vector<3x128x128xbf16>, vector<3x128x128xbf16>, vector<3x128x128xf32> -> vector<3x128x128xf32>
    "tpu.trace_stop"() : () -> ()
    %cst_20 = arith.constant 5.000000e-01 : f32
    %66 = vector.broadcast %cst_20 : f32 to vector<3x128x128xf32>
    %67 = arith.mulf %66, %65 : vector<3x128x128xf32>
    %68 = math.sqrt %32 : vector<3x1x1xf32>
    %69 = vector.broadcast %68 : vector<3x1x1xf32> to vector<3x128x128xf32>
    %70 = arith.mulf %67, %69 : vector<3x128x128xf32>
    %c0_21 = arith.constant 0 : index
    %c0_22 = arith.constant 0 : index
    %c0_23 = arith.constant 0 : index
    %71 = vector.load %arg2[%c0_21, %c0_22, %c0_23] : memref<3x128x128xf32, #tpu.memory_space<vmem>>, vector<3x128x128xf32>
    tpu.vector_store %arg2[%c0_21, %c0_22, %c0_23], %70 {strides = array<i32>} : memref<3x128x128xf32, #tpu.memory_space<vmem>>, vector<3x128x128xf32>,
    return
  }
  func.func @transform_0(%arg0: i32) -> (i32, i32, i32) {
    %c0_i32 = arith.constant 0 : i32
    %c0_i32_0 = arith.constant 0 : i32
    %c0_i32_1 = arith.constant 0 : i32
    return %arg0, %c0_i32, %c0_i32_0 : i32, i32, i32
  }
  func.func @transform_1(%arg0: i32) -> (i32, i32, i32) {
    %c0_i32 = arith.constant 0 : i32
    %c0_i32_0 = arith.constant 0 : i32
    %c0_i32_1 = arith.constant 0 : i32
    return %arg0, %c0_i32, %c0_i32_0 : i32, i32, i32
  }
}

</mosaic_0001>

<llo_original>
// kernel: a_mpncov_forward.1
$region0: #{a_mpncov_forward.1}
  #allocation0 [shape = 'u32[]', space=smem, size = 0x4, offset = 0x4, fixed_abs, tag = 'smem constant byte address 0x4 - core index']
  #allocation1 [shape = 'u32[144,128]{1,0:T(1,128)}', space=vmem, size = 0x12000, scoped, tag = 'internal scratch']
  %s0 = inlined_call_operand.vmem [shape: f32[5,128,196], index: 0, kind: input, shape index: {}]
  %s1 = inlined_call_operand.vmem [shape: f32[5,128,128], index: 1, kind: output, shape index: {}]
  %s2 = sld [smem:[#allocation0]]
  $region85: #{a_mpncov_forward.1} parent=0
    _
  %s4 = ssub.s32 1, %s2
  %s5 = scalar_select 0, %s4, %s2
  $region1: #{a_mpncov_forward.1} parent=0
    #allocation2 [shape = 'u8[393216]{0}', space=vmem, size = 0x60000, scoped, tag = 'output window, operand 0']
    loop: start=0, step=1, limit=4
    $region2: #{a_mpncov_forward.1} parent=1 // loop_pre_header
      _
    $region3: #{a_mpncov_forward.1} parent=1 // loop_header
      %s7 = sphi 0, %s11
      %p8 = scmp.ge.s32.totalorder %s7, 4
      %s17 = sphi 0, %s19
      %s20 = sphi 0, %s17
      %s21 = sphi 0, %s20
      %s37 = sphi 0, %s21
      %s43 = sphi 0, %s45
      %s46 = sphi 0, %s43
      %s47 = sphi 0, %s46
      %s63 = sphi 0, %s47
    $region4: #{a_mpncov_forward.1} parent=1 // loop_header_branch
      %10 = sbr.rel (%p8) target = $region8
    $region5: #{a_mpncov_forward.1} parent=1 // loop_body
      %s12 = ssub.s32 %s7, 1
      %s13 = ssub.s32 %s7, 2
      %s14 = sadd.s32 %s7, 1
      %s15 = ssub.s32 %s7, %s14
      %p16 = scmp.eq.s32.totalorder %s15, 0
      %s18 = sadd.s32 %s17, 1
      %s19 = scalar_select %p16, %s17, %s18
      %p22 = pneg %p16
      %p23 = scmp.eq.s32.totalorder %s7, 1
      %p24 = por %p22, %p23
      %p25 = scmp.ne.s32.totalorder %s17, %s20
      %p26 = scmp.eq.s32.totalorder %s7, 0
      %p27 = por %p25, %p26
      %p28 = scmp.ne.s32.totalorder %s17, %s20
      %p29 = scmp.eq.s32.totalorder %s12, 1
      %p30 = por %p28, %p29
      %p31 = scmp.ne.s32.totalorder %s20, %s21
      %p32 = scmp.eq.s32.totalorder %s12, 0
      %p33 = por %p31, %p32
      %p34 = scmp.ne.s32.totalorder %s20, %s21
      %p35 = scmp.eq.s32.totalorder %s13, 1
      %p36 = por %p34, %p35
      %p38 = scmp.ne.s32.totalorder %s21, %s37
      %p39 = scmp.eq.s32.totalorder %s13, 0
      %p40 = por %p38, %p39
      %s41 = ssub.s32 %s7, %s14
      %p42 = scmp.eq.s32.totalorder %s41, 0
      %s44 = sadd.s32 %s43, 1
      %s45 = scalar_select %p42, %s43, %s44
      %p48 = pneg %p42
      %p49 = scmp.eq.s32.totalorder %s7, 1
      %p50 = por %p48, %p49
      %p51 = scmp.ne.s32.totalorder %s43, %s46
      %p52 = scmp.eq.s32.totalorder %s7, 0
      %p53 = por %p51, %p52
      %p54 = scmp.ne.s32.totalorder %s43, %s46
      %p55 = scmp.eq.s32.totalorder %s12, 1
      %p56 = por %p54, %p55
      %p57 = scmp.ne.s32.totalorder %s46, %s47
      %p58 = scmp.eq.s32.totalorder %s12, 0
      %p59 = por %p57, %p58
      %p60 = scmp.ne.s32.totalorder %s46, %s47
      %p61 = scmp.eq.s32.totalorder %s13, 1
      %p62 = por %p60, %p61
      %p64 = scmp.ne.s32.totalorder %s47, %s63
      %p65 = scmp.eq.s32.totalorder %s13, 0
      %p66 = por %p64, %p65
      %p67 = scmp.le.s32.totalorder 1, %s7
      %p68 = scmp.lt.s32.totalorder %s7, 3
      %p69 = pnand %p67, %p68
      %p70 = pneg %p69
      // Predicated region
      $region9: #{a_mpncov_forward.1} parent=5 // pred_check
        _
      $region10: #{a_mpncov_forward.1} parent=5 // pred_check_branch
        %72 = sbr.rel (%p69) target = $region12
      $region11: #{a_mpncov_forward.1} parent=5 // pred_region
        %s73 = ssub.s32 %s7, 1
      $region12: #{a_mpncov_forward.1} parent=5 // pred_fallthru
        _
      %p74 = scmp.lt.s32.totalorder %s7, 2
      // Predicated region
      $region13: #{a_mpncov_forward.1} parent=5 // pred_check
        %p75 = pneg %p74
      $region14: #{a_mpncov_forward.1} parent=5 // pred_check_branch
        %77 = sbr.rel (%p75) target = $region16
      $region15: #{a_mpncov_forward.1} parent=5 // pred_region
        // Predicated region
        $region17: #{a_mpncov_forward.1} parent=15 // pred_check
          %p78 = pneg %p27
        $region18: #{a_mpncov_forward.1} parent=15 // pred_check_branch
          %80 = sbr.rel (%p78) target = $region20
        $region19: #{a_mpncov_forward.1} parent=15 // pred_region
          %s81 = smul.u32 3, %s7
          %s82 = ssub.s32 5, %s81
          %p83 = scmp.lt.s32.totalorder %s82, 3
          %s84 = scalar_select %p83, %s82, 3
          %s85 = smul.u32 128, %s84
          %s86 = smul.u32 %s85, 16
          %s87 = smul.u32 %s86, 2
          %p88 = scmp.lt.s32.totalorder %s81, 4
          %s89 = scalar_select %p88, %s81, 4
          %s90 = smul.addr %s89, 32
          %s91 = smul.addr %s90, 8
          %s92 = scalar_lea.vmem %s0, %s91
          %s93 = smul.u32 3, %s7
          %s94 = ssub.s32 5, %s93
          %p95 = scmp.lt.s32.totalorder %s94, 3
          %s96 = scalar_select %p95, %s94, 3
          %s97 = smul.u32 128, %s96
          %s98 = smul.u32 %s97, 16
          %s99 = smul.u32 %s98, 2
        $region20: #{a_mpncov_forward.1} parent=15 // pred_fallthru
          _
      $region16: #{a_mpncov_forward.1} parent=5 // pred_fallthru
        _
      %p100 = scmp.le.s32.totalorder 1, %s7
      %p101 = scmp.lt.s32.totalorder %s7, 3
      %p102 = pnand %p100, %p101
      %p103 = pneg %p102
      // Predicated region
      $region21: #{a_mpncov_forward.1} parent=5 // pred_check
        _
      $region22: #{a_mpncov_forward.1} parent=5 // pred_check_branch
        %105 = sbr.rel (%p102) target = $region24
      $region23: #{a_mpncov_forward.1} parent=5 // pred_region
        %s106 = ssub.s32 %s7, 1
        %s107 = smul.u32 3, %s12
        %s108 = ssub.s32 5, %s107
        %p109 = scmp.lt.s32.totalorder %s108, 3
        %s110 = scalar_select %p109, %s108, 3
        %s111 = smul.u32 128, %s110
        %s112 = smul.u32 %s111, 16
        %s113 = smul.u32 %s112, 2
        %p114 = scmp.lt.s32.totalorder %s107, 4
        %s115 = scalar_select %p114, %s107, 4
        %s116 = smul.addr %s115, 32
        %s117 = smul.addr %s116, 8
        %s118 = scalar_lea.vmem %s0, %s117
        %p119 = pneg %p33
        %p120 = pneg %p30
        %p121 = pneg %p59
        %p122 = pneg %p56
        %s123 = sand.u32 %s46, 1
        %s124 = sand.u32 %s46, 1
        %s125 = smul.addr %s124, 384
        %s126 = scalar_lea.vmem [#allocation2], %s125
        %s127 = smul.u32 3, %s12
        %s128 = ssub.s32 5, %s127
        %p129 = scmp.lt.s32.totalorder %s128, 3
        %s130 = scalar_select %p129, %s128, 3
        %s131 = smul.u32 128, %s130
        %s132 = smul.u32 %s131, 16
        %s133 = smul.u32 %s132, 2
        %p134 = scmp.lt.s32.totalorder %s127, 4
        %s135 = scalar_select %p134, %s127, 4
        %s136 = smul.addr %s135, 32
        %s137 = smul.addr %s136, 8
        %s138 = scalar_lea.vmem %s0, %s137
        %s139 = smul.u32 3, %s12
        %s140 = ssub.s32 5, %s139
        %p141 = scmp.lt.s32.totalorder %s140, 3
        %s142 = scalar_select %p141, %s140, 3
        %s143 = smul.u32 128, %s142
        %s144 = smul.u32 %s143, 16
        %s145 = smul.u32 %s144, 2
        %s146 = smul.u32 3, %s12
        %s147 = ssub.s32 5, %s146
        %p148 = scmp.lt.s32.totalorder %s147, 3
        %s149 = scalar_select %p148, %s147, 3
        %s150 = smul.u32 128, %s149
        %s151 = smul.u32 %s150, 16
        %v153 = vld [vmem:[%s138] sm:$0xff]
        %v154 = vld [vmem:[%s138 + $0x8] sm:$0xff]
        %v155 = vld [vmem:[%s138 + $0x10] sm:$0xff]
        %v156 = vld [vmem:[%s138 + $0x18] sm:$0xff]
        %v157 = vld [vmem:[%s138 + $0x20] sm:$0xff]
        %v158 = vld [vmem:[%s138 + $0x28] sm:$0xff]
        %v159 = vld [vmem:[%s138 + $0x30] sm:$0xff]
        %v160 = vld [vmem:[%s138 + $0x38] sm:$0xff]
        %v161 = vld [vmem:[%s138 + $0x40] sm:$0xff]
        %v162 = vld [vmem:[%s138 + $0x48] sm:$0xff]
        %v163 = vld [vmem:[%s138 + $0x50] sm:$0xff]
        %v164 = vld [vmem:[%s138 + $0x58] sm:$0xff]
        %v165 = vld [vmem:[%s138 + $0x60] sm:$0xff]
        %v166 = vld [vmem:[%s138 + $0x68] sm:$0xff]
        %v167 = vld [vmem:[%s138 + $0x70] sm:$0xff]
        %v168 = vld [vmem:[%s138 + $0x78] sm:$0xff]
        %v169 = vld [vmem:[%s138 + $0x80] sm:$0xff]
        %v170 = vld [vmem:[%s138 + $0x88] sm:$0xff]
        %v171 = vld [vmem:[%s138 + $0x90] sm:$0xff]
        %v172 = vld [vmem:[%s138 + $0x98] sm:$0xff]
        %v173 = vld [vmem:[%s138 + $0xa0] sm:$0xff]
        %v174 = vld [vmem:[%s138 + $0xa8] sm:$0xff]
        %v175 = vld [vmem:[%s138 + $0xb0] sm:$0xff]
        %v176 = vld [vmem:[%s138 + $0xb8] sm:$0xff]
        %v177 = vld [vmem:[%s138 + $0xc0] sm:$0xff]
        %v178 = vld [vmem:[%s138 + $0xc8] sm:$0xff]
        %v179 = vld [vmem:[%s138 + $0xd0] sm:$0xff]
        %v180 = vld [vmem:[%s138 + $0xd8] sm:$0xff]
        %v181 = vld [vmem:[%s138 + $0xe0] sm:$0xff]
        %v182 = vld [vmem:[%s138 + $0xe8] sm:$0xff]
        %v183 = vld [vmem:[%s138 + $0xf0] sm:$0xff]
        %v184 = vld [vmem:[%s138 + $0xf8] sm:$0xff]
        %v185 = vld [vmem:[%s138 + $0x100] sm:$0xff]
        %v186 = vld [vmem:[%s138 + $0x108] sm:$0xff]
        %v187 = vld [vmem:[%s138 + $0x110] sm:$0xff]
        %v188 = vld [vmem:[%s138 + $0x118] sm:$0xff]
        %v189 = vld [vmem:[%s138 + $0x120] sm:$0xff]
        %v190 = vld [vmem:[%s138 + $0x128] sm:$0xff]
        %v191 = vld [vmem:[%s138 + $0x130] sm:$0xff]
        %v192 = vld [vmem:[%s138 + $0x138] sm:$0xff]
        %v193 = vld [vmem:[%s138 + $0x140] sm:$0xff]
        %v194 = vld [vmem:[%s138 + $0x148] sm:$0xff]
        %v195 = vld [vmem:[%s138 + $0x150] sm:$0xff]
        %v196 = vld [vmem:[%s138 + $0x158] sm:$0xff]
        %v197 = vld [vmem:[%s138 + $0x160] sm:$0xff]
        %v198 = vld [vmem:[%s138 + $0x168] sm:$0xff]
        %v199 = vld [vmem:[%s138 + $0x170] sm:$0xff]
        %v200 = vld [vmem:[%s138 + $0x178] sm:$0xff]
        %v201 = vld [vmem:[%s138 + $0x180] sm:$0xff]
        %v202 = vld [vmem:[%s138 + $0x188] sm:$0xff]
        %v203 = vld [vmem:[%s138 + $0x190] sm:$0xff]
        %v204 = vld [vmem:[%s138 + $0x198] sm:$0xff]
        %v205 = vld [vmem:[%s138 + $0x1a0] sm:$0xff]
        %v206 = vld [vmem:[%s138 + $0x1a8] sm:$0xff]
        %v207 = vld [vmem:[%s138 + $0x1b0] sm:$0xff]
        %v208 = vld [vmem:[%s138 + $0x1b8] sm:$0xff]
        %v209 = vld [vmem:[%s138 + $0x1c0] sm:$0xff]
        %v210 = vld [vmem:[%s138 + $0x1c8] sm:$0xff]
        %v211 = vld [vmem:[%s138 + $0x1d0] sm:$0xff]
        %v212 = vld [vmem:[%s138 + $0x1d8] sm:$0xff]
        %v213 = vld [vmem:[%s138 + $0x1e0] sm:$0xff]
        %v214 = vld [vmem:[%s138 + $0x1e8] sm:$0xff]
        %v215 = vld [vmem:[%s138 + $0x1f0] sm:$0xff]
        %v216 = vld [vmem:[%s138 + $0x1f8] sm:$0xff]
        %v217 = vld [vmem:[%s138 + $0x200] sm:$0xff]
        %v218 = vld [vmem:[%s138 + $0x208] sm:$0xff]
        %v219 = vld [vmem:[%s138 + $0x210] sm:$0xff]
        %v220 = vld [vmem:[%s138 + $0x218] sm:$0xff]
        %v221 = vld [vmem:[%s138 + $0x220] sm:$0xff]
        %v222 = vld [vmem:[%s138 + $0x228] sm:$0xff]
        %v223 = vld [vmem:[%s138 + $0x230] sm:$0xff]
        %v224 = vld [vmem:[%s138 + $0x238] sm:$0xff]
        %v225 = vld [vmem:[%s138 + $0x240] sm:$0xff]
        %v226 = vld [vmem:[%s138 + $0x248] sm:$0xff]
        %v227 = vld [vmem:[%s138 + $0x250] sm:$0xff]
        %v228 = vld [vmem:[%s138 + $0x258] sm:$0xff]
        %v229 = vld [vmem:[%s138 + $0x260] sm:$0xff]
        %v230 = vld [vmem:[%s138 + $0x268] sm:$0xff]
        %v231 = vld [vmem:[%s138 + $0x270] sm:$0xff]
        %v232 = vld [vmem:[%s138 + $0x278] sm:$0xff]
        %v233 = vld [vmem:[%s138 + $0x280] sm:$0xff]
        %v234 = vld [vmem:[%s138 + $0x288] sm:$0xff]
        %v235 = vld [vmem:[%s138 + $0x290] sm:$0xff]
        %v236 = vld [vmem:[%s138 + $0x298] sm:$0xff]
        %v237 = vld [vmem:[%s138 + $0x2a0] sm:$0xff]
        %v238 = vld [vmem:[%s138 + $0x2a8] sm:$0xff]
        %v239 = vld [vmem:[%s138 + $0x2b0] sm:$0xff]
        %v240 = vld [vmem:[%s138 + $0x2b8] sm:$0xff]
        %v241 = vld [vmem:[%s138 + $0x2c0] sm:$0xff]
        %v242 = vld [vmem:[%s138 + $0x2c8] sm:$0xff]
        %v243 = vld [vmem:[%s138 + $0x2d0] sm:$0xff]
        %v244 = vld [vmem:[%s138 + $0x2d8] sm:$0xff]
        %v245 = vld [vmem:[%s138 + $0x2e0] sm:$0xff]
        %v246 = vld [vmem:[%s138 + $0x2e8] sm:$0xff]
        %v247 = vld [vmem:[%s138 + $0x2f0] sm:$0xff]
        %v248 = vld [vmem:[%s138 + $0x2f8] sm:$0xff]
        %vm249 = vcmask 556032
        %v250 = vsel %vm249, %v154, 0.0
        %v251 = vadd.f32 %v153, %v250
        %252 = vadd.xlane.f32.xlu0 %v251
        %v253 = vpop.xlane.xlu0 %252
        %v254 = vsel %vm249, %v156, 0.0
        %v255 = vadd.f32 %v155, %v254
        %256 = vadd.xlane.f32.xlu0 %v255
        %v257 = vpop.xlane.xlu0 %256
        %v258 = vsel %vm249, %v158, 0.0
        %v259 = vadd.f32 %v157, %v258
        %260 = vadd.xlane.f32.xlu0 %v259
        %v261 = vpop.xlane.xlu0 %260
        %v262 = vsel %vm249, %v160, 0.0
        %v263 = vadd.f32 %v159, %v262
        %264 = vadd.xlane.f32.xlu0 %v263
        %v265 = vpop.xlane.xlu0 %264
        %v266 = vsel %vm249, %v162, 0.0
        %v267 = vadd.f32 %v161, %v266
        %268 = vadd.xlane.f32.xlu0 %v267
        %v269 = vpop.xlane.xlu0 %268
        %v270 = vsel %vm249, %v164, 0.0
        %v271 = vadd.f32 %v163, %v270
        %272 = vadd.xlane.f32.xlu0 %v271
        %v273 = vpop.xlane.xlu0 %272
        %v274 = vsel %vm249, %v166, 0.0
        %v275 = vadd.f32 %v165, %v274
        %276 = vadd.xlane.f32.xlu0 %v275
        %v277 = vpop.xlane.xlu0 %276
        %v278 = vsel %vm249, %v168, 0.0
        %v279 = vadd.f32 %v167, %v278
        %280 = vadd.xlane.f32.xlu0 %v279
        %v281 = vpop.xlane.xlu0 %280
        %v282 = vsel %vm249, %v170, 0.0
        %v283 = vadd.f32 %v169, %v282
        %284 = vadd.xlane.f32.xlu0 %v283
        %v285 = vpop.xlane.xlu0 %284
        %v286 = vsel %vm249, %v172, 0.0
        %v287 = vadd.f32 %v171, %v286
        %288 = vadd.xlane.f32.xlu0 %v287
        %v289 = vpop.xlane.xlu0 %288
        %v290 = vsel %vm249, %v174, 0.0
        %v291 = vadd.f32 %v173, %v290
        %292 = vadd.xlane.f32.xlu0 %v291
        %v293 = vpop.xlane.xlu0 %292
        %v294 = vsel %vm249, %v176, 0.0
        %v295 = vadd.f32 %v175, %v294
        %296 = vadd.xlane.f32.xlu0 %v295
        %v297 = vpop.xlane.xlu0 %296
        %v298 = vsel %vm249, %v178, 0.0
        %v299 = vadd.f32 %v177, %v298
        %300 = vadd.xlane.f32.xlu0 %v299
        %v301 = vpop.xlane.xlu0 %300
        %v302 = vsel %vm249, %v180, 0.0
        %v303 = vadd.f32 %v179, %v302
        %304 = vadd.xlane.f32.xlu0 %v303
        %v305 = vpop.xlane.xlu0 %304
        %v306 = vsel %vm249, %v182, 0.0
        %v307 = vadd.f32 %v181, %v306
        %308 = vadd.xlane.f32.xlu0 %v307
        %v309 = vpop.xlane.xlu0 %308
        %v310 = vsel %vm249, %v184, 0.0
        %v311 = vadd.f32 %v183, %v310
        %312 = vadd.xlane.f32.xlu0 %v311
        %v313 = vpop.xlane.xlu0 %312
        %v314 = vsel %vm249, %v186, 0.0
        %v315 = vadd.f32 %v185, %v314
        %316 = vadd.xlane.f32.xlu0 %v315
        %v317 = vpop.xlane.xlu0 %316
        %v318 = vsel %vm249, %v188, 0.0
        %v319 = vadd.f32 %v187, %v318
        %320 = vadd.xlane.f32.xlu0 %v319
        %v321 = vpop.xlane.xlu0 %320
        %v322 = vsel %vm249, %v190, 0.0
        %v323 = vadd.f32 %v189, %v322
        %324 = vadd.xlane.f32.xlu0 %v323
        %v325 = vpop.xlane.xlu0 %324
        %v326 = vsel %vm249, %v192, 0.0
        %v327 = vadd.f32 %v191, %v326
        %328 = vadd.xlane.f32.xlu0 %v327
        %v329 = vpop.xlane.xlu0 %328
        %v330 = vsel %vm249, %v194, 0.0
        %v331 = vadd.f32 %v193, %v330
        %332 = vadd.xlane.f32.xlu0 %v331
        %v333 = vpop.xlane.xlu0 %332
        %v334 = vsel %vm249, %v196, 0.0
        %v335 = vadd.f32 %v195, %v334
        %336 = vadd.xlane.f32.xlu0 %v335
        %v337 = vpop.xlane.xlu0 %336
        %v338 = vsel %vm249, %v198, 0.0
        %v339 = vadd.f32 %v197, %v338
        %340 = vadd.xlane.f32.xlu0 %v339
        %v341 = vpop.xlane.xlu0 %340
        %v342 = vsel %vm249, %v200, 0.0
        %v343 = vadd.f32 %v199, %v342
        %344 = vadd.xlane.f32.xlu0 %v343
        %v345 = vpop.xlane.xlu0 %344
        %v346 = vsel %vm249, %v202, 0.0
        %v347 = vadd.f32 %v201, %v346
        %348 = vadd.xlane.f32.xlu0 %v347
        %v349 = vpop.xlane.xlu0 %348
        %v350 = vsel %vm249, %v204, 0.0
        %v351 = vadd.f32 %v203, %v350
        %352 = vadd.xlane.f32.xlu0 %v351
        %v353 = vpop.xlane.xlu0 %352
        %v354 = vsel %vm249, %v206, 0.0
        %v355 = vadd.f32 %v205, %v354
        %356 = vadd.xlane.f32.xlu0 %v355
        %v357 = vpop.xlane.xlu0 %356
        %v358 = vsel %vm249, %v208, 0.0
        %v359 = vadd.f32 %v207, %v358
        %360 = vadd.xlane.f32.xlu0 %v359
        %v361 = vpop.xlane.xlu0 %360
        %v362 = vsel %vm249, %v210, 0.0
        %v363 = vadd.f32 %v209, %v362
        %364 = vadd.xlane.f32.xlu0 %v363
        %v365 = vpop.xlane.xlu0 %364
        %v366 = vsel %vm249, %v212, 0.0
        %v367 = vadd.f32 %v211, %v366
        %368 = vadd.xlane.f32.xlu0 %v367
        %v369 = vpop.xlane.xlu0 %368
        %v370 = vsel %vm249, %v214, 0.0
        %v371 = vadd.f32 %v213, %v370
        %372 = vadd.xlane.f32.xlu0 %v371
        %v373 = vpop.xlane.xlu0 %372
        %v374 = vsel %vm249, %v216, 0.0
        %v375 = vadd.f32 %v215, %v374
        %376 = vadd.xlane.f32.xlu0 %v375
        %v377 = vpop.xlane.xlu0 %376
        %v378 = vsel %vm249, %v218, 0.0
        %v379 = vadd.f32 %v217, %v378
        %380 = vadd.xlane.f32.xlu0 %v379
        %v381 = vpop.xlane.xlu0 %380
        %v382 = vsel %vm249, %v220, 0.0
        %v383 = vadd.f32 %v219, %v382
        %384 = vadd.xlane.f32.xlu0 %v383
        %v385 = vpop.xlane.xlu0 %384
        %v386 = vsel %vm249, %v222, 0.0
        %v387 = vadd.f32 %v221, %v386
        %388 = vadd.xlane.f32.xlu0 %v387
        %v389 = vpop.xlane.xlu0 %388
        %v390 = vsel %vm249, %v224, 0.0
        %v391 = vadd.f32 %v223, %v390
        %392 = vadd.xlane.f32.xlu0 %v391
        %v393 = vpop.xlane.xlu0 %392
        %v394 = vsel %vm249, %v226, 0.0
        %v395 = vadd.f32 %v225, %v394
        %396 = vadd.xlane.f32.xlu0 %v395
        %v397 = vpop.xlane.xlu0 %396
        %v398 = vsel %vm249, %v228, 0.0
        %v399 = vadd.f32 %v227, %v398
        %400 = vadd.xlane.f32.xlu0 %v399
        %v401 = vpop.xlane.xlu0 %400
        %v402 = vsel %vm249, %v230, 0.0
        %v403 = vadd.f32 %v229, %v402
        %404 = vadd.xlane.f32.xlu0 %v403
        %v405 = vpop.xlane.xlu0 %404
        %v406 = vsel %vm249, %v232, 0.0
        %v407 = vadd.f32 %v231, %v406
        %408 = vadd.xlane.f32.xlu0 %v407
        %v409 = vpop.xlane.xlu0 %408
        %v410 = vsel %vm249, %v234, 0.0
        %v411 = vadd.f32 %v233, %v410
        %412 = vadd.xlane.f32.xlu0 %v411
        %v413 = vpop.xlane.xlu0 %412
        %v414 = vsel %vm249, %v236, 0.0
        %v415 = vadd.f32 %v235, %v414
        %416 = vadd.xlane.f32.xlu0 %v415
        %v417 = vpop.xlane.xlu0 %416
        %v418 = vsel %vm249, %v238, 0.0
        %v419 = vadd.f32 %v237, %v418
        %420 = vadd.xlane.f32.xlu0 %v419
        %v421 = vpop.xlane.xlu0 %420
        %v422 = vsel %vm249, %v240, 0.0
        %v423 = vadd.f32 %v239, %v422
        %424 = vadd.xlane.f32.xlu0 %v423
        %v425 = vpop.xlane.xlu0 %424
        %v426 = vsel %vm249, %v242, 0.0
        %v427 = vadd.f32 %v241, %v426
        %428 = vadd.xlane.f32.xlu0 %v427
        %v429 = vpop.xlane.xlu0 %428
        %v430 = vsel %vm249, %v244, 0.0
        %v431 = vadd.f32 %v243, %v430
        %432 = vadd.xlane.f32.xlu0 %v431
        %v433 = vpop.xlane.xlu0 %432
        %v434 = vsel %vm249, %v246, 0.0
        %v435 = vadd.f32 %v245, %v434
        %436 = vadd.xlane.f32.xlu0 %v435
        %v437 = vpop.xlane.xlu0 %436
        %v438 = vsel %vm249, %v248, 0.0
        %v439 = vadd.f32 %v247, %v438
        %440 = vadd.xlane.f32.xlu0 %v439
        %v441 = vpop.xlane.xlu0 %440
        %v442 = vmul.f32 %v253, 0.0051020407
        %v443 = vmul.f32 %v257, 0.0051020407
        %v444 = vmul.f32 %v261, 0.0051020407
        %v445 = vmul.f32 %v265, 0.0051020407
        %v446 = vmul.f32 %v269, 0.0051020407
        %v447 = vmul.f32 %v273, 0.0051020407
        %v448 = vmul.f32 %v277, 0.0051020407
        %v449 = vmul.f32 %v281, 0.0051020407
        %v450 = vmul.f32 %v285, 0.0051020407
        %v451 = vmul.f32 %v289, 0.0051020407
        %v452 = vmul.f32 %v293, 0.0051020407
        %v453 = vmul.f32 %v297, 0.0051020407
        %v454 = vmul.f32 %v301, 0.0051020407
        %v455 = vmul.f32 %v305, 0.0051020407
        %v456 = vmul.f32 %v309, 0.0051020407
        %v457 = vmul.f32 %v313, 0.0051020407
        %v458 = vmul.f32 %v317, 0.0051020407
        %v459 = vmul.f32 %v321, 0.0051020407
        %v460 = vmul.f32 %v325, 0.0051020407
        %v461 = vmul.f32 %v329, 0.0051020407
        %v462 = vmul.f32 %v333, 0.0051020407
        %v463 = vmul.f32 %v337, 0.0051020407
        %v464 = vmul.f32 %v341, 0.0051020407
        %v465 = vmul.f32 %v345, 0.0051020407
        %v466 = vmul.f32 %v349, 0.0051020407
        %v467 = vmul.f32 %v353, 0.0051020407
        %v468 = vmul.f32 %v357, 0.0051020407
        %v469 = vmul.f32 %v361, 0.0051020407
        %v470 = vmul.f32 %v365, 0.0051020407
        %v471 = vmul.f32 %v369, 0.0051020407
        %v472 = vmul.f32 %v373, 0.0051020407
        %v473 = vmul.f32 %v377, 0.0051020407
        %v474 = vmul.f32 %v381, 0.0051020407
        %v475 = vmul.f32 %v385, 0.0051020407
        %v476 = vmul.f32 %v389, 0.0051020407
        %v477 = vmul.f32 %v393, 0.0051020407
        %v478 = vmul.f32 %v397, 0.0051020407
        %v479 = vmul.f32 %v401, 0.0051020407
        %v480 = vmul.f32 %v405, 0.0051020407
        %v481 = vmul.f32 %v409, 0.0051020407
        %v482 = vmul.f32 %v413, 0.0051020407
        %v483 = vmul.f32 %v417, 0.0051020407
        %v484 = vmul.f32 %v421, 0.0051020407
        %v485 = vmul.f32 %v425, 0.0051020407
        %v486 = vmul.f32 %v429, 0.0051020407
        %v487 = vmul.f32 %v433, 0.0051020407
        %v488 = vmul.f32 %v437, 0.0051020407
        %v489 = vmul.f32 %v441, 0.0051020407
        %v490 = vpack.c.bf16 %v155, %v153
        %v491 = vpack.c.bf16 %v156, %v154
        %v492 = vpack.c.bf16 %v159, %v157
        %v493 = vpack.c.bf16 %v160, %v158
        %v494 = vpack.c.bf16 %v163, %v161
        %v495 = vpack.c.bf16 %v164, %v162
        %v496 = vpack.c.bf16 %v167, %v165
        %v497 = vpack.c.bf16 %v168, %v166
        %v498 = vpack.c.bf16 %v171, %v169
        %v499 = vpack.c.bf16 %v172, %v170
        %v500 = vpack.c.bf16 %v175, %v173
        %v501 = vpack.c.bf16 %v176, %v174
        %v502 = vpack.c.bf16 %v179, %v177
        %v503 = vpack.c.bf16 %v180, %v178
        %v504 = vpack.c.bf16 %v183, %v181
        %v505 = vpack.c.bf16 %v184, %v182
        %v506 = vpack.c.bf16 %v187, %v185
        %v507 = vpack.c.bf16 %v188, %v186
        %v508 = vpack.c.bf16 %v191, %v189
        %v509 = vpack.c.bf16 %v192, %v190
        %v510 = vpack.c.bf16 %v195, %v193
        %v511 = vpack.c.bf16 %v196, %v194
        %v512 = vpack.c.bf16 %v199, %v197
        %v513 = vpack.c.bf16 %v200, %v198
        %v514 = vpack.c.bf16 %v203, %v201
        %v515 = vpack.c.bf16 %v204, %v202
        %v516 = vpack.c.bf16 %v207, %v205
        %v517 = vpack.c.bf16 %v208, %v206
        %v518 = vpack.c.bf16 %v211, %v209
        %v519 = vpack.c.bf16 %v212, %v210
        %v520 = vpack.c.bf16 %v215, %v213
        %v521 = vpack.c.bf16 %v216, %v214
        %v522 = vpack.c.bf16 %v219, %v217
        %v523 = vpack.c.bf16 %v220, %v218
        %v524 = vpack.c.bf16 %v223, %v221
        %v525 = vpack.c.bf16 %v224, %v222
        %v526 = vpack.c.bf16 %v227, %v225
        %v527 = vpack.c.bf16 %v228, %v226
        %v528 = vpack.c.bf16 %v231, %v229
        %v529 = vpack.c.bf16 %v232, %v230
        %v530 = vpack.c.bf16 %v235, %v233
        %v531 = vpack.c.bf16 %v236, %v234
        %v532 = vpack.c.bf16 %v239, %v237
        %v533 = vpack.c.bf16 %v240, %v238
        %v534 = vpack.c.bf16 %v243, %v241
        %v535 = vpack.c.bf16 %v244, %v242
        %v536 = vpack.c.bf16 %v247, %v245
        %v537 = vpack.c.bf16 %v248, %v246
        %v539 = vsel %vm249, %v491, 0
        %v542 = vsel %vm249, %v493, 0
        %v545 = vsel %vm249, %v495, 0
        %v548 = vsel %vm249, %v497, 0
        %v551 = vsel %vm249, %v499, 0
        %v554 = vsel %vm249, %v501, 0
        %v557 = vsel %vm249, %v503, 0
        %v560 = vsel %vm249, %v505, 0
        %562 = vmatprep.subr.bf16.mxu0 %v560
        %563 = vmatpush1.bf16.xpose.msra.mxu0 %v504
        %564 = vmatprep.subr.bf16.mxu0 %v557
        %565 = vmatpush1.bf16.xpose.msra.mxu0 %v502
        %566 = vmatprep.subr.bf16.mxu0 %v554
        %567 = vmatpush1.bf16.xpose.msra.mxu0 %v500
        %568 = vmatprep.subr.bf16.mxu0 %v551
        %569 = vmatpush1.bf16.xpose.msra.mxu0 %v498
        %570 = vmatprep.subr.bf16.mxu0 %v548
        %571 = vmatpush1.bf16.xpose.msra.mxu0 %v496
        %572 = vmatprep.subr.bf16.mxu0 %v545
        %573 = vmatpush1.bf16.xpose.msra.mxu0 %v494
        %574 = vmatprep.subr.bf16.mxu0 %v542
        %575 = vmatpush1.bf16.xpose.msra.mxu0 %v492
        %576 = vmatprep.subr.bf16.mxu0 %v539
        %577 = vmatpush1.bf16.xpose.msra.mxu0 %v490
        %578 = vmatprep.subr.bf16.mxu0 0
        %579 = vmatpush2.bf16.xpose.msra.mxu0 0
        %580 = vmatprep.subr.bf16.mxu0 0
        %581 = vmatpush2.bf16.xpose.msra.mxu0 0
        %582 = vmatprep.subr.bf16.mxu0 0
        %583 = vmatpush2.bf16.xpose.msra.mxu0 0
        %584 = vmatprep.subr.bf16.mxu0 0
        %585 = vmatpush2.bf16.xpose.msra.mxu0 0
        %586 = vmatprep.subr.bf16.mxu0 0
        %587 = vmatpush2.bf16.xpose.msra.mxu0 0
        %588 = vmatprep.subr.bf16.mxu0 0
        %589 = vmatpush2.bf16.xpose.msra.mxu0 0
        %590 = vmatprep.subr.bf16.mxu0 0
        %591 = vmatpush2.bf16.xpose.msra.mxu0 0
        %592 = vmatprep.subr.bf16.mxu0 0
        %593 = vmatpush2.bf16.xpose.msra.mxu0 0
        %594 = vmatprep.mubr.bf16.mxu0 %v539
        %595 = vmatmul.mubr.bf16.gmra.mxu0 %v490
        %v596 = vpop.f32.mrf.mxu0
        %v597 = vadd.f32 0.0, %v596
        %v598 = vpop.f32.mrf.mxu0
        %v599 = vpop.f32.mrf.mxu0
        %v600 = vadd.f32 0.0, %v599
        %v601 = vpop.f32.mrf.mxu0
        %602 = vmatprep.mubr.bf16.mxu0 %v542
        %603 = vmatmul.mubr.bf16.gmra.mxu0 %v492
        %v604 = vpop.f32.mrf.mxu0
        %v605 = vadd.f32 0.0, %v604
        %v606 = vpop.f32.mrf.mxu0
        %v607 = vpop.f32.mrf.mxu0
        %v608 = vadd.f32 0.0, %v607
        %v609 = vpop.f32.mrf.mxu0
        %610 = vmatprep.mubr.bf16.mxu0 %v545
        %611 = vmatmul.mubr.bf16.gmra.mxu0 %v494
        %v612 = vpop.f32.mrf.mxu0
        %v613 = vadd.f32 0.0, %v612
        %v614 = vpop.f32.mrf.mxu0
        %v615 = vpop.f32.mrf.mxu0
        %v616 = vadd.f32 0.0, %v615
        %v617 = vpop.f32.mrf.mxu0
        %618 = vmatprep.mubr.bf16.mxu0 %v548
        %619 = vmatmul.mubr.bf16.gmra.mxu0 %v496
        %v620 = vpop.f32.mrf.mxu0
        %v621 = vadd.f32 0.0, %v620
        %v622 = vpop.f32.mrf.mxu0
        %v623 = vpop.f32.mrf.mxu0
        %v624 = vadd.f32 0.0, %v623
        %v625 = vpop.f32.mrf.mxu0
        %626 = vmatprep.mubr.bf16.mxu0 %v551
        %627 = vmatmul.mubr.bf16.gmra.mxu0 %v498
        %v628 = vpop.f32.mrf.mxu0
        %v629 = vadd.f32 0.0, %v628
        %v630 = vpop.f32.mrf.mxu0
        %v631 = vpop.f32.mrf.mxu0
        %v632 = vadd.f32 0.0, %v631
        %v633 = vpop.f32.mrf.mxu0
        %634 = vmatprep.mubr.bf16.mxu0 %v554
        %635 = vmatmul.mubr.bf16.gmra.mxu0 %v500
        %v636 = vpop.f32.mrf.mxu0
        %v637 = vadd.f32 0.0, %v636
        %v638 = vpop.f32.mrf.mxu0
        %v639 = vpop.f32.mrf.mxu0
        %v640 = vadd.f32 0.0, %v639
        %v641 = vpop.f32.mrf.mxu0
        %642 = vmatprep.mubr.bf16.mxu0 %v557
        %643 = vmatmul.mubr.bf16.gmra.mxu0 %v502
        %v644 = vpop.f32.mrf.mxu0
        %v645 = vadd.f32 0.0, %v644
        %v646 = vpop.f32.mrf.mxu0
        %v647 = vpop.f32.mrf.mxu0
        %v648 = vadd.f32 0.0, %v647
        %v649 = vpop.f32.mrf.mxu0
        %650 = vmatprep.mubr.bf16.mxu0 %v560
        %651 = vmatmul.mubr.bf16.gmra.mxu0 %v504
        %v652 = vpop.f32.mrf.mxu0
        %v653 = vadd.f32 0.0, %v652
        %v654 = vpop.f32.mrf.mxu0
        %v655 = vpop.f32.mrf.mxu0
        %v656 = vadd.f32 0.0, %v655
        %v657 = vpop.f32.mrf.mxu0
        %658 = vdwg.mxu0
        %v660 = vsel %vm249, %v507, 0
        %v663 = vsel %vm249, %v509, 0
        %v666 = vsel %vm249, %v511, 0
        %v669 = vsel %vm249, %v513, 0
        %v672 = vsel %vm249, %v515, 0
        %v675 = vsel %vm249, %v517, 0
        %v678 = vsel %vm249, %v519, 0
        %v681 = vsel %vm249, %v521, 0
        %683 = vmatprep.subr.bf16.mxu0 %v681
        %684 = vmatpush1.bf16.xpose.msra.mxu0 %v520
        %685 = vmatprep.subr.bf16.mxu0 %v678
        %686 = vmatpush1.bf16.xpose.msra.mxu0 %v518
        %687 = vmatprep.subr.bf16.mxu0 %v675
        %688 = vmatpush1.bf16.xpose.msra.mxu0 %v516
        %689 = vmatprep.subr.bf16.mxu0 %v672
        %690 = vmatpush1.bf16.xpose.msra.mxu0 %v514
        %691 = vmatprep.subr.bf16.mxu0 %v669
        %692 = vmatpush1.bf16.xpose.msra.mxu0 %v512
        %693 = vmatprep.subr.bf16.mxu0 %v666
        %694 = vmatpush1.bf16.xpose.msra.mxu0 %v510
        %695 = vmatprep.subr.bf16.mxu0 %v663
        %696 = vmatpush1.bf16.xpose.msra.mxu0 %v508
        %697 = vmatprep.subr.bf16.mxu0 %v660
        %698 = vmatpush1.bf16.xpose.msra.mxu0 %v506
        %699 = vmatprep.subr.bf16.mxu0 0
        %700 = vmatpush2.bf16.xpose.msra.mxu0 0
        %701 = vmatprep.subr.bf16.mxu0 0
        %702 = vmatpush2.bf16.xpose.msra.mxu0 0
        %703 = vmatprep.subr.bf16.mxu0 0
        %704 = vmatpush2.bf16.xpose.msra.mxu0 0
        %705 = vmatprep.subr.bf16.mxu0 0
        %706 = vmatpush2.bf16.xpose.msra.mxu0 0
        %707 = vmatprep.subr.bf16.mxu0 0
        %708 = vmatpush2.bf16.xpose.msra.mxu0 0
        %709 = vmatprep.subr.bf16.mxu0 0
        %710 = vmatpush2.bf16.xpose.msra.mxu0 0
        %711 = vmatprep.subr.bf16.mxu0 0
        %712 = vmatpush2.bf16.xpose.msra.mxu0 0
        %713 = vmatprep.subr.bf16.mxu0 0
        %714 = vmatpush2.bf16.xpose.msra.mxu0 0
        %715 = vmatprep.mubr.bf16.mxu0 %v660
        %716 = vmatmul.mubr.bf16.gmra.mxu0 %v506
        %v717 = vpop.f32.mrf.mxu0
        %v718 = vadd.f32 0.0, %v717
        %v719 = vpop.f32.mrf.mxu0
        %v720 = vpop.f32.mrf.mxu0
        %v721 = vadd.f32 0.0, %v720
        %v722 = vpop.f32.mrf.mxu0
        %723 = vmatprep.mubr.bf16.mxu0 %v663
        %724 = vmatmul.mubr.bf16.gmra.mxu0 %v508
        %v725 = vpop.f32.mrf.mxu0
        %v726 = vadd.f32 0.0, %v725
        %v727 = vpop.f32.mrf.mxu0
        %v728 = vpop.f32.mrf.mxu0
        %v729 = vadd.f32 0.0, %v728
        %v730 = vpop.f32.mrf.mxu0
        %731 = vmatprep.mubr.bf16.mxu0 %v666
        %732 = vmatmul.mubr.bf16.gmra.mxu0 %v510
        %v733 = vpop.f32.mrf.mxu0
        %v734 = vadd.f32 0.0, %v733
        %v735 = vpop.f32.mrf.mxu0
        %v736 = vpop.f32.mrf.mxu0
        %v737 = vadd.f32 0.0, %v736
        %v738 = vpop.f32.mrf.mxu0
        %739 = vmatprep.mubr.bf16.mxu0 %v669
        %740 = vmatmul.mubr.bf16.gmra.mxu0 %v512
        %v741 = vpop.f32.mrf.mxu0
        %v742 = vadd.f32 0.0, %v741
        %v743 = vpop.f32.mrf.mxu0
        %v744 = vpop.f32.mrf.mxu0
        %v745 = vadd.f32 0.0, %v744
        %v746 = vpop.f32.mrf.mxu0
        %747 = vmatprep.mubr.bf16.mxu0 %v672
        %748 = vmatmul.mubr.bf16.gmra.mxu0 %v514
        %v749 = vpop.f32.mrf.mxu0
        %v750 = vadd.f32 0.0, %v749
        %v751 = vpop.f32.mrf.mxu0
        %v752 = vpop.f32.mrf.mxu0
        %v753 = vadd.f32 0.0, %v752
        %v754 = vpop.f32.mrf.mxu0
        %755 = vmatprep.mubr.bf16.mxu0 %v675
        %756 = vmatmul.mubr.bf16.gmra.mxu0 %v516
        %v757 = vpop.f32.mrf.mxu0
        %v758 = vadd.f32 0.0, %v757
        %v759 = vpop.f32.mrf.mxu0
        %v760 = vpop.f32.mrf.mxu0
        %v761 = vadd.f32 0.0, %v760
        %v762 = vpop.f32.mrf.mxu0
        %763 = vmatprep.mubr.bf16.mxu0 %v678
        %764 = vmatmul.mubr.bf16.gmra.mxu0 %v518
        %v765 = vpop.f32.mrf.mxu0
        %v766 = vadd.f32 0.0, %v765
        %v767 = vpop.f32.mrf.mxu0
        %v768 = vpop.f32.mrf.mxu0
        %v769 = vadd.f32 0.0, %v768
        %v770 = vpop.f32.mrf.mxu0
        %771 = vmatprep.mubr.bf16.mxu0 %v681
        %772 = vmatmul.mubr.bf16.gmra.mxu0 %v520
        %v773 = vpop.f32.mrf.mxu0
        %v774 = vadd.f32 0.0, %v773
        %v775 = vpop.f32.mrf.mxu0
        %v776 = vpop.f32.mrf.mxu0
        %v777 = vadd.f32 0.0, %v776
        %v778 = vpop.f32.mrf.mxu0
        %779 = vdwg.mxu0
        %v781 = vsel %vm249, %v523, 0
        %v784 = vsel %vm249, %v525, 0
        %v787 = vsel %vm249, %v527, 0
        %v790 = vsel %vm249, %v529, 0
        %v793 = vsel %vm249, %v531, 0
        %v796 = vsel %vm249, %v533, 0
        %v799 = vsel %vm249, %v535, 0
        %v802 = vsel %vm249, %v537, 0
        %804 = vmatprep.subr.bf16.mxu0 %v802
        %805 = vmatpush1.bf16.xpose.msra.mxu0 %v536
        %806 = vmatprep.subr.bf16.mxu0 %v799
        %807 = vmatpush1.bf16.xpose.msra.mxu0 %v534
        %808 = vmatprep.subr.bf16.mxu0 %v796
        %809 = vmatpush1.bf16.xpose.msra.mxu0 %v532
        %810 = vmatprep.subr.bf16.mxu0 %v793
        %811 = vmatpush1.bf16.xpose.msra.mxu0 %v530
        %812 = vmatprep.subr.bf16.mxu0 %v790
        %813 = vmatpush1.bf16.xpose.msra.mxu0 %v528
        %814 = vmatprep.subr.bf16.mxu0 %v787
        %815 = vmatpush1.bf16.xpose.msra.mxu0 %v526
        %816 = vmatprep.subr.bf16.mxu0 %v784
        %817 = vmatpush1.bf16.xpose.msra.mxu0 %v524
        %818 = vmatprep.subr.bf16.mxu0 %v781
        %819 = vmatpush1.bf16.xpose.msra.mxu0 %v522
        %820 = vmatprep.subr.bf16.mxu0 0
        %821 = vmatpush2.bf16.xpose.msra.mxu0 0
        %822 = vmatprep.subr.bf16.mxu0 0
        %823 = vmatpush2.bf16.xpose.msra.mxu0 0
        %824 = vmatprep.subr.bf16.mxu0 0
        %825 = vmatpush2.bf16.xpose.msra.mxu0 0
        %826 = vmatprep.subr.bf16.mxu0 0
        %827 = vmatpush2.bf16.xpose.msra.mxu0 0
        %828 = vmatprep.subr.bf16.mxu0 0
        %829 = vmatpush2.bf16.xpose.msra.mxu0 0
        %830 = vmatprep.subr.bf16.mxu0 0
        %831 = vmatpush2.bf16.xpose.msra.mxu0 0
        %832 = vmatprep.subr.bf16.mxu0 0
        %833 = vmatpush2.bf16.xpose.msra.mxu0 0
        %834 = vmatprep.subr.bf16.mxu0 0
        %835 = vmatpush2.bf16.xpose.msra.mxu0 0
        %836 = vmatprep.mubr.bf16.mxu0 %v781
        %837 = vmatmul.mubr.bf16.gmra.mxu0 %v522
        %v838 = vpop.f32.mrf.mxu0
        %v839 = vadd.f32 0.0, %v838
        %v840 = vpop.f32.mrf.mxu0
        %v841 = vpop.f32.mrf.mxu0
        %v842 = vadd.f32 0.0, %v841
        %v843 = vpop.f32.mrf.mxu0
        %844 = vmatprep.mubr.bf16.mxu0 %v784
        %845 = vmatmul.mubr.bf16.gmra.mxu0 %v524
        %v846 = vpop.f32.mrf.mxu0
        %v847 = vadd.f32 0.0, %v846
        %v848 = vpop.f32.mrf.mxu0
        %v849 = vpop.f32.mrf.mxu0
        %v850 = vadd.f32 0.0, %v849
        %v851 = vpop.f32.mrf.mxu0
        %852 = vmatprep.mubr.bf16.mxu0 %v787
        %853 = vmatmul.mubr.bf16.gmra.mxu0 %v526
        %v854 = vpop.f32.mrf.mxu0
        %v855 = vadd.f32 0.0, %v854
        %v856 = vpop.f32.mrf.mxu0
        %v857 = vpop.f32.mrf.mxu0
        %v858 = vadd.f32 0.0, %v857
        %v859 = vpop.f32.mrf.mxu0
        %860 = vmatprep.mubr.bf16.mxu0 %v790
        %861 = vmatmul.mubr.bf16.gmra.mxu0 %v528
        %v862 = vpop.f32.mrf.mxu0
        %v863 = vadd.f32 0.0, %v862
        %v864 = vpop.f32.mrf.mxu0
        %v865 = vpop.f32.mrf.mxu0
        %v866 = vadd.f32 0.0, %v865
        %v867 = vpop.f32.mrf.mxu0
        %868 = vmatprep.mubr.bf16.mxu0 %v793
        %869 = vmatmul.mubr.bf16.gmra.mxu0 %v530
        %v870 = vpop.f32.mrf.mxu0
        %v871 = vadd.f32 0.0, %v870
        %v872 = vpop.f32.mrf.mxu0
        %v873 = vpop.f32.mrf.mxu0
        %v874 = vadd.f32 0.0, %v873
        %v875 = vpop.f32.mrf.mxu0
        %876 = vmatprep.mubr.bf16.mxu0 %v796
        %877 = vmatmul.mubr.bf16.gmra.mxu0 %v532
        %v878 = vpop.f32.mrf.mxu0
        %v879 = vadd.f32 0.0, %v878
        %v880 = vpop.f32.mrf.mxu0
        %v881 = vpop.f32.mrf.mxu0
        %v882 = vadd.f32 0.0, %v881
        %v883 = vpop.f32.mrf.mxu0
        %884 = vmatprep.mubr.bf16.mxu0 %v799
        %885 = vmatmul.mubr.bf16.gmra.mxu0 %v534
        %v886 = vpop.f32.mrf.mxu0
        %v887 = vadd.f32 0.0, %v886
        %v888 = vpop.f32.mrf.mxu0
        %v889 = vpop.f32.mrf.mxu0
        %v890 = vadd.f32 0.0, %v889
        %v891 = vpop.f32.mrf.mxu0
        %892 = vmatprep.mubr.bf16.mxu0 %v802
        %893 = vmatmul.mubr.bf16.gmra.mxu0 %v536
        %v894 = vpop.f32.mrf.mxu0
        %v895 = vadd.f32 0.0, %v894
        %v896 = vpop.f32.mrf.mxu0
        %v897 = vpop.f32.mrf.mxu0
        %v898 = vadd.f32 0.0, %v897
        %v899 = vpop.f32.mrf.mxu0
        %900 = vdwg.mxu0
        %v901 = vmul.f32 %v597, 0.0051020407
        %v902 = vmul.f32 %v600, 0.0051020407
        %v903 = vmul.f32 %v605, 0.0051020407
        %v904 = vmul.f32 %v608, 0.0051020407
        %v905 = vmul.f32 %v613, 0.0051020407
        %v906 = vmul.f32 %v616, 0.0051020407
        %v907 = vmul.f32 %v621, 0.0051020407
        %v908 = vmul.f32 %v624, 0.0051020407
        %v909 = vmul.f32 %v629, 0.0051020407
        %v910 = vmul.f32 %v632, 0.0051020407
        %v911 = vmul.f32 %v637, 0.0051020407
        %v912 = vmul.f32 %v640, 0.0051020407
        %v913 = vmul.f32 %v645, 0.0051020407
        %v914 = vmul.f32 %v648, 0.0051020407
        %v915 = vmul.f32 %v653, 0.0051020407
        %v916 = vmul.f32 %v656, 0.0051020407
        %v917 = vmul.f32 %v718, 0.0051020407
        %v918 = vmul.f32 %v721, 0.0051020407
        %v919 = vmul.f32 %v726, 0.0051020407
        %v920 = vmul.f32 %v729, 0.0051020407
        %v921 = vmul.f32 %v734, 0.0051020407
        %v922 = vmul.f32 %v737, 0.0051020407
        %v923 = vmul.f32 %v742, 0.0051020407
        %v924 = vmul.f32 %v745, 0.0051020407
        %v925 = vmul.f32 %v750, 0.0051020407
        %v926 = vmul.f32 %v753, 0.0051020407
        %v927 = vmul.f32 %v758, 0.0051020407
        %v928 = vmul.f32 %v761, 0.0051020407
        %v929 = vmul.f32 %v766, 0.0051020407
        %v930 = vmul.f32 %v769, 0.0051020407
        %v931 = vmul.f32 %v774, 0.0051020407
        %v932 = vmul.f32 %v777, 0.0051020407
        %v933 = vmul.f32 %v839, 0.0051020407
        %v934 = vmul.f32 %v842, 0.0051020407
        %v935 = vmul.f32 %v847, 0.0051020407
        %v936 = vmul.f32 %v850, 0.0051020407
        %v937 = vmul.f32 %v855, 0.0051020407
        %v938 = vmul.f32 %v858, 0.0051020407
        %v939 = vmul.f32 %v863, 0.0051020407
        %v940 = vmul.f32 %v866, 0.0051020407
        %v941 = vmul.f32 %v871, 0.0051020407
        %v942 = vmul.f32 %v874, 0.0051020407
        %v943 = vmul.f32 %v879, 0.0051020407
        %v944 = vmul.f32 %v882, 0.0051020407
        %v945 = vmul.f32 %v887, 0.0051020407
        %v946 = vmul.f32 %v890, 0.0051020407
        %v947 = vmul.f32 %v895, 0.0051020407
        %v948 = vmul.f32 %v898, 0.0051020407
        %v997 = vlaneseq
        %v998 = vand.u32 %v997, 127
        %v999 = vlaneseq
        %v1000 = vshrl.u32 %v999, 7
        %v1001 = vsub.s32 %v998, %v1000
        %v1002 = vrot.slane %v442, %v1001
        %v1003 = vadd.s32 %v998, 4294967288
        %v1004 = vlaneseq
        %v1005 = vshrl.u32 %v1004, 7
        %v1006 = vsub.s32 %v1003, %v1005
        %v1007 = vrot.slane %v443, %v1006
        %vm1008 = vcmask 130112
        %v1009 = vsel %vm1008, %v1007, %v1002
        %v1010 = vadd.s32 %v998, 4294967280
        %v1011 = vlaneseq
        %v1012 = vshrl.u32 %v1011, 7
        %v1013 = vsub.s32 %v1010, %v1012
        %v1014 = vrot.slane %v444, %v1013
        %vm1015 = vcmask 195712
        %v1016 = vsel %vm1015, %v1014, %v1009
        %v1017 = vadd.s32 %v998, 4294967272
        %v1018 = vlaneseq
        %v1019 = vshrl.u32 %v1018, 7
        %v1020 = vsub.s32 %v1017, %v1019
        %v1021 = vrot.slane %v445, %v1020
        %vm1022 = vcmask 261312
        %v1023 = vsel %vm1022, %v1021, %v1016
        %v1024 = vadd.s32 %v998, 4294967264
        %v1025 = vlaneseq
        %v1026 = vshrl.u32 %v1025, 7
        %v1027 = vsub.s32 %v1024, %v1026
        %v1028 = vrot.slane %v446, %v1027
        %vm1029 = vcmask 326912
        %v1030 = vsel %vm1029, %v1028, %v1023
        %v1031 = vadd.s32 %v998, 4294967256
        %v1032 = vlaneseq
        %v1033 = vshrl.u32 %v1032, 7
        %v1034 = vsub.s32 %v1031, %v1033
        %v1035 = vrot.slane %v447, %v1034
        %vm1036 = vcmask 392512
        %v1037 = vsel %vm1036, %v1035, %v1030
        %v1038 = vadd.s32 %v998, 4294967248
        %v1039 = vlaneseq
        %v1040 = vshrl.u32 %v1039, 7
        %v1041 = vsub.s32 %v1038, %v1040
        %v1042 = vrot.slane %v448, %v1041
        %vm1043 = vcmask 458112
        %v1044 = vsel %vm1043, %v1042, %v1037
        %v1045 = vadd.s32 %v998, 4294967240
        %v1046 = vlaneseq
        %v1047 = vshrl.u32 %v1046, 7
        %v1048 = vsub.s32 %v1045, %v1047
        %v1049 = vrot.slane %v449, %v1048
        %vm1050 = vcmask 523712
        %v1051 = vsel %vm1050, %v1049, %v1044
        %v1052 = vadd.s32 %v998, 4294967232
        %v1053 = vlaneseq
        %v1054 = vshrl.u32 %v1053, 7
        %v1055 = vsub.s32 %v1052, %v1054
        %v1056 = vrot.slane %v450, %v1055
        %vm1057 = vcmask 589312
        %v1058 = vsel %vm1057, %v1056, %v1051
        %v1059 = vadd.s32 %v998, 4294967224
        %v1060 = vlaneseq
        %v1061 = vshrl.u32 %v1060, 7
        %v1062 = vsub.s32 %v1059, %v1061
        %v1063 = vrot.slane %v451, %v1062
        %vm1064 = vcmask 654912
        %v1065 = vsel %vm1064, %v1063, %v1058
        %v1066 = vadd.s32 %v998, 4294967216
        %v1067 = vlaneseq
        %v1068 = vshrl.u32 %v1067, 7
        %v1069 = vsub.s32 %v1066, %v1068
        %v1070 = vrot.slane %v452, %v1069
        %vm1071 = vcmask 720512
        %v1072 = vsel %vm1071, %v1070, %v1065
        %v1073 = vadd.s32 %v998, 4294967208
        %v1074 = vlaneseq
        %v1075 = vshrl.u32 %v1074, 7
        %v1076 = vsub.s32 %v1073, %v1075
        %v1077 = vrot.slane %v453, %v1076
        %vm1078 = vcmask 786112
        %v1079 = vsel %vm1078, %v1077, %v1072
        %v1080 = vadd.s32 %v998, 4294967200
        %v1081 = vlaneseq
        %v1082 = vshrl.u32 %v1081, 7
        %v1083 = vsub.s32 %v1080, %v1082
        %v1084 = vrot.slane %v454, %v1083
        %vm1085 = vcmask 851712
        %v1086 = vsel %vm1085, %v1084, %v1079
        %v1087 = vadd.s32 %v998, 4294967192
        %v1088 = vlaneseq
        %v1089 = vshrl.u32 %v1088, 7
        %v1090 = vsub.s32 %v1087, %v1089
        %v1091 = vrot.slane %v455, %v1090
        %vm1092 = vcmask 917312
        %v1093 = vsel %vm1092, %v1091, %v1086
        %v1094 = vadd.s32 %v998, 4294967184
        %v1095 = vlaneseq
        %v1096 = vshrl.u32 %v1095, 7
        %v1097 = vsub.s32 %v1094, %v1096
        %v1098 = vrot.slane %v456, %v1097
        %vm1099 = vcmask 982912
        %v1100 = vsel %vm1099, %v1098, %v1093
        %v1101 = vadd.s32 %v998, 4294967176
        %v1102 = vlaneseq
        %v1103 = vshrl.u32 %v1102, 7
        %v1104 = vsub.s32 %v1101, %v1103
        %v1105 = vrot.slane %v457, %v1104
        %vm1106 = vcmask 1048512
        %v1107 = vsel %vm1106, %v1105, %v1100
        %v1108 = vlaneseq
        %v1109 = vshrl.u32 %v1108, 7
        %v1110 = vsub.s32 %v998, %v1109
        %v1111 = vrot.slane %v458, %v1110
        %v1112 = vlaneseq
        %v1113 = vshrl.u32 %v1112, 7
        %v1114 = vsub.s32 %v1003, %v1113
        %v1115 = vrot.slane %v459, %v1114
        %v1116 = vsel %vm1008, %v1115, %v1111
        %v1117 = vlaneseq
        %v1118 = vshrl.u32 %v1117, 7
        %v1119 = vsub.s32 %v1010, %v1118
        %v1120 = vrot.slane %v460, %v1119
        %v1121 = vsel %vm1015, %v1120, %v1116
        %v1122 = vlaneseq
        %v1123 = vshrl.u32 %v1122, 7
        %v1124 = vsub.s32 %v1017, %v1123
        %v1125 = vrot.slane %v461, %v1124
        %v1126 = vsel %vm1022, %v1125, %v1121
        %v1127 = vlaneseq
        %v1128 = vshrl.u32 %v1127, 7
        %v1129 = vsub.s32 %v1024, %v1128
        %v1130 = vrot.slane %v462, %v1129
        %v1131 = vsel %vm1029, %v1130, %v1126
        %v1132 = vlaneseq
        %v1133 = vshrl.u32 %v1132, 7
        %v1134 = vsub.s32 %v1031, %v1133
        %v1135 = vrot.slane %v463, %v1134
        %v1136 = vsel %vm1036, %v1135, %v1131
        %v1137 = vlaneseq
        %v1138 = vshrl.u32 %v1137, 7
        %v1139 = vsub.s32 %v1038, %v1138
        %v1140 = vrot.slane %v464, %v1139
        %v1141 = vsel %vm1043, %v1140, %v1136
        %v1142 = vlaneseq
        %v1143 = vshrl.u32 %v1142, 7
        %v1144 = vsub.s32 %v1045, %v1143
        %v1145 = vrot.slane %v465, %v1144
        %v1146 = vsel %vm1050, %v1145, %v1141
        %v1147 = vlaneseq
        %v1148 = vshrl.u32 %v1147, 7
        %v1149 = vsub.s32 %v1052, %v1148
        %v1150 = vrot.slane %v466, %v1149
        %v1151 = vsel %vm1057, %v1150, %v1146
        %v1152 = vlaneseq
        %v1153 = vshrl.u32 %v1152, 7
        %v1154 = vsub.s32 %v1059, %v1153
        %v1155 = vrot.slane %v467, %v1154
        %v1156 = vsel %vm1064, %v1155, %v1151
        %v1157 = vlaneseq
        %v1158 = vshrl.u32 %v1157, 7
        %v1159 = vsub.s32 %v1066, %v1158
        %v1160 = vrot.slane %v468, %v1159
        %v1161 = vsel %vm1071, %v1160, %v1156
        %v1162 = vlaneseq
        %v1163 = vshrl.u32 %v1162, 7
        %v1164 = vsub.s32 %v1073, %v1163
        %v1165 = vrot.slane %v469, %v1164
        %v1166 = vsel %vm1078, %v1165, %v1161
        %v1167 = vlaneseq
        %v1168 = vshrl.u32 %v1167, 7
        %v1169 = vsub.s32 %v1080, %v1168
        %v1170 = vrot.slane %v470, %v1169
        %v1171 = vsel %vm1085, %v1170, %v1166
        %v1172 = vlaneseq
        %v1173 = vshrl.u32 %v1172, 7
        %v1174 = vsub.s32 %v1087, %v1173
        %v1175 = vrot.slane %v471, %v1174
        %v1176 = vsel %vm1092, %v1175, %v1171
        %v1177 = vlaneseq
        %v1178 = vshrl.u32 %v1177, 7
        %v1179 = vsub.s32 %v1094, %v1178
        %v1180 = vrot.slane %v472, %v1179
        %v1181 = vsel %vm1099, %v1180, %v1176
        %v1182 = vlaneseq
        %v1183 = vshrl.u32 %v1182, 7
        %v1184 = vsub.s32 %v1101, %v1183
        %v1185 = vrot.slane %v473, %v1184
        %v1186 = vsel %vm1106, %v1185, %v1181
        %v1187 = vlaneseq
        %v1188 = vshrl.u32 %v1187, 7
        %v1189 = vsub.s32 %v998, %v1188
        %v1190 = vrot.slane %v474, %v1189
        %v1191 = vlaneseq
        %v1192 = vshrl.u32 %v1191, 7
        %v1193 = vsub.s32 %v1003, %v1192
        %v1194 = vrot.slane %v475, %v1193
        %v1195 = vsel %vm1008, %v1194, %v1190
        %v1196 = vlaneseq
        %v1197 = vshrl.u32 %v1196, 7
        %v1198 = vsub.s32 %v1010, %v1197
        %v1199 = vrot.slane %v476, %v1198
        %v1200 = vsel %vm1015, %v1199, %v1195
        %v1201 = vlaneseq
        %v1202 = vshrl.u32 %v1201, 7
        %v1203 = vsub.s32 %v1017, %v1202
        %v1204 = vrot.slane %v477, %v1203
        %v1205 = vsel %vm1022, %v1204, %v1200
        %v1206 = vlaneseq
        %v1207 = vshrl.u32 %v1206, 7
        %v1208 = vsub.s32 %v1024, %v1207
        %v1209 = vrot.slane %v478, %v1208
        %v1210 = vsel %vm1029, %v1209, %v1205
        %v1211 = vlaneseq
        %v1212 = vshrl.u32 %v1211, 7
        %v1213 = vsub.s32 %v1031, %v1212
        %v1214 = vrot.slane %v479, %v1213
        %v1215 = vsel %vm1036, %v1214, %v1210
        %v1216 = vlaneseq
        %v1217 = vshrl.u32 %v1216, 7
        %v1218 = vsub.s32 %v1038, %v1217
        %v1219 = vrot.slane %v480, %v1218
        %v1220 = vsel %vm1043, %v1219, %v1215
        %v1221 = vlaneseq
        %v1222 = vshrl.u32 %v1221, 7
        %v1223 = vsub.s32 %v1045, %v1222
        %v1224 = vrot.slane %v481, %v1223
        %v1225 = vsel %vm1050, %v1224, %v1220
        %v1226 = vlaneseq
        %v1227 = vshrl.u32 %v1226, 7
        %v1228 = vsub.s32 %v1052, %v1227
        %v1229 = vrot.slane %v482, %v1228
        %v1230 = vsel %vm1057, %v1229, %v1225
        %v1231 = vlaneseq
        %v1232 = vshrl.u32 %v1231, 7
        %v1233 = vsub.s32 %v1059, %v1232
        %v1234 = vrot.slane %v483, %v1233
        %v1235 = vsel %vm1064, %v1234, %v1230
        %v1236 = vlaneseq
        %v1237 = vshrl.u32 %v1236, 7
        %v1238 = vsub.s32 %v1066, %v1237
        %v1239 = vrot.slane %v484, %v1238
        %v1240 = vsel %vm1071, %v1239, %v1235
        %v1241 = vlaneseq
        %v1242 = vshrl.u32 %v1241, 7
        %v1243 = vsub.s32 %v1073, %v1242
        %v1244 = vrot.slane %v485, %v1243
        %v1245 = vsel %vm1078, %v1244, %v1240
        %v1246 = vlaneseq
        %v1247 = vshrl.u32 %v1246, 7
        %v1248 = vsub.s32 %v1080, %v1247
        %v1249 = vrot.slane %v486, %v1248
        %v1250 = vsel %vm1085, %v1249, %v1245
        %v1251 = vlaneseq
        %v1252 = vshrl.u32 %v1251, 7
        %v1253 = vsub.s32 %v1087, %v1252
        %v1254 = vrot.slane %v487, %v1253
        %v1255 = vsel %vm1092, %v1254, %v1250
        %v1256 = vlaneseq
        %v1257 = vshrl.u32 %v1256, 7
        %v1258 = vsub.s32 %v1094, %v1257
        %v1259 = vrot.slane %v488, %v1258
        %v1260 = vsel %vm1099, %v1259, %v1255
        %v1261 = vlaneseq
        %v1262 = vshrl.u32 %v1261, 7
        %v1263 = vsub.s32 %v1101, %v1262
        %v1264 = vrot.slane %v489, %v1263
        %v1265 = vsel %vm1106, %v1264, %v1260
        %vm1266 = vcmask 1042434
        %v1267 = vsel %vm1266, %v1107, %v1107
        %vm1268 = vcmask 1043459
        %v1269 = vsel %vm1268, %v1107, %v1267
        %vm1270 = vcmask 1044484
        %v1271 = vsel %vm1270, %v1107, %v1269
        %vm1272 = vcmask 1045509
        %v1273 = vsel %vm1272, %v1107, %v1271
        %vm1274 = vcmask 1046534
        %v1275 = vsel %vm1274, %v1107, %v1273
        %vm1276 = vcmask 1047559
        %v1277 = vsel %vm1276, %v1107, %v1275
        %v1278 = vsel %vm1266, %v1186, %v1186
        %v1279 = vsel %vm1268, %v1186, %v1278
        %v1280 = vsel %vm1270, %v1186, %v1279
        %v1281 = vsel %vm1272, %v1186, %v1280
        %v1282 = vsel %vm1274, %v1186, %v1281
        %v1283 = vsel %vm1276, %v1186, %v1282
        %v1284 = vsel %vm1266, %v1265, %v1265
        %v1285 = vsel %vm1268, %v1265, %v1284
        %v1286 = vsel %vm1270, %v1265, %v1285
        %v1287 = vsel %vm1272, %v1265, %v1286
        %v1288 = vsel %vm1274, %v1265, %v1287
        %v1289 = vsel %vm1276, %v1265, %v1288
        %v1293 = vmul.f32 %v442, %v1277
        %v1294 = vmul.f32 %v443, %v1277
        %v1295 = vmul.f32 %v444, %v1277
        %v1296 = vmul.f32 %v445, %v1277
        %v1297 = vmul.f32 %v446, %v1277
        %v1298 = vmul.f32 %v447, %v1277
        %v1299 = vmul.f32 %v448, %v1277
        %v1300 = vmul.f32 %v449, %v1277
        %v1301 = vmul.f32 %v450, %v1277
        %v1302 = vmul.f32 %v451, %v1277
        %v1303 = vmul.f32 %v452, %v1277
        %v1304 = vmul.f32 %v453, %v1277
        %v1305 = vmul.f32 %v454, %v1277
        %v1306 = vmul.f32 %v455, %v1277
        %v1307 = vmul.f32 %v456, %v1277
        %v1308 = vmul.f32 %v457, %v1277
        %v1309 = vmul.f32 %v458, %v1283
        %v1310 = vmul.f32 %v459, %v1283
        %v1311 = vmul.f32 %v460, %v1283
        %v1312 = vmul.f32 %v461, %v1283
        %v1313 = vmul.f32 %v462, %v1283
        %v1314 = vmul.f32 %v463, %v1283
        %v1315 = vmul.f32 %v464, %v1283
        %v1316 = vmul.f32 %v465, %v1283
        %v1317 = vmul.f32 %v466, %v1283
        %v1318 = vmul.f32 %v467, %v1283
        %v1319 = vmul.f32 %v468, %v1283
        %v1320 = vmul.f32 %v469, %v1283
        %v1321 = vmul.f32 %v470, %v1283
        %v1322 = vmul.f32 %v471, %v1283
        %v1323 = vmul.f32 %v472, %v1283
        %v1324 = vmul.f32 %v473, %v1283
        %v1325 = vmul.f32 %v474, %v1289
        %v1326 = vmul.f32 %v475, %v1289
        %v1327 = vmul.f32 %v476, %v1289
        %v1328 = vmul.f32 %v477, %v1289
        %v1329 = vmul.f32 %v478, %v1289
        %v1330 = vmul.f32 %v479, %v1289
        %v1331 = vmul.f32 %v480, %v1289
        %v1332 = vmul.f32 %v481, %v1289
        %v1333 = vmul.f32 %v482, %v1289
        %v1334 = vmul.f32 %v483, %v1289
        %v1335 = vmul.f32 %v484, %v1289
        %v1336 = vmul.f32 %v485, %v1289
        %v1337 = vmul.f32 %v486, %v1289
        %v1338 = vmul.f32 %v487, %v1289
        %v1339 = vmul.f32 %v488, %v1289
        %v1340 = vmul.f32 %v489, %v1289
        %v1341 = vsub.f32 %v901, %v1293
        %v1342 = vsub.f32 %v902, %v1294
        %v1343 = vsub.f32 %v903, %v1295
        %v1344 = vsub.f32 %v904, %v1296
        %v1345 = vsub.f32 %v905, %v1297
        %v1346 = vsub.f32 %v906, %v1298
        %v1347 = vsub.f32 %v907, %v1299
        %v1348 = vsub.f32 %v908, %v1300
        %v1349 = vsub.f32 %v909, %v1301
        %v1350 = vsub.f32 %v910, %v1302
        %v1351 = vsub.f32 %v911, %v1303
        %v1352 = vsub.f32 %v912, %v1304
        %v1353 = vsub.f32 %v913, %v1305
        %v1354 = vsub.f32 %v914, %v1306
        %v1355 = vsub.f32 %v915, %v1307
        %v1356 = vsub.f32 %v916, %v1308
        %v1357 = vsub.f32 %v917, %v1309
        %v1358 = vsub.f32 %v918, %v1310
        %v1359 = vsub.f32 %v919, %v1311
        %v1360 = vsub.f32 %v920, %v1312
        %v1361 = vsub.f32 %v921, %v1313
        %v1362 = vsub.f32 %v922, %v1314
        %v1363 = vsub.f32 %v923, %v1315
        %v1364 = vsub.f32 %v924, %v1316
        %v1365 = vsub.f32 %v925, %v1317
        %v1366 = vsub.f32 %v926, %v1318
        %v1367 = vsub.f32 %v927, %v1319
        %v1368 = vsub.f32 %v928, %v1320
        %v1369 = vsub.f32 %v929, %v1321
        %v1370 = vsub.f32 %v930, %v1322
        %v1371 = vsub.f32 %v931, %v1323
        %v1372 = vsub.f32 %v932, %v1324
        %v1373 = vsub.f32 %v933, %v1325
        %v1374 = vsub.f32 %v934, %v1326
        %v1375 = vsub.f32 %v935, %v1327
        %v1376 = vsub.f32 %v936, %v1328
        %v1377 = vsub.f32 %v937, %v1329
        %v1378 = vsub.f32 %v938, %v1330
        %v1379 = vsub.f32 %v939, %v1331
        %v1380 = vsub.f32 %v940, %v1332
        %v1381 = vsub.f32 %v941, %v1333
        %v1382 = vsub.f32 %v942, %v1334
        %v1383 = vsub.f32 %v943, %v1335
        %v1384 = vsub.f32 %v944, %v1336
        %v1385 = vsub.f32 %v945, %v1337
        %v1386 = vsub.f32 %v946, %v1338
        %v1387 = vsub.f32 %v947, %v1339
        %v1388 = vsub.f32 %v948, %v1340
        %v1389 = vlaneseq
        %v1390 = vshrl.u32 %v1389, 7
        %v1391 = vadd.s32 %v1390, 8
        %v1392 = vadd.s32 %v1390, 16
        %v1393 = vadd.s32 %v1390, 24
        %v1394 = vadd.s32 %v1390, 32
        %v1395 = vadd.s32 %v1390, 40
        %v1396 = vadd.s32 %v1390, 48
        %v1397 = vadd.s32 %v1390, 56
        %v1398 = vadd.s32 %v1390, 64
        %v1399 = vadd.s32 %v1390, 72
        %v1400 = vadd.s32 %v1390, 80
        %v1401 = vadd.s32 %v1390, 88
        %v1402 = vadd.s32 %v1390, 96
        %v1403 = vadd.s32 %v1390, 104
        %v1404 = vadd.s32 %v1390, 112
        %v1405 = vadd.s32 %v1390, 120
        %vm1406 = vcmp.eq.s32.totalorder %v1390, %v998
        %vm1407 = vcmp.eq.s32.totalorder %v1391, %v998
        %vm1408 = vcmp.eq.s32.totalorder %v1392, %v998
        %vm1409 = vcmp.eq.s32.totalorder %v1393, %v998
        %vm1410 = vcmp.eq.s32.totalorder %v1394, %v998
        %vm1411 = vcmp.eq.s32.totalorder %v1395, %v998
        %vm1412 = vcmp.eq.s32.totalorder %v1396, %v998
        %vm1413 = vcmp.eq.s32.totalorder %v1397, %v998
        %vm1414 = vcmp.eq.s32.totalorder %v1398, %v998
        %vm1415 = vcmp.eq.s32.totalorder %v1399, %v998
        %vm1416 = vcmp.eq.s32.totalorder %v1400, %v998
        %vm1417 = vcmp.eq.s32.totalorder %v1401, %v998
        %vm1418 = vcmp.eq.s32.totalorder %v1402, %v998
        %vm1419 = vcmp.eq.s32.totalorder %v1403, %v998
        %vm1420 = vcmp.eq.s32.totalorder %v1404, %v998
        %vm1421 = vcmp.eq.s32.totalorder %v1405, %v998
        %v1422 = vsel %vm1406, 1, 0
        %v1423 = vsel %vm1407, 1, 0
        %v1424 = vsel %vm1408, 1, 0
        %v1425 = vsel %vm1409, 1, 0
        %v1426 = vsel %vm1410, 1, 0
        %v1427 = vsel %vm1411, 1, 0
        %v1428 = vsel %vm1412, 1, 0
        %v1429 = vsel %vm1413, 1, 0
        %v1430 = vsel %vm1414, 1, 0
        %v1431 = vsel %vm1415, 1, 0
        %v1432 = vsel %vm1416, 1, 0
        %v1433 = vsel %vm1417, 1, 0
        %v1434 = vsel %vm1418, 1, 0
        %v1435 = vsel %vm1419, 1, 0
        %v1436 = vsel %vm1420, 1, 0
        %v1437 = vsel %vm1421, 1, 0
        %v1438 = vcvt.s32.f32 %v1422
        %v1439 = vcvt.s32.f32 %v1423
        %v1440 = vcvt.s32.f32 %v1424
        %v1441 = vcvt.s32.f32 %v1425
        %v1442 = vcvt.s32.f32 %v1426
        %v1443 = vcvt.s32.f32 %v1427
        %v1444 = vcvt.s32.f32 %v1428
        %v1445 = vcvt.s32.f32 %v1429
        %v1446 = vcvt.s32.f32 %v1430
        %v1447 = vcvt.s32.f32 %v1431
        %v1448 = vcvt.s32.f32 %v1432
        %v1449 = vcvt.s32.f32 %v1433
        %v1450 = vcvt.s32.f32 %v1434
        %v1451 = vcvt.s32.f32 %v1435
        %v1452 = vcvt.s32.f32 %v1436
        %v1453 = vcvt.s32.f32 %v1437
        %v1454 = vmul.f32 %v1341, %v1438
        %v1455 = vmul.f32 %v1342, %v1439
        %v1456 = vmul.f32 %v1343, %v1440
        %v1457 = vmul.f32 %v1344, %v1441
        %v1458 = vmul.f32 %v1345, %v1442
        %v1459 = vmul.f32 %v1346, %v1443
        %v1460 = vmul.f32 %v1347, %v1444
        %v1461 = vmul.f32 %v1348, %v1445
        %v1462 = vmul.f32 %v1349, %v1446
        %v1463 = vmul.f32 %v1350, %v1447
        %v1464 = vmul.f32 %v1351, %v1448
        %v1465 = vmul.f32 %v1352, %v1449
        %v1466 = vmul.f32 %v1353, %v1450
        %v1467 = vmul.f32 %v1354, %v1451
        %v1468 = vmul.f32 %v1355, %v1452
        %v1469 = vmul.f32 %v1356, %v1453
        %v1470 = vmul.f32 %v1357, %v1438
        %v1471 = vmul.f32 %v1358, %v1439
        %v1472 = vmul.f32 %v1359, %v1440
        %v1473 = vmul.f32 %v1360, %v1441
        %v1474 = vmul.f32 %v1361, %v1442
        %v1475 = vmul.f32 %v1362, %v1443
        %v1476 = vmul.f32 %v1363, %v1444
        %v1477 = vmul.f32 %v1364, %v1445
        %v1478 = vmul.f32 %v1365, %v1446
        %v1479 = vmul.f32 %v1366, %v1447
        %v1480 = vmul.f32 %v1367, %v1448
        %v1481 = vmul.f32 %v1368, %v1449
        %v1482 = vmul.f32 %v1369, %v1450
        %v1483 = vmul.f32 %v1370, %v1451
        %v1484 = vmul.f32 %v1371, %v1452
        %v1485 = vmul.f32 %v1372, %v1453
        %v1486 = vmul.f32 %v1373, %v1438
        %v1487 = vmul.f32 %v1374, %v1439
        %v1488 = vmul.f32 %v1375, %v1440
        %v1489 = vmul.f32 %v1376, %v1441
        %v1490 = vmul.f32 %v1377, %v1442
        %v1491 = vmul.f32 %v1378, %v1443
        %v1492 = vmul.f32 %v1379, %v1444
        %v1493 = vmul.f32 %v1380, %v1445
        %v1494 = vmul.f32 %v1381, %v1446
        %v1495 = vmul.f32 %v1382, %v1447
        %v1496 = vmul.f32 %v1383, %v1448
        %v1497 = vmul.f32 %v1384, %v1449
        %v1498 = vmul.f32 %v1385, %v1450
        %v1499 = vmul.f32 %v1386, %v1451
        %v1500 = vmul.f32 %v1387, %v1452
        %v1501 = vmul.f32 %v1388, %v1453
        %1502 = vadd.xlane.f32.xlu0 %v1454
        %v1503 = vpop.xlane.xlu0 %1502
        %1504 = vadd.xlane.f32.xlu0 %v1455
        %v1505 = vpop.xlane.xlu0 %1504
        %1506 = vadd.xlane.f32.xlu0 %v1456
        %v1507 = vpop.xlane.xlu0 %1506
        %1508 = vadd.xlane.f32.xlu0 %v1457
        %v1509 = vpop.xlane.xlu0 %1508
        %1510 = vadd.xlane.f32.xlu0 %v1458
        %v1511 = vpop.xlane.xlu0 %1510
        %1512 = vadd.xlane.f32.xlu0 %v1459
        %v1513 = vpop.xlane.xlu0 %1512
        %1514 = vadd.xlane.f32.xlu0 %v1460
        %v1515 = vpop.xlane.xlu0 %1514
        %1516 = vadd.xlane.f32.xlu0 %v1461
        %v1517 = vpop.xlane.xlu0 %1516
        %1518 = vadd.xlane.f32.xlu0 %v1462
        %v1519 = vpop.xlane.xlu0 %1518
        %1520 = vadd.xlane.f32.xlu0 %v1463
        %v1521 = vpop.xlane.xlu0 %1520
        %1522 = vadd.xlane.f32.xlu0 %v1464
        %v1523 = vpop.xlane.xlu0 %1522
        %1524 = vadd.xlane.f32.xlu0 %v1465
        %v1525 = vpop.xlane.xlu0 %1524
        %1526 = vadd.xlane.f32.xlu0 %v1466
        %v1527 = vpop.xlane.xlu0 %1526
        %1528 = vadd.xlane.f32.xlu0 %v1467
        %v1529 = vpop.xlane.xlu0 %1528
        %1530 = vadd.xlane.f32.xlu0 %v1468
        %v1531 = vpop.xlane.xlu0 %1530
        %1532 = vadd.xlane.f32.xlu0 %v1469
        %v1533 = vpop.xlane.xlu0 %1532
        %1534 = vadd.xlane.f32.xlu0 %v1470
        %v1535 = vpop.xlane.xlu0 %1534
        %1536 = vadd.xlane.f32.xlu0 %v1471
        %v1537 = vpop.xlane.xlu0 %1536
        %1538 = vadd.xlane.f32.xlu0 %v1472
        %v1539 = vpop.xlane.xlu0 %1538
        %1540 = vadd.xlane.f32.xlu0 %v1473
        %v1541 = vpop.xlane.xlu0 %1540
        %1542 = vadd.xlane.f32.xlu0 %v1474
        %v1543 = vpop.xlane.xlu0 %1542
        %1544 = vadd.xlane.f32.xlu0 %v1475
        %v1545 = vpop.xlane.xlu0 %1544
        %1546 = vadd.xlane.f32.xlu0 %v1476
        %v1547 = vpop.xlane.xlu0 %1546
        %1548 = vadd.xlane.f32.xlu0 %v1477
        %v1549 = vpop.xlane.xlu0 %1548
        %1550 = vadd.xlane.f32.xlu0 %v1478
        %v1551 = vpop.xlane.xlu0 %1550
        %1552 = vadd.xlane.f32.xlu0 %v1479
        %v1553 = vpop.xlane.xlu0 %1552
        %1554 = vadd.xlane.f32.xlu0 %v1480
        %v1555 = vpop.xlane.xlu0 %1554
        %1556 = vadd.xlane.f32.xlu0 %v1481
        %v1557 = vpop.xlane.xlu0 %1556
        %1558 = vadd.xlane.f32.xlu0 %v1482
        %v1559 = vpop.xlane.xlu0 %1558
        %1560 = vadd.xlane.f32.xlu0 %v1483
        %v1561 = vpop.xlane.xlu0 %1560
        %1562 = vadd.xlane.f32.xlu0 %v1484
        %v1563 = vpop.xlane.xlu0 %1562
        %1564 = vadd.xlane.f32.xlu0 %v1485
        %v1565 = vpop.xlane.xlu0 %1564
        %1566 = vadd.xlane.f32.xlu0 %v1486
        %v1567 = vpop.xlane.xlu0 %1566
        %1568 = vadd.xlane.f32.xlu0 %v1487
        %v1569 = vpop.xlane.xlu0 %1568
        %1570 = vadd.xlane.f32.xlu0 %v1488
        %v1571 = vpop.xlane.xlu0 %1570
        %1572 = vadd.xlane.f32.xlu0 %v1489
        %v1573 = vpop.xlane.xlu0 %1572
        %1574 = vadd.xlane.f32.xlu0 %v1490
        %v1575 = vpop.xlane.xlu0 %1574
        %1576 = vadd.xlane.f32.xlu0 %v1491
        %v1577 = vpop.xlane.xlu0 %1576
        %1578 = vadd.xlane.f32.xlu0 %v1492
        %v1579 = vpop.xlane.xlu0 %1578
        %1580 = vadd.xlane.f32.xlu0 %v1493
        %v1581 = vpop.xlane.xlu0 %1580
        %1582 = vadd.xlane.f32.xlu0 %v1494
        %v1583 = vpop.xlane.xlu0 %1582
        %1584 = vadd.xlane.f32.xlu0 %v1495
        %v1585 = vpop.xlane.xlu0 %1584
        %1586 = vadd.xlane.f32.xlu0 %v1496
        %v1587 = vpop.xlane.xlu0 %1586
        %1588 = vadd.xlane.f32.xlu0 %v1497
        %v1589 = vpop.xlane.xlu0 %1588
        %1590 = vadd.xlane.f32.xlu0 %v1498
        %v1591 = vpop.xlane.xlu0 %1590
        %1592 = vadd.xlane.f32.xlu0 %v1499
        %v1593 = vpop.xlane.xlu0 %1592
        %1594 = vadd.xlane.f32.xlu0 %v1500
        %v1595 = vpop.xlane.xlu0 %1594
        %1596 = vadd.xlane.f32.xlu0 %v1501
        %v1597 = vpop.xlane.xlu0 %1596
        %v1598 = vadd.f32 %v1503, %v1505
        %v1599 = vadd.f32 %v1598, %v1507
        %v1600 = vadd.f32 %v1599, %v1509
        %v1601 = vadd.f32 %v1600, %v1511
        %v1602 = vadd.f32 %v1601, %v1513
        %v1603 = vadd.f32 %v1602, %v1515
        %v1604 = vadd.f32 %v1603, %v1517
        %v1605 = vadd.f32 %v1604, %v1519
        %v1606 = vadd.f32 %v1605, %v1521
        %v1607 = vadd.f32 %v1606, %v1523
        %v1608 = vadd.f32 %v1607, %v1525
        %v1609 = vadd.f32 %v1608, %v1527
        %v1610 = vadd.f32 %v1609, %v1529
        %v1611 = vadd.f32 %v1610, %v1531
        %v1612 = vadd.f32 %v1611, %v1533
        %v1613 = vrot.slane %v1612, 4
        %v1614 = vadd.f32 %v1612, %v1613
        %v1615 = vrot.slane %v1614, 2
        %v1616 = vadd.f32 %v1614, %v1615
        %v1617 = vrot.slane %v1616, 1
        %v1618 = vadd.f32 %v1616, %v1617
        %v1619 = vadd.f32 %v1535, %v1537
        %v1620 = vadd.f32 %v1619, %v1539
        %v1621 = vadd.f32 %v1620, %v1541
        %v1622 = vadd.f32 %v1621, %v1543
        %v1623 = vadd.f32 %v1622, %v1545
        %v1624 = vadd.f32 %v1623, %v1547
        %v1625 = vadd.f32 %v1624, %v1549
        %v1626 = vadd.f32 %v1625, %v1551
        %v1627 = vadd.f32 %v1626, %v1553
        %v1628 = vadd.f32 %v1627, %v1555
        %v1629 = vadd.f32 %v1628, %v1557
        %v1630 = vadd.f32 %v1629, %v1559
        %v1631 = vadd.f32 %v1630, %v1561
        %v1632 = vadd.f32 %v1631, %v1563
        %v1633 = vadd.f32 %v1632, %v1565
        %v1634 = vrot.slane %v1633, 4
        %v1635 = vadd.f32 %v1633, %v1634
        %v1636 = vrot.slane %v1635, 2
        %v1637 = vadd.f32 %v1635, %v1636
        %v1638 = vrot.slane %v1637, 1
        %v1639 = vadd.f32 %v1637, %v1638
        %v1640 = vadd.f32 %v1567, %v1569
        %v1641 = vadd.f32 %v1640, %v1571
        %v1642 = vadd.f32 %v1641, %v1573
        %v1643 = vadd.f32 %v1642, %v1575
        %v1644 = vadd.f32 %v1643, %v1577
        %v1645 = vadd.f32 %v1644, %v1579
        %v1646 = vadd.f32 %v1645, %v1581
        %v1647 = vadd.f32 %v1646, %v1583
        %v1648 = vadd.f32 %v1647, %v1585
        %v1649 = vadd.f32 %v1648, %v1587
        %v1650 = vadd.f32 %v1649, %v1589
        %v1651 = vadd.f32 %v1650, %v1591
        %v1652 = vadd.f32 %v1651, %v1593
        %v1653 = vadd.f32 %v1652, %v1595
        %v1654 = vadd.f32 %v1653, %v1597
        %v1655 = vrot.slane %v1654, 4
        %v1656 = vadd.f32 %v1654, %v1655
        %v1657 = vrot.slane %v1656, 2
        %v1658 = vadd.f32 %v1656, %v1657
        %v1659 = vrot.slane %v1658, 1
        %v1660 = vadd.f32 %v1658, %v1659
        %v1661 = vmax.f32 %v1618, 1e-20
        %v1662 = vmax.f32 %v1639, 1e-20
        %v1663 = vmax.f32 %v1660, 1e-20
        %v1664 = vrcp.pop %v1661
        %v1665 = vmul.f32 1.0, %v1664
        %v1666 = vrcp.pop %v1662
        %v1667 = vmul.f32 1.0, %v1666
        %v1668 = vrcp.pop %v1663
        %v1669 = vmul.f32 1.0, %v1668
        %v1670 = vmul.f32 %v1341, %v1665
        %v1671 = vmul.f32 %v1342, %v1665
        %v1672 = vmul.f32 %v1343, %v1665
        %v1673 = vmul.f32 %v1344, %v1665
        %v1674 = vmul.f32 %v1345, %v1665
        %v1675 = vmul.f32 %v1346, %v1665
        %v1676 = vmul.f32 %v1347, %v1665
        %v1677 = vmul.f32 %v1348, %v1665
        %v1678 = vmul.f32 %v1349, %v1665
        %v1679 = vmul.f32 %v1350, %v1665
        %v1680 = vmul.f32 %v1351, %v1665
        %v1681 = vmul.f32 %v1352, %v1665
        %v1682 = vmul.f32 %v1353, %v1665
        %v1683 = vmul.f32 %v1354, %v1665
        %v1684 = vmul.f32 %v1355, %v1665
        %v1685 = vmul.f32 %v1356, %v1665
        %v1686 = vmul.f32 %v1357, %v1667
        %v1687 = vmul.f32 %v1358, %v1667
        %v1688 = vmul.f32 %v1359, %v1667
        %v1689 = vmul.f32 %v1360, %v1667
        %v1690 = vmul.f32 %v1361, %v1667
        %v1691 = vmul.f32 %v1362, %v1667
        %v1692 = vmul.f32 %v1363, %v1667
        %v1693 = vmul.f32 %v1364, %v1667
        %v1694 = vmul.f32 %v1365, %v1667
        %v1695 = vmul.f32 %v1366, %v1667
        %v1696 = vmul.f32 %v1367, %v1667
        %v1697 = vmul.f32 %v1368, %v1667
        %v1698 = vmul.f32 %v1369, %v1667
        %v1699 = vmul.f32 %v1370, %v1667
        %v1700 = vmul.f32 %v1371, %v1667
        %v1701 = vmul.f32 %v1372, %v1667
        %v1702 = vmul.f32 %v1373, %v1669
        %v1703 = vmul.f32 %v1374, %v1669
        %v1704 = vmul.f32 %v1375, %v1669
        %v1705 = vmul.f32 %v1376, %v1669
        %v1706 = vmul.f32 %v1377, %v1669
        %v1707 = vmul.f32 %v1378, %v1669
        %v1708 = vmul.f32 %v1379, %v1669
        %v1709 = vmul.f32 %v1380, %v1669
        %v1710 = vmul.f32 %v1381, %v1669
        %v1711 = vmul.f32 %v1382, %v1669
        %v1712 = vmul.f32 %v1383, %v1669
        %v1713 = vmul.f32 %v1384, %v1669
        %v1714 = vmul.f32 %v1385, %v1669
        %v1715 = vmul.f32 %v1386, %v1669
        %v1716 = vmul.f32 %v1387, %v1669
        %v1717 = vmul.f32 %v1388, %v1669
        %v1718 = vmul.f32 %v1438, 3.0
        %v1719 = vmul.f32 %v1439, 3.0
        %v1720 = vmul.f32 %v1440, 3.0
        %v1721 = vmul.f32 %v1441, 3.0
        %v1722 = vmul.f32 %v1442, 3.0
        %v1723 = vmul.f32 %v1443, 3.0
        %v1724 = vmul.f32 %v1444, 3.0
        %v1725 = vmul.f32 %v1445, 3.0
        %v1726 = vmul.f32 %v1446, 3.0
        %v1727 = vmul.f32 %v1447, 3.0
        %v1728 = vmul.f32 %v1448, 3.0
        %v1729 = vmul.f32 %v1449, 3.0
        %v1730 = vmul.f32 %v1450, 3.0
        %v1731 = vmul.f32 %v1451, 3.0
        %v1732 = vmul.f32 %v1452, 3.0
        %v1733 = vmul.f32 %v1453, 3.0
        %v1734 = vsub.f32 %v1718, %v1670
        %v1735 = vsub.f32 %v1719, %v1671
        %v1736 = vsub.f32 %v1720, %v1672
        %v1737 = vsub.f32 %v1721, %v1673
        %v1738 = vsub.f32 %v1722, %v1674
        %v1739 = vsub.f32 %v1723, %v1675
        %v1740 = vsub.f32 %v1724, %v1676
        %v1741 = vsub.f32 %v1725, %v1677
        %v1742 = vsub.f32 %v1726, %v1678
        %v1743 = vsub.f32 %v1727, %v1679
        %v1744 = vsub.f32 %v1728, %v1680
        %v1745 = vsub.f32 %v1729, %v1681
        %v1746 = vsub.f32 %v1730, %v1682
        %v1747 = vsub.f32 %v1731, %v1683
        %v1748 = vsub.f32 %v1732, %v1684
        %v1749 = vsub.f32 %v1733, %v1685
        %v1750 = vsub.f32 %v1718, %v1686
        %v1751 = vsub.f32 %v1719, %v1687
        %v1752 = vsub.f32 %v1720, %v1688
        %v1753 = vsub.f32 %v1721, %v1689
        %v1754 = vsub.f32 %v1722, %v1690
        %v1755 = vsub.f32 %v1723, %v1691
        %v1756 = vsub.f32 %v1724, %v1692
        %v1757 = vsub.f32 %v1725, %v1693
        %v1758 = vsub.f32 %v1726, %v1694
        %v1759 = vsub.f32 %v1727, %v1695
        %v1760 = vsub.f32 %v1728, %v1696
        %v1761 = vsub.f32 %v1729, %v1697
        %v1762 = vsub.f32 %v1730, %v1698
        %v1763 = vsub.f32 %v1731, %v1699
        %v1764 = vsub.f32 %v1732, %v1700
        %v1765 = vsub.f32 %v1733, %v1701
        %v1766 = vsub.f32 %v1718, %v1702
        %v1767 = vsub.f32 %v1719, %v1703
        %v1768 = vsub.f32 %v1720, %v1704
        %v1769 = vsub.f32 %v1721, %v1705
        %v1770 = vsub.f32 %v1722, %v1706
        %v1771 = vsub.f32 %v1723, %v1707
        %v1772 = vsub.f32 %v1724, %v1708
        %v1773 = vsub.f32 %v1725, %v1709
        %v1774 = vsub.f32 %v1726, %v1710
        %v1775 = vsub.f32 %v1727, %v1711
        %v1776 = vsub.f32 %v1728, %v1712
        %v1777 = vsub.f32 %v1729, %v1713
        %v1778 = vsub.f32 %v1730, %v1714
        %v1779 = vsub.f32 %v1731, %v1715
        %v1780 = vsub.f32 %v1732, %v1716
        %v1781 = vsub.f32 %v1733, %v1717
        %v1782 = vmul.f32 %v1734, 0.5
        %v1783 = vmul.f32 %v1735, 0.5
        %v1784 = vmul.f32 %v1736, 0.5
        %v1785 = vmul.f32 %v1737, 0.5
        %v1786 = vmul.f32 %v1738, 0.5
        %v1787 = vmul.f32 %v1739, 0.5
        %v1788 = vmul.f32 %v1740, 0.5
        %v1789 = vmul.f32 %v1741, 0.5
        %v1790 = vmul.f32 %v1742, 0.5
        %v1791 = vmul.f32 %v1743, 0.5
        %v1792 = vmul.f32 %v1744, 0.5
        %v1793 = vmul.f32 %v1745, 0.5
        %v1794 = vmul.f32 %v1746, 0.5
        %v1795 = vmul.f32 %v1747, 0.5
        %v1796 = vmul.f32 %v1748, 0.5
        %v1797 = vmul.f32 %v1749, 0.5
        %v1798 = vmul.f32 %v1750, 0.5
        %v1799 = vmul.f32 %v1751, 0.5
        %v1800 = vmul.f32 %v1752, 0.5
        %v1801 = vmul.f32 %v1753, 0.5
        %v1802 = vmul.f32 %v1754, 0.5
        %v1803 = vmul.f32 %v1755, 0.5
        %v1804 = vmul.f32 %v1756, 0.5
        %v1805 = vmul.f32 %v1757, 0.5
        %v1806 = vmul.f32 %v1758, 0.5
        %v1807 = vmul.f32 %v1759, 0.5
        %v1808 = vmul.f32 %v1760, 0.5
        %v1809 = vmul.f32 %v1761, 0.5
        %v1810 = vmul.f32 %v1762, 0.5
        %v1811 = vmul.f32 %v1763, 0.5
        %v1812 = vmul.f32 %v1764, 0.5
        %v1813 = vmul.f32 %v1765, 0.5
        %v1814 = vmul.f32 %v1766, 0.5
        %v1815 = vmul.f32 %v1767, 0.5
        %v1816 = vmul.f32 %v1768, 0.5
        %v1817 = vmul.f32 %v1769, 0.5
        %v1818 = vmul.f32 %v1770, 0.5
        %v1819 = vmul.f32 %v1771, 0.5
        %v1820 = vmul.f32 %v1772, 0.5
        %v1821 = vmul.f32 %v1773, 0.5
        %v1822 = vmul.f32 %v1774, 0.5
        %v1823 = vmul.f32 %v1775, 0.5
        %v1824 = vmul.f32 %v1776, 0.5
        %v1825 = vmul.f32 %v1777, 0.5
        %v1826 = vmul.f32 %v1778, 0.5
        %v1827 = vmul.f32 %v1779, 0.5
        %v1828 = vmul.f32 %v1780, 0.5
        %v1829 = vmul.f32 %v1781, 0.5
        %v1830 = vpack.c.bf16 %v1671, %v1670
        %v1831 = vpack.c.bf16 %v1673, %v1672
        %v1832 = vpack.c.bf16 %v1675, %v1674
        %v1833 = vpack.c.bf16 %v1677, %v1676
        %v1834 = vpack.c.bf16 %v1679, %v1678
        %v1835 = vpack.c.bf16 %v1681, %v1680
        %v1836 = vpack.c.bf16 %v1683, %v1682
        %v1837 = vpack.c.bf16 %v1685, %v1684
        %v1838 = vpack.c.bf16 %v1687, %v1686
        %v1839 = vpack.c.bf16 %v1689, %v1688
        %v1840 = vpack.c.bf16 %v1691, %v1690
        %v1841 = vpack.c.bf16 %v1693, %v1692
        %v1842 = vpack.c.bf16 %v1695, %v1694
        %v1843 = vpack.c.bf16 %v1697, %v1696
        %v1844 = vpack.c.bf16 %v1699, %v1698
        %v1845 = vpack.c.bf16 %v1701, %v1700
        %v1846 = vpack.c.bf16 %v1703, %v1702
        %v1847 = vpack.c.bf16 %v1705, %v1704
        %v1848 = vpack.c.bf16 %v1707, %v1706
        %v1849 = vpack.c.bf16 %v1709, %v1708
        %v1850 = vpack.c.bf16 %v1711, %v1710
        %v1851 = vpack.c.bf16 %v1713, %v1712
        %v1852 = vpack.c.bf16 %v1715, %v1714
        %v1853 = vpack.c.bf16 %v1717, %v1716
        %v1854 = vpack.c.bf16 %v1783, %v1782
        %v1855 = vpack.c.bf16 %v1785, %v1784
        %v1856 = vpack.c.bf16 %v1787, %v1786
        %v1857 = vpack.c.bf16 %v1789, %v1788
        %v1858 = vpack.c.bf16 %v1791, %v1790
        %v1859 = vpack.c.bf16 %v1793, %v1792
        %v1860 = vpack.c.bf16 %v1795, %v1794
        %v1861 = vpack.c.bf16 %v1797, %v1796
        %v1862 = vpack.c.bf16 %v1799, %v1798
        %v1863 = vpack.c.bf16 %v1801, %v1800
        %v1864 = vpack.c.bf16 %v1803, %v1802
        %v1865 = vpack.c.bf16 %v1805, %v1804
        %v1866 = vpack.c.bf16 %v1807, %v1806
        %v1867 = vpack.c.bf16 %v1809, %v1808
        %v1868 = vpack.c.bf16 %v1811, %v1810
        %v1869 = vpack.c.bf16 %v1813, %v1812
        %v1870 = vpack.c.bf16 %v1815, %v1814
        %v1871 = vpack.c.bf16 %v1817, %v1816
        %v1872 = vpack.c.bf16 %v1819, %v1818
        %v1873 = vpack.c.bf16 %v1821, %v1820
        %v1874 = vpack.c.bf16 %v1823, %v1822
        %v1875 = vpack.c.bf16 %v1825, %v1824
        %v1876 = vpack.c.bf16 %v1827, %v1826
        %v1877 = vpack.c.bf16 %v1829, %v1828
        %1878 = vmatprep.subr.bf16.mxu0 0
        %1879 = vmatpush1.bf16.msra.mxu0 %v1861
        %1880 = vmatprep.subr.bf16.mxu0 0
        %1881 = vmatpush1.bf16.msra.mxu0 %v1860
        %1882 = vmatprep.subr.bf16.mxu0 0
        %1883 = vmatpush1.bf16.msra.mxu0 %v1859
        %1884 = vmatprep.subr.bf16.mxu0 0
        %1885 = vmatpush1.bf16.msra.mxu0 %v1858
        %1886 = vmatprep.subr.bf16.mxu0 0
        %1887 = vmatpush1.bf16.msra.mxu0 %v1857
        %1888 = vmatprep.subr.bf16.mxu0 0
        %1889 = vmatpush1.bf16.msra.mxu0 %v1856
        %1890 = vmatprep.subr.bf16.mxu0 0
        %1891 = vmatpush1.bf16.msra.mxu0 %v1855
        %1892 = vmatprep.subr.bf16.mxu0 0
        %1893 = vmatpush1.bf16.msra.mxu0 %v1854
        %1894 = vmatprep.subr.bf16.mxu0 0
        %1895 = vmatpush2.bf16.msra.mxu0 0
        %1896 = vmatprep.subr.bf16.mxu0 0
        %1897 = vmatpush2.bf16.msra.mxu0 0
        %1898 = vmatprep.subr.bf16.mxu0 0
        %1899 = vmatpush2.bf16.msra.mxu0 0
        %1900 = vmatprep.subr.bf16.mxu0 0
        %1901 = vmatpush2.bf16.msra.mxu0 0
        %1902 = vmatprep.subr.bf16.mxu0 0
        %1903 = vmatpush2.bf16.msra.mxu0 0
        %1904 = vmatprep.subr.bf16.mxu0 0
        %1905 = vmatpush2.bf16.msra.mxu0 0
        %1906 = vmatprep.subr.bf16.mxu0 0
        %1907 = vmatpush2.bf16.msra.mxu0 0
        %1908 = vmatprep.subr.bf16.mxu0 0
        %1909 = vmatpush2.bf16.msra.mxu0 0
        %1910 = vmatprep.mubr.bf16.mxu0 0
        %1911 = vmatmul.mubr.bf16.gmra.mxu0 %v1830
        %v1912 = vpop.f32.mrf.mxu0
        %v1913 = vadd.f32 0.0, %v1912
        %v1914 = vpop.f32.mrf.mxu0
        %v1915 = vpop.f32.mrf.mxu0
        %v1916 = vadd.f32 0.0, %v1915
        %v1917 = vpop.f32.mrf.mxu0
        %1918 = vmatprep.mubr.bf16.mxu0 0
        %1919 = vmatmul.mubr.bf16.gmra.mxu0 %v1831
        %v1920 = vpop.f32.mrf.mxu0
        %v1921 = vadd.f32 0.0, %v1920
        %v1922 = vpop.f32.mrf.mxu0
        %v1923 = vpop.f32.mrf.mxu0
        %v1924 = vadd.f32 0.0, %v1923
        %v1925 = vpop.f32.mrf.mxu0
        %1926 = vmatprep.mubr.bf16.mxu0 0
        %1927 = vmatmul.mubr.bf16.gmra.mxu0 %v1832
        %v1928 = vpop.f32.mrf.mxu0
        %v1929 = vadd.f32 0.0, %v1928
        %v1930 = vpop.f32.mrf.mxu0
        %v1931 = vpop.f32.mrf.mxu0
        %v1932 = vadd.f32 0.0, %v1931
        %v1933 = vpop.f32.mrf.mxu0
        %1934 = vmatprep.mubr.bf16.mxu0 0
        %1935 = vmatmul.mubr.bf16.gmra.mxu0 %v1833
        %v1936 = vpop.f32.mrf.mxu0
        %v1937 = vadd.f32 0.0, %v1936
        %v1938 = vpop.f32.mrf.mxu0
        %v1939 = vpop.f32.mrf.mxu0
        %v1940 = vadd.f32 0.0, %v1939
        %v1941 = vpop.f32.mrf.mxu0
        %1942 = vmatprep.mubr.bf16.mxu0 0
        %1943 = vmatmul.mubr.bf16.gmra.mxu0 %v1834
        %v1944 = vpop.f32.mrf.mxu0
        %v1945 = vadd.f32 0.0, %v1944
        %v1946 = vpop.f32.mrf.mxu0
        %v1947 = vpop.f32.mrf.mxu0
        %v1948 = vadd.f32 0.0, %v1947
        %v1949 = vpop.f32.mrf.mxu0
        %1950 = vmatprep.mubr.bf16.mxu0 0
        %1951 = vmatmul.mubr.bf16.gmra.mxu0 %v1835
        %v1952 = vpop.f32.mrf.mxu0
        %v1953 = vadd.f32 0.0, %v1952
        %v1954 = vpop.f32.mrf.mxu0
        %v1955 = vpop.f32.mrf.mxu0
        %v1956 = vadd.f32 0.0, %v1955
        %v1957 = vpop.f32.mrf.mxu0
        %1958 = vmatprep.mubr.bf16.mxu0 0
        %1959 = vmatmul.mubr.bf16.gmra.mxu0 %v1836
        %v1960 = vpop.f32.mrf.mxu0
        %v1961 = vadd.f32 0.0, %v1960
        %v1962 = vpop.f32.mrf.mxu0
        %v1963 = vpop.f32.mrf.mxu0
        %v1964 = vadd.f32 0.0, %v1963
        %v1965 = vpop.f32.mrf.mxu0
        %1966 = vmatprep.mubr.bf16.mxu0 0
        %1967 = vmatmul.mubr.bf16.gmra.mxu0 %v1837
        %v1968 = vpop.f32.mrf.mxu0
        %v1969 = vadd.f32 0.0, %v1968
        %v1970 = vpop.f32.mrf.mxu0
        %v1971 = vpop.f32.mrf.mxu0
        %v1972 = vadd.f32 0.0, %v1971
        %v1973 = vpop.f32.mrf.mxu0
        %1974 = vdwg.mxu0
        %1975 = vmatprep.subr.bf16.mxu0 0
        %1976 = vmatpush1.bf16.msra.mxu0 %v1869
        %1977 = vmatprep.subr.bf16.mxu0 0
        %1978 = vmatpush1.bf16.msra.mxu0 %v1868
        %1979 = vmatprep.subr.bf16.mxu0 0
        %1980 = vmatpush1.bf16.msra.mxu0 %v1867
        %1981 = vmatprep.subr.bf16.mxu0 0
        %1982 = vmatpush1.bf16.msra.mxu0 %v1866
        %1983 = vmatprep.subr.bf16.mxu0 0
        %1984 = vmatpush1.bf16.msra.mxu0 %v1865
        %1985 = vmatprep.subr.bf16.mxu0 0
        %1986 = vmatpush1.bf16.msra.mxu0 %v1864
        %1987 = vmatprep.subr.bf16.mxu0 0
        %1988 = vmatpush1.bf16.msra.mxu0 %v1863
        %1989 = vmatprep.subr.bf16.mxu0 0
        %1990 = vmatpush1.bf16.msra.mxu0 %v1862
        %1991 = vmatprep.subr.bf16.mxu0 0
        %1992 = vmatpush2.bf16.msra.mxu0 0
        %1993 = vmatprep.subr.bf16.mxu0 0
        %1994 = vmatpush2.bf16.msra.mxu0 0
        %1995 = vmatprep.subr.bf16.mxu0 0
        %1996 = vmatpush2.bf16.msra.mxu0 0
        %1997 = vmatprep.subr.bf16.mxu0 0
        %1998 = vmatpush2.bf16.msra.mxu0 0
        %1999 = vmatprep.subr.bf16.mxu0 0
        %2000 = vmatpush2.bf16.msra.mxu0 0
        %2001 = vmatprep.subr.bf16.mxu0 0
        %2002 = vmatpush2.bf16.msra.mxu0 0
        %2003 = vmatprep.subr.bf16.mxu0 0
        %2004 = vmatpush2.bf16.msra.mxu0 0
        %2005 = vmatprep.subr.bf16.mxu0 0
        %2006 = vmatpush2.bf16.msra.mxu0 0
        %2007 = vmatprep.mubr.bf16.mxu0 0
        %2008 = vmatmul.mubr.bf16.gmra.mxu0 %v1838
        %v2009 = vpop.f32.mrf.mxu0
        %v2010 = vadd.f32 0.0, %v2009
        %v2011 = vpop.f32.mrf.mxu0
        %v2012 = vpop.f32.mrf.mxu0
        %v2013 = vadd.f32 0.0, %v2012
        %v2014 = vpop.f32.mrf.mxu0
        %2015 = vmatprep.mubr.bf16.mxu0 0
        %2016 = vmatmul.mubr.bf16.gmra.mxu0 %v1839
        %v2017 = vpop.f32.mrf.mxu0
        %v2018 = vadd.f32 0.0, %v2017
        %v2019 = vpop.f32.mrf.mxu0
        %v2020 = vpop.f32.mrf.mxu0
        %v2021 = vadd.f32 0.0, %v2020
        %v2022 = vpop.f32.mrf.mxu0
        %2023 = vmatprep.mubr.bf16.mxu0 0
        %2024 = vmatmul.mubr.bf16.gmra.mxu0 %v1840
        %v2025 = vpop.f32.mrf.mxu0
        %v2026 = vadd.f32 0.0, %v2025
        %v2027 = vpop.f32.mrf.mxu0
        %v2028 = vpop.f32.mrf.mxu0
        %v2029 = vadd.f32 0.0, %v2028
        %v2030 = vpop.f32.mrf.mxu0
        %2031 = vmatprep.mubr.bf16.mxu0 0
        %2032 = vmatmul.mubr.bf16.gmra.mxu0 %v1841
        %v2033 = vpop.f32.mrf.mxu0
        %v2034 = vadd.f32 0.0, %v2033
        %v2035 = vpop.f32.mrf.mxu0
        %v2036 = vpop.f32.mrf.mxu0
        %v2037 = vadd.f32 0.0, %v2036
        %v2038 = vpop.f32.mrf.mxu0
        %2039 = vmatprep.mubr.bf16.mxu0 0
        %2040 = vmatmul.mubr.bf16.gmra.mxu0 %v1842
        %v2041 = vpop.f32.mrf.mxu0
        %v2042 = vadd.f32 0.0, %v2041
        %v2043 = vpop.f32.mrf.mxu0
        %v2044 = vpop.f32.mrf.mxu0
        %v2045 = vadd.f32 0.0, %v2044
        %v2046 = vpop.f32.mrf.mxu0
        %2047 = vmatprep.mubr.bf16.mxu0 0
        %2048 = vmatmul.mubr.bf16.gmra.mxu0 %v1843
        %v2049 = vpop.f32.mrf.mxu0
        %v2050 = vadd.f32 0.0, %v2049
        %v2051 = vpop.f32.mrf.mxu0
        %v2052 = vpop.f32.mrf.mxu0
        %v2053 = vadd.f32 0.0, %v2052
        %v2054 = vpop.f32.mrf.mxu0
        %2055 = vmatprep.mubr.bf16.mxu0 0
        %2056 = vmatmul.mubr.bf16.gmra.mxu0 %v1844
        %v2057 = vpop.f32.mrf.mxu0
        %v2058 = vadd.f32 0.0, %v2057
        %v2059 = vpop.f32.mrf.mxu0
        %v2060 = vpop.f32.mrf.mxu0
        %v2061 = vadd.f32 0.0, %v2060
        %v2062 = vpop.f32.mrf.mxu0
        %2063 = vmatprep.mubr.bf16.mxu0 0
        %2064 = vmatmul.mubr.bf16.gmra.mxu0 %v1845
        %v2065 = vpop.f32.mrf.mxu0
        %v2066 = vadd.f32 0.0, %v2065
        %v2067 = vpop.f32.mrf.mxu0
        %v2068 = vpop.f32.mrf.mxu0
        %v2069 = vadd.f32 0.0, %v2068
        %v2070 = vpop.f32.mrf.mxu0
        %2071 = vdwg.mxu0
        %2072 = vmatprep.subr.bf16.mxu0 0
        %2073 = vmatpush1.bf16.msra.mxu0 %v1877
        %2074 = vmatprep.subr.bf16.mxu0 0
        %2075 = vmatpush1.bf16.msra.mxu0 %v1876
        %2076 = vmatprep.subr.bf16.mxu0 0
        %2077 = vmatpush1.bf16.msra.mxu0 %v1875
        %2078 = vmatprep.subr.bf16.mxu0 0
        %2079 = vmatpush1.bf16.msra.mxu0 %v1874
        %2080 = vmatprep.subr.bf16.mxu0 0
        %2081 = vmatpush1.bf16.msra.mxu0 %v1873
        %2082 = vmatprep.subr.bf16.mxu0 0
        %2083 = vmatpush1.bf16.msra.mxu0 %v1872
        %2084 = vmatprep.subr.bf16.mxu0 0
        %2085 = vmatpush1.bf16.msra.mxu0 %v1871
        %2086 = vmatprep.subr.bf16.mxu0 0
        %2087 = vmatpush1.bf16.msra.mxu0 %v1870
        %2088 = vmatprep.subr.bf16.mxu0 0
        %2089 = vmatpush2.bf16.msra.mxu0 0
        %2090 = vmatprep.subr.bf16.mxu0 0
        %2091 = vmatpush2.bf16.msra.mxu0 0
        %2092 = vmatprep.subr.bf16.mxu0 0
        %2093 = vmatpush2.bf16.msra.mxu0 0
        %2094 = vmatprep.subr.bf16.mxu0 0
        %2095 = vmatpush2.bf16.msra.mxu0 0
        %2096 = vmatprep.subr.bf16.mxu0 0
        %2097 = vmatpush2.bf16.msra.mxu0 0
        %2098 = vmatprep.subr.bf16.mxu0 0
        %2099 = vmatpush2.bf16.msra.mxu0 0
        %2100 = vmatprep.subr.bf16.mxu0 0
        %2101 = vmatpush2.bf16.msra.mxu0 0
        %2102 = vmatprep.subr.bf16.mxu0 0
        %2103 = vmatpush2.bf16.msra.mxu0 0
        %2104 = vmatprep.mubr.bf16.mxu0 0
        %2105 = vmatmul.mubr.bf16.gmra.mxu0 %v1846
        %v2106 = vpop.f32.mrf.mxu0
        %v2107 = vadd.f32 0.0, %v2106
        %v2108 = vpop.f32.mrf.mxu0
        %v2109 = vpop.f32.mrf.mxu0
        %v2110 = vadd.f32 0.0, %v2109
        %v2111 = vpop.f32.mrf.mxu0
        %2112 = vmatprep.mubr.bf16.mxu0 0
        %2113 = vmatmul.mubr.bf16.gmra.mxu0 %v1847
        %v2114 = vpop.f32.mrf.mxu0
        %v2115 = vadd.f32 0.0, %v2114
        %v2116 = vpop.f32.mrf.mxu0
        %v2117 = vpop.f32.mrf.mxu0
        %v2118 = vadd.f32 0.0, %v2117
        %v2119 = vpop.f32.mrf.mxu0
        %2120 = vmatprep.mubr.bf16.mxu0 0
        %2121 = vmatmul.mubr.bf16.gmra.mxu0 %v1848
        %v2122 = vpop.f32.mrf.mxu0
        %v2123 = vadd.f32 0.0, %v2122
        %v2124 = vpop.f32.mrf.mxu0
        %v2125 = vpop.f32.mrf.mxu0
        %v2126 = vadd.f32 0.0, %v2125
        %v2127 = vpop.f32.mrf.mxu0
        %2128 = vmatprep.mubr.bf16.mxu0 0
        %2129 = vmatmul.mubr.bf16.gmra.mxu0 %v1849
        %v2130 = vpop.f32.mrf.mxu0
        %v2131 = vadd.f32 0.0, %v2130
        %v2132 = vpop.f32.mrf.mxu0
        %v2133 = vpop.f32.mrf.mxu0
        %v2134 = vadd.f32 0.0, %v2133
        %v2135 = vpop.f32.mrf.mxu0
        %2136 = vmatprep.mubr.bf16.mxu0 0
        %2137 = vmatmul.mubr.bf16.gmra.mxu0 %v1850
        %v2138 = vpop.f32.mrf.mxu0
        %v2139 = vadd.f32 0.0, %v2138
        %v2140 = vpop.f32.mrf.mxu0
        %v2141 = vpop.f32.mrf.mxu0
        %v2142 = vadd.f32 0.0, %v2141
        %v2143 = vpop.f32.mrf.mxu0
        %2144 = vmatprep.mubr.bf16.mxu0 0
        %2145 = vmatmul.mubr.bf16.gmra.mxu0 %v1851
        %v2146 = vpop.f32.mrf.mxu0
        %v2147 = vadd.f32 0.0, %v2146
        %v2148 = vpop.f32.mrf.mxu0
        %v2149 = vpop.f32.mrf.mxu0
        %v2150 = vadd.f32 0.0, %v2149
        %v2151 = vpop.f32.mrf.mxu0
        %2152 = vmatprep.mubr.bf16.mxu0 0
        %2153 = vmatmul.mubr.bf16.gmra.mxu0 %v1852
        %v2154 = vpop.f32.mrf.mxu0
        %v2155 = vadd.f32 0.0, %v2154
        %v2156 = vpop.f32.mrf.mxu0
        %v2157 = vpop.f32.mrf.mxu0
        %v2158 = vadd.f32 0.0, %v2157
        %v2159 = vpop.f32.mrf.mxu0
        %2160 = vmatprep.mubr.bf16.mxu0 0
        %2161 = vmatmul.mubr.bf16.gmra.mxu0 %v1853
        %v2162 = vpop.f32.mrf.mxu0
        %v2163 = vadd.f32 0.0, %v2162
        %v2164 = vpop.f32.mrf.mxu0
        %v2165 = vpop.f32.mrf.mxu0
        %v2166 = vadd.f32 0.0, %v2165
        %v2167 = vpop.f32.mrf.mxu0
        %2168 = vdwg.mxu0
        %v2169 = vpack.c.bf16 %v1916, %v1913
        %v2170 = vpack.c.bf16 %v1924, %v1921
        %v2171 = vpack.c.bf16 %v1932, %v1929
        %v2172 = vpack.c.bf16 %v1940, %v1937
        %v2173 = vpack.c.bf16 %v1948, %v1945
        %v2174 = vpack.c.bf16 %v1956, %v1953
        %v2175 = vpack.c.bf16 %v1964, %v1961
        %v2176 = vpack.c.bf16 %v1972, %v1969
        %v2177 = vpack.c.bf16 %v2013, %v2010
        %v2178 = vpack.c.bf16 %v2021, %v2018
        %v2179 = vpack.c.bf16 %v2029, %v2026
        %v2180 = vpack.c.bf16 %v2037, %v2034
        %v2181 = vpack.c.bf16 %v2045, %v2042
        %v2182 = vpack.c.bf16 %v2053, %v2050
        %v2183 = vpack.c.bf16 %v2061, %v2058
        %v2184 = vpack.c.bf16 %v2069, %v2066
        %v2185 = vpack.c.bf16 %v2110, %v2107
        %v2186 = vpack.c.bf16 %v2118, %v2115
        %v2187 = vpack.c.bf16 %v2126, %v2123
        %v2188 = vpack.c.bf16 %v2134, %v2131
        %v2189 = vpack.c.bf16 %v2142, %v2139
        %v2190 = vpack.c.bf16 %v2150, %v2147
        %v2191 = vpack.c.bf16 %v2158, %v2155
        %v2192 = vpack.c.bf16 %v2166, %v2163
        %2193 = vmatprep.subr.bf16.mxu0 0
        %2194 = vmatpush1.bf16.msra.mxu0 %v2176
        %2195 = vmatprep.subr.bf16.mxu0 0
        %2196 = vmatpush1.bf16.msra.mxu0 %v2175
        %2197 = vmatprep.subr.bf16.mxu0 0
        %2198 = vmatpush1.bf16.msra.mxu0 %v2174
        %2199 = vmatprep.subr.bf16.mxu0 0
        %2200 = vmatpush1.bf16.msra.mxu0 %v2173
        %2201 = vmatprep.subr.bf16.mxu0 0
        %2202 = vmatpush1.bf16.msra.mxu0 %v2172
        %2203 = vmatprep.subr.bf16.mxu0 0
        %2204 = vmatpush1.bf16.msra.mxu0 %v2171
        %2205 = vmatprep.subr.bf16.mxu0 0
        %2206 = vmatpush1.bf16.msra.mxu0 %v2170
        %2207 = vmatprep.subr.bf16.mxu0 0
        %2208 = vmatpush1.bf16.msra.mxu0 %v2169
        %2209 = vmatprep.subr.bf16.mxu0 0
        %2210 = vmatpush2.bf16.msra.mxu0 0
        %2211 = vmatprep.subr.bf16.mxu0 0
        %2212 = vmatpush2.bf16.msra.mxu0 0
        %2213 = vmatprep.subr.bf16.mxu0 0
        %2214 = vmatpush2.bf16.msra.mxu0 0
        %2215 = vmatprep.subr.bf16.mxu0 0
        %2216 = vmatpush2.bf16.msra.mxu0 0
        %2217 = vmatprep.subr.bf16.mxu0 0
        %2218 = vmatpush2.bf16.msra.mxu0 0
        %2219 = vmatprep.subr.bf16.mxu0 0
        %2220 = vmatpush2.bf16.msra.mxu0 0
        %2221 = vmatprep.subr.bf16.mxu0 0
        %2222 = vmatpush2.bf16.msra.mxu0 0
        %2223 = vmatprep.subr.bf16.mxu0 0
        %2224 = vmatpush2.bf16.msra.mxu0 0
        %2225 = vmatprep.mubr.bf16.mxu0 0
        %2226 = vmatmul.mubr.bf16.gmra.mxu0 %v1854
        %v2227 = vpop.f32.mrf.mxu0
        %v2228 = vadd.f32 0.0, %v2227
        %v2229 = vpop.f32.mrf.mxu0
        %v2230 = vpop.f32.mrf.mxu0
        %v2231 = vadd.f32 0.0, %v2230
        %v2232 = vpop.f32.mrf.mxu0
        %2233 = vmatprep.mubr.bf16.mxu0 0
        %2234 = vmatmul.mubr.bf16.gmra.mxu0 %v1855
        %v2235 = vpop.f32.mrf.mxu0
        %v2236 = vadd.f32 0.0, %v2235
        %v2237 = vpop.f32.mrf.mxu0
        %v2238 = vpop.f32.mrf.mxu0
        %v2239 = vadd.f32 0.0, %v2238
        %v2240 = vpop.f32.mrf.mxu0
        %2241 = vmatprep.mubr.bf16.mxu0 0
        %2242 = vmatmul.mubr.bf16.gmra.mxu0 %v1856
        %v2243 = vpop.f32.mrf.mxu0
        %v2244 = vadd.f32 0.0, %v2243
        %v2245 = vpop.f32.mrf.mxu0
        %v2246 = vpop.f32.mrf.mxu0
        %v2247 = vadd.f32 0.0, %v2246
        %v2248 = vpop.f32.mrf.mxu0
        %2249 = vmatprep.mubr.bf16.mxu0 0
        %2250 = vmatmul.mubr.bf16.gmra.mxu0 %v1857
        %v2251 = vpop.f32.mrf.mxu0
        %v2252 = vadd.f32 0.0, %v2251
        %v2253 = vpop.f32.mrf.mxu0
        %v2254 = vpop.f32.mrf.mxu0
        %v2255 = vadd.f32 0.0, %v2254
        %v2256 = vpop.f32.mrf.mxu0
        %2257 = vmatprep.mubr.bf16.mxu0 0
        %2258 = vmatmul.mubr.bf16.gmra.mxu0 %v1858
        %v2259 = vpop.f32.mrf.mxu0
        %v2260 = vadd.f32 0.0, %v2259
        %v2261 = vpop.f32.mrf.mxu0
        %v2262 = vpop.f32.mrf.mxu0
        %v2263 = vadd.f32 0.0, %v2262
        %v2264 = vpop.f32.mrf.mxu0
        %2265 = vmatprep.mubr.bf16.mxu0 0
        %2266 = vmatmul.mubr.bf16.gmra.mxu0 %v1859
        %v2267 = vpop.f32.mrf.mxu0
        %v2268 = vadd.f32 0.0, %v2267
        %v2269 = vpop.f32.mrf.mxu0
        %v2270 = vpop.f32.mrf.mxu0
        %v2271 = vadd.f32 0.0, %v2270
        %v2272 = vpop.f32.mrf.mxu0
        %2273 = vmatprep.mubr.bf16.mxu0 0
        %2274 = vmatmul.mubr.bf16.gmra.mxu0 %v1860
        %v2275 = vpop.f32.mrf.mxu0
        %v2276 = vadd.f32 0.0, %v2275
        %v2277 = vpop.f32.mrf.mxu0
        %v2278 = vpop.f32.mrf.mxu0
        %v2279 = vadd.f32 0.0, %v2278
        %v2280 = vpop.f32.mrf.mxu0
        %2281 = vmatprep.mubr.bf16.mxu0 0
        %2282 = vmatmul.mubr.bf16.gmra.mxu0 %v1861
        %v2283 = vpop.f32.mrf.mxu0
        %v2284 = vadd.f32 0.0, %v2283
        %v2285 = vpop.f32.mrf.mxu0
        %v2286 = vpop.f32.mrf.mxu0
        %v2287 = vadd.f32 0.0, %v2286
        %v2288 = vpop.f32.mrf.mxu0
        %2289 = vdwg.mxu0
        %2290 = vmatprep.subr.bf16.mxu0 0
        %2291 = vmatpush1.bf16.msra.mxu0 %v2184
        %2292 = vmatprep.subr.bf16.mxu0 0
        %2293 = vmatpush1.bf16.msra.mxu0 %v2183
        %2294 = vmatprep.subr.bf16.mxu0 0
        %2295 = vmatpush1.bf16.msra.mxu0 %v2182
        %2296 = vmatprep.subr.bf16.mxu0 0
        %2297 = vmatpush1.bf16.msra.mxu0 %v2181
        %2298 = vmatprep.subr.bf16.mxu0 0
        %2299 = vmatpush1.bf16.msra.mxu0 %v2180
        %2300 = vmatprep.subr.bf16.mxu0 0
        %2301 = vmatpush1.bf16.msra.mxu0 %v2179
        %2302 = vmatprep.subr.bf16.mxu0 0
        %2303 = vmatpush1.bf16.msra.mxu0 %v2178
        %2304 = vmatprep.subr.bf16.mxu0 0
        %2305 = vmatpush1.bf16.msra.mxu0 %v2177
        %2306 = vmatprep.subr.bf16.mxu0 0
        %2307 = vmatpush2.bf16.msra.mxu0 0
        %2308 = vmatprep.subr.bf16.mxu0 0
        %2309 = vmatpush2.bf16.msra.mxu0 0
        %2310 = vmatprep.subr.bf16.mxu0 0
        %2311 = vmatpush2.bf16.msra.mxu0 0
        %2312 = vmatprep.subr.bf16.mxu0 0
        %2313 = vmatpush2.bf16.msra.mxu0 0
        %2314 = vmatprep.subr.bf16.mxu0 0
        %2315 = vmatpush2.bf16.msra.mxu0 0
        %2316 = vmatprep.subr.bf16.mxu0 0
        %2317 = vmatpush2.bf16.msra.mxu0 0
        %2318 = vmatprep.subr.bf16.mxu0 0
        %2319 = vmatpush2.bf16.msra.mxu0 0
        %2320 = vmatprep.subr.bf16.mxu0 0
        %2321 = vmatpush2.bf16.msra.mxu0 0
        %2322 = vmatprep.mubr.bf16.mxu0 0
        %2323 = vmatmul.mubr.bf16.gmra.mxu0 %v1862
        %v2324 = vpop.f32.mrf.mxu0
        %v2325 = vadd.f32 0.0, %v2324
        %v2326 = vpop.f32.mrf.mxu0
        %v2327 = vpop.f32.mrf.mxu0
        %v2328 = vadd.f32 0.0, %v2327
        %v2329 = vpop.f32.mrf.mxu0
        %2330 = vmatprep.mubr.bf16.mxu0 0
        %2331 = vmatmul.mubr.bf16.gmra.mxu0 %v1863
        %v2332 = vpop.f32.mrf.mxu0
        %v2333 = vadd.f32 0.0, %v2332
        %v2334 = vpop.f32.mrf.mxu0
        %v2335 = vpop.f32.mrf.mxu0
        %v2336 = vadd.f32 0.0, %v2335
        %v2337 = vpop.f32.mrf.mxu0
        %2338 = vmatprep.mubr.bf16.mxu0 0
        %2339 = vmatmul.mubr.bf16.gmra.mxu0 %v1864
        %v2340 = vpop.f32.mrf.mxu0
        %v2341 = vadd.f32 0.0, %v2340
        %v2342 = vpop.f32.mrf.mxu0
        %v2343 = vpop.f32.mrf.mxu0
        %v2344 = vadd.f32 0.0, %v2343
        %v2345 = vpop.f32.mrf.mxu0
        %2346 = vmatprep.mubr.bf16.mxu0 0
        %2347 = vmatmul.mubr.bf16.gmra.mxu0 %v1865
        %v2348 = vpop.f32.mrf.mxu0
        %v2349 = vadd.f32 0.0, %v2348
        %v2350 = vpop.f32.mrf.mxu0
        %v2351 = vpop.f32.mrf.mxu0
        %v2352 = vadd.f32 0.0, %v2351
        %v2353 = vpop.f32.mrf.mxu0
        %2354 = vmatprep.mubr.bf16.mxu0 0
        %2355 = vmatmul.mubr.bf16.gmra.mxu0 %v1866
        %v2356 = vpop.f32.mrf.mxu0
        %v2357 = vadd.f32 0.0, %v2356
        %v2358 = vpop.f32.mrf.mxu0
        %v2359 = vpop.f32.mrf.mxu0
        %v2360 = vadd.f32 0.0, %v2359
        %v2361 = vpop.f32.mrf.mxu0
        %2362 = vmatprep.mubr.bf16.mxu0 0
        %2363 = vmatmul.mubr.bf16.gmra.mxu0 %v1867
        %v2364 = vpop.f32.mrf.mxu0
        %v2365 = vadd.f32 0.0, %v2364
        %v2366 = vpop.f32.mrf.mxu0
        %v2367 = vpop.f32.mrf.mxu0
        %v2368 = vadd.f32 0.0, %v2367
        %v2369 = vpop.f32.mrf.mxu0
        %2370 = vmatprep.mubr.bf16.mxu0 0
        %2371 = vmatmul.mubr.bf16.gmra.mxu0 %v1868
        %v2372 = vpop.f32.mrf.mxu0
        %v2373 = vadd.f32 0.0, %v2372
        %v2374 = vpop.f32.mrf.mxu0
        %v2375 = vpop.f32.mrf.mxu0
        %v2376 = vadd.f32 0.0, %v2375
        %v2377 = vpop.f32.mrf.mxu0
        %2378 = vmatprep.mubr.bf16.mxu0 0
        %2379 = vmatmul.mubr.bf16.gmra.mxu0 %v1869
        %v2380 = vpop.f32.mrf.mxu0
        %v2381 = vadd.f32 0.0, %v2380
        %v2382 = vpop.f32.mrf.mxu0
        %v2383 = vpop.f32.mrf.mxu0
        %v2384 = vadd.f32 0.0, %v2383
        %v2385 = vpop.f32.mrf.mxu0
        %2386 = vdwg.mxu0
        %2387 = vmatprep.subr.bf16.mxu0 0
        %2388 = vmatpush1.bf16.msra.mxu0 %v2192
        %2389 = vmatprep.subr.bf16.mxu0 0
        %2390 = vmatpush1.bf16.msra.mxu0 %v2191
        %2391 = vmatprep.subr.bf16.mxu0 0
        %2392 = vmatpush1.bf16.msra.mxu0 %v2190
        %2393 = vmatprep.subr.bf16.mxu0 0
        %2394 = vmatpush1.bf16.msra.mxu0 %v2189
        %2395 = vmatprep.subr.bf16.mxu0 0
        %2396 = vmatpush1.bf16.msra.mxu0 %v2188
        %2397 = vmatprep.subr.bf16.mxu0 0
        %2398 = vmatpush1.bf16.msra.mxu0 %v2187
        %2399 = vmatprep.subr.bf16.mxu0 0
        %2400 = vmatpush1.bf16.msra.mxu0 %v2186
        %2401 = vmatprep.subr.bf16.mxu0 0
        %2402 = vmatpush1.bf16.msra.mxu0 %v2185
        %2403 = vmatprep.subr.bf16.mxu0 0
        %2404 = vmatpush2.bf16.msra.mxu0 0
        %2405 = vmatprep.subr.bf16.mxu0 0
        %2406 = vmatpush2.bf16.msra.mxu0 0
        %2407 = vmatprep.subr.bf16.mxu0 0
        %2408 = vmatpush2.bf16.msra.mxu0 0
        %2409 = vmatprep.subr.bf16.mxu0 0
        %2410 = vmatpush2.bf16.msra.mxu0 0
        %2411 = vmatprep.subr.bf16.mxu0 0
        %2412 = vmatpush2.bf16.msra.mxu0 0
        %2413 = vmatprep.subr.bf16.mxu0 0
        %2414 = vmatpush2.bf16.msra.mxu0 0
        %2415 = vmatprep.subr.bf16.mxu0 0
        %2416 = vmatpush2.bf16.msra.mxu0 0
        %2417 = vmatprep.subr.bf16.mxu0 0
        %2418 = vmatpush2.bf16.msra.mxu0 0
        %2419 = vmatprep.mubr.bf16.mxu0 0
        %2420 = vmatmul.mubr.bf16.gmra.mxu0 %v1870
        %v2421 = vpop.f32.mrf.mxu0
        %v2422 = vadd.f32 0.0, %v2421
        %v2423 = vpop.f32.mrf.mxu0
        %v2424 = vpop.f32.mrf.mxu0
        %v2425 = vadd.f32 0.0, %v2424
        %v2426 = vpop.f32.mrf.mxu0
        %2427 = vmatprep.mubr.bf16.mxu0 0
        %2428 = vmatmul.mubr.bf16.gmra.mxu0 %v1871
        %v2429 = vpop.f32.mrf.mxu0
        %v2430 = vadd.f32 0.0, %v2429
        %v2431 = vpop.f32.mrf.mxu0
        %v2432 = vpop.f32.mrf.mxu0
        %v2433 = vadd.f32 0.0, %v2432
        %v2434 = vpop.f32.mrf.mxu0
        %2435 = vmatprep.mubr.bf16.mxu0 0
        %2436 = vmatmul.mubr.bf16.gmra.mxu0 %v1872
        %v2437 = vpop.f32.mrf.mxu0
        %v2438 = vadd.f32 0.0, %v2437
        %v2439 = vpop.f32.mrf.mxu0
        %v2440 = vpop.f32.mrf.mxu0
        %v2441 = vadd.f32 0.0, %v2440
        %v2442 = vpop.f32.mrf.mxu0
        %2443 = vmatprep.mubr.bf16.mxu0 0
        %2444 = vmatmul.mubr.bf16.gmra.mxu0 %v1873
        %v2445 = vpop.f32.mrf.mxu0
        %v2446 = vadd.f32 0.0, %v2445
        %v2447 = vpop.f32.mrf.mxu0
        %v2448 = vpop.f32.mrf.mxu0
        %v2449 = vadd.f32 0.0, %v2448
        %v2450 = vpop.f32.mrf.mxu0
        %2451 = vmatprep.mubr.bf16.mxu0 0
        %2452 = vmatmul.mubr.bf16.gmra.mxu0 %v1874
        %v2453 = vpop.f32.mrf.mxu0
        %v2454 = vadd.f32 0.0, %v2453
        %v2455 = vpop.f32.mrf.mxu0
        %v2456 = vpop.f32.mrf.mxu0
        %v2457 = vadd.f32 0.0, %v2456
        %v2458 = vpop.f32.mrf.mxu0
        %2459 = vmatprep.mubr.bf16.mxu0 0
        %2460 = vmatmul.mubr.bf16.gmra.mxu0 %v1875
        %v2461 = vpop.f32.mrf.mxu0
        %v2462 = vadd.f32 0.0, %v2461
        %v2463 = vpop.f32.mrf.mxu0
        %v2464 = vpop.f32.mrf.mxu0
        %v2465 = vadd.f32 0.0, %v2464
        %v2466 = vpop.f32.mrf.mxu0
        %2467 = vmatprep.mubr.bf16.mxu0 0
        %2468 = vmatmul.mubr.bf16.gmra.mxu0 %v1876
        %v2469 = vpop.f32.mrf.mxu0
        %v2470 = vadd.f32 0.0, %v2469
        %v2471 = vpop.f32.mrf.mxu0
        %v2472 = vpop.f32.mrf.mxu0
        %v2473 = vadd.f32 0.0, %v2472
        %v2474 = vpop.f32.mrf.mxu0
        %2475 = vmatprep.mubr.bf16.mxu0 0
        %2476 = vmatmul.mubr.bf16.gmra.mxu0 %v1877
        %v2477 = vpop.f32.mrf.mxu0
        %v2478 = vadd.f32 0.0, %v2477
        %v2479 = vpop.f32.mrf.mxu0
        %v2480 = vpop.f32.mrf.mxu0
        %v2481 = vadd.f32 0.0, %v2480
        %v2482 = vpop.f32.mrf.mxu0
        %2483 = vdwg.mxu0
        %v2484 = vsub.f32 %v1718, %v2228
        %v2485 = vsub.f32 %v1719, %v2231
        %v2486 = vsub.f32 %v1720, %v2236
        %v2487 = vsub.f32 %v1721, %v2239
        %v2488 = vsub.f32 %v1722, %v2244
        %v2489 = vsub.f32 %v1723, %v2247
        %v2490 = vsub.f32 %v1724, %v2252
        %v2491 = vsub.f32 %v1725, %v2255
        %v2492 = vsub.f32 %v1726, %v2260
        %v2493 = vsub.f32 %v1727, %v2263
        %v2494 = vsub.f32 %v1728, %v2268
        %v2495 = vsub.f32 %v1729, %v2271
        %v2496 = vsub.f32 %v1730, %v2276
        %v2497 = vsub.f32 %v1731, %v2279
        %v2498 = vsub.f32 %v1732, %v2284
        %v2499 = vsub.f32 %v1733, %v2287
        %v2500 = vsub.f32 %v1718, %v2325
        %v2501 = vsub.f32 %v1719, %v2328
        %v2502 = vsub.f32 %v1720, %v2333
        %v2503 = vsub.f32 %v1721, %v2336
        %v2504 = vsub.f32 %v1722, %v2341
        %v2505 = vsub.f32 %v1723, %v2344
        %v2506 = vsub.f32 %v1724, %v2349
        %v2507 = vsub.f32 %v1725, %v2352
        %v2508 = vsub.f32 %v1726, %v2357
        %v2509 = vsub.f32 %v1727, %v2360
        %v2510 = vsub.f32 %v1728, %v2365
        %v2511 = vsub.f32 %v1729, %v2368
        %v2512 = vsub.f32 %v1730, %v2373
        %v2513 = vsub.f32 %v1731, %v2376
        %v2514 = vsub.f32 %v1732, %v2381
        %v2515 = vsub.f32 %v1733, %v2384
        %v2516 = vsub.f32 %v1718, %v2422
        %v2517 = vsub.f32 %v1719, %v2425
        %v2518 = vsub.f32 %v1720, %v2430
        %v2519 = vsub.f32 %v1721, %v2433
        %v2520 = vsub.f32 %v1722, %v2438
        %v2521 = vsub.f32 %v1723, %v2441
        %v2522 = vsub.f32 %v1724, %v2446
        %v2523 = vsub.f32 %v1725, %v2449
        %v2524 = vsub.f32 %v1726, %v2454
        %v2525 = vsub.f32 %v1727, %v2457
        %v2526 = vsub.f32 %v1728, %v2462
        %v2527 = vsub.f32 %v1729, %v2465
        %v2528 = vsub.f32 %v1730, %v2470
        %v2529 = vsub.f32 %v1731, %v2473
        %v2530 = vsub.f32 %v1732, %v2478
        %v2531 = vsub.f32 %v1733, %v2481
        %v2532 = vmul.f32 %v2484, 0.5
        %v2533 = vmul.f32 %v2485, 0.5
        %v2534 = vmul.f32 %v2486, 0.5
        %v2535 = vmul.f32 %v2487, 0.5
        %v2536 = vmul.f32 %v2488, 0.5
        %v2537 = vmul.f32 %v2489, 0.5
        %v2538 = vmul.f32 %v2490, 0.5
        %v2539 = vmul.f32 %v2491, 0.5
        %v2540 = vmul.f32 %v2492, 0.5
        %v2541 = vmul.f32 %v2493, 0.5
        %v2542 = vmul.f32 %v2494, 0.5
        %v2543 = vmul.f32 %v2495, 0.5
        %v2544 = vmul.f32 %v2496, 0.5
        %v2545 = vmul.f32 %v2497, 0.5
        %v2546 = vmul.f32 %v2498, 0.5
        %v2547 = vmul.f32 %v2499, 0.5
        %v2548 = vmul.f32 %v2500, 0.5
        %v2549 = vmul.f32 %v2501, 0.5
        %v2550 = vmul.f32 %v2502, 0.5
        %v2551 = vmul.f32 %v2503, 0.5
        %v2552 = vmul.f32 %v2504, 0.5
        %v2553 = vmul.f32 %v2505, 0.5
        %v2554 = vmul.f32 %v2506, 0.5
        %v2555 = vmul.f32 %v2507, 0.5
        %v2556 = vmul.f32 %v2508, 0.5
        %v2557 = vmul.f32 %v2509, 0.5
        %v2558 = vmul.f32 %v2510, 0.5
        %v2559 = vmul.f32 %v2511, 0.5
        %v2560 = vmul.f32 %v2512, 0.5
        %v2561 = vmul.f32 %v2513, 0.5
        %v2562 = vmul.f32 %v2514, 0.5
        %v2563 = vmul.f32 %v2515, 0.5
        %v2564 = vmul.f32 %v2516, 0.5
        %v2565 = vmul.f32 %v2517, 0.5
        %v2566 = vmul.f32 %v2518, 0.5
        %v2567 = vmul.f32 %v2519, 0.5
        %v2568 = vmul.f32 %v2520, 0.5
        %v2569 = vmul.f32 %v2521, 0.5
        %v2570 = vmul.f32 %v2522, 0.5
        %v2571 = vmul.f32 %v2523, 0.5
        %v2572 = vmul.f32 %v2524, 0.5
        %v2573 = vmul.f32 %v2525, 0.5
        %v2574 = vmul.f32 %v2526, 0.5
        %v2575 = vmul.f32 %v2527, 0.5
        %v2576 = vmul.f32 %v2528, 0.5
        %v2577 = vmul.f32 %v2529, 0.5
        %v2578 = vmul.f32 %v2530, 0.5
        %v2579 = vmul.f32 %v2531, 0.5
        %v2580 = vpack.c.bf16 %v2533, %v2532
        %v2581 = vpack.c.bf16 %v2535, %v2534
        %v2582 = vpack.c.bf16 %v2537, %v2536
        %v2583 = vpack.c.bf16 %v2539, %v2538
        %v2584 = vpack.c.bf16 %v2541, %v2540
        %v2585 = vpack.c.bf16 %v2543, %v2542
        %v2586 = vpack.c.bf16 %v2545, %v2544
        %v2587 = vpack.c.bf16 %v2547, %v2546
        %v2588 = vpack.c.bf16 %v2549, %v2548
        %v2589 = vpack.c.bf16 %v2551, %v2550
        %v2590 = vpack.c.bf16 %v2553, %v2552
        %v2591 = vpack.c.bf16 %v2555, %v2554
        %v2592 = vpack.c.bf16 %v2557, %v2556
        %v2593 = vpack.c.bf16 %v2559, %v2558
        %v2594 = vpack.c.bf16 %v2561, %v2560
        %v2595 = vpack.c.bf16 %v2563, %v2562
        %v2596 = vpack.c.bf16 %v2565, %v2564
        %v2597 = vpack.c.bf16 %v2567, %v2566
        %v2598 = vpack.c.bf16 %v2569, %v2568
        %v2599 = vpack.c.bf16 %v2571, %v2570
        %v2600 = vpack.c.bf16 %v2573, %v2572
        %v2601 = vpack.c.bf16 %v2575, %v2574
        %v2602 = vpack.c.bf16 %v2577, %v2576
        %v2603 = vpack.c.bf16 %v2579, %v2578
        %2604 = vmatprep.subr.bf16.mxu0 0
        %2605 = vmatpush1.bf16.msra.mxu0 %v2587
        %2606 = vmatprep.subr.bf16.mxu0 0
        %2607 = vmatpush1.bf16.msra.mxu0 %v2586
        %2608 = vmatprep.subr.bf16.mxu0 0
        %2609 = vmatpush1.bf16.msra.mxu0 %v2585
        %2610 = vmatprep.subr.bf16.mxu0 0
        %2611 = vmatpush1.bf16.msra.mxu0 %v2584
        %2612 = vmatprep.subr.bf16.mxu0 0
        %2613 = vmatpush1.bf16.msra.mxu0 %v2583
        %2614 = vmatprep.subr.bf16.mxu0 0
        %2615 = vmatpush1.bf16.msra.mxu0 %v2582
        %2616 = vmatprep.subr.bf16.mxu0 0
        %2617 = vmatpush1.bf16.msra.mxu0 %v2581
        %2618 = vmatprep.subr.bf16.mxu0 0
        %2619 = vmatpush1.bf16.msra.mxu0 %v2580
        %2620 = vmatprep.subr.bf16.mxu0 0
        %2621 = vmatpush2.bf16.msra.mxu0 0
        %2622 = vmatprep.subr.bf16.mxu0 0
        %2623 = vmatpush2.bf16.msra.mxu0 0
        %2624 = vmatprep.subr.bf16.mxu0 0
        %2625 = vmatpush2.bf16.msra.mxu0 0
        %2626 = vmatprep.subr.bf16.mxu0 0
        %2627 = vmatpush2.bf16.msra.mxu0 0
        %2628 = vmatprep.subr.bf16.mxu0 0
        %2629 = vmatpush2.bf16.msra.mxu0 0
        %2630 = vmatprep.subr.bf16.mxu0 0
        %2631 = vmatpush2.bf16.msra.mxu0 0
        %2632 = vmatprep.subr.bf16.mxu0 0
        %2633 = vmatpush2.bf16.msra.mxu0 0
        %2634 = vmatprep.subr.bf16.mxu0 0
        %2635 = vmatpush2.bf16.msra.mxu0 0
        %2636 = vmatprep.mubr.bf16.mxu0 0
        %2637 = vmatmul.mubr.bf16.gmra.mxu0 %v2169
        %v2638 = vpop.f32.mrf.mxu0
        %v2639 = vadd.f32 0.0, %v2638
        %v2640 = vpop.f32.mrf.mxu0
        %v2641 = vpop.f32.mrf.mxu0
        %v2642 = vadd.f32 0.0, %v2641
        %v2643 = vpop.f32.mrf.mxu0
        %2644 = vmatprep.mubr.bf16.mxu0 0
        %2645 = vmatmul.mubr.bf16.gmra.mxu0 %v2170
        %v2646 = vpop.f32.mrf.mxu0
        %v2647 = vadd.f32 0.0, %v2646
        %v2648 = vpop.f32.mrf.mxu0
        %v2649 = vpop.f32.mrf.mxu0
        %v2650 = vadd.f32 0.0, %v2649
        %v2651 = vpop.f32.mrf.mxu0
        %2652 = vmatprep.mubr.bf16.mxu0 0
        %2653 = vmatmul.mubr.bf16.gmra.mxu0 %v2171
        %v2654 = vpop.f32.mrf.mxu0
        %v2655 = vadd.f32 0.0, %v2654
        %v2656 = vpop.f32.mrf.mxu0
        %v2657 = vpop.f32.mrf.mxu0
        %v2658 = vadd.f32 0.0, %v2657
        %v2659 = vpop.f32.mrf.mxu0
        %2660 = vmatprep.mubr.bf16.mxu0 0
        %2661 = vmatmul.mubr.bf16.gmra.mxu0 %v2172
        %v2662 = vpop.f32.mrf.mxu0
        %v2663 = vadd.f32 0.0, %v2662
        %v2664 = vpop.f32.mrf.mxu0
        %v2665 = vpop.f32.mrf.mxu0
        %v2666 = vadd.f32 0.0, %v2665
        %v2667 = vpop.f32.mrf.mxu0
        %2668 = vmatprep.mubr.bf16.mxu0 0
        %2669 = vmatmul.mubr.bf16.gmra.mxu0 %v2173
        %v2670 = vpop.f32.mrf.mxu0
        %v2671 = vadd.f32 0.0, %v2670
        %v2672 = vpop.f32.mrf.mxu0
        %v2673 = vpop.f32.mrf.mxu0
        %v2674 = vadd.f32 0.0, %v2673
        %v2675 = vpop.f32.mrf.mxu0
        %2676 = vmatprep.mubr.bf16.mxu0 0
        %2677 = vmatmul.mubr.bf16.gmra.mxu0 %v2174
        %v2678 = vpop.f32.mrf.mxu0
        %v2679 = vadd.f32 0.0, %v2678
        %v2680 = vpop.f32.mrf.mxu0
        %v2681 = vpop.f32.mrf.mxu0
        %v2682 = vadd.f32 0.0, %v2681
        %v2683 = vpop.f32.mrf.mxu0
        %2684 = vmatprep.mubr.bf16.mxu0 0
        %2685 = vmatmul.mubr.bf16.gmra.mxu0 %v2175
        %v2686 = vpop.f32.mrf.mxu0
        %v2687 = vadd.f32 0.0, %v2686
        %v2688 = vpop.f32.mrf.mxu0
        %v2689 = vpop.f32.mrf.mxu0
        %v2690 = vadd.f32 0.0, %v2689
        %v2691 = vpop.f32.mrf.mxu0
        %2692 = vmatprep.mubr.bf16.mxu0 0
        %2693 = vmatmul.mubr.bf16.gmra.mxu0 %v2176
        %v2694 = vpop.f32.mrf.mxu0
        %v2695 = vadd.f32 0.0, %v2694
        %v2696 = vpop.f32.mrf.mxu0
        %v2697 = vpop.f32.mrf.mxu0
        %v2698 = vadd.f32 0.0, %v2697
        %v2699 = vpop.f32.mrf.mxu0
        %2700 = vdwg.mxu0
        %2701 = vmatprep.subr.bf16.mxu0 0
        %2702 = vmatpush1.bf16.msra.mxu0 %v2595
        %2703 = vmatprep.subr.bf16.mxu0 0
        %2704 = vmatpush1.bf16.msra.mxu0 %v2594
        %2705 = vmatprep.subr.bf16.mxu0 0
        %2706 = vmatpush1.bf16.msra.mxu0 %v2593
        %2707 = vmatprep.subr.bf16.mxu0 0
        %2708 = vmatpush1.bf16.msra.mxu0 %v2592
        %2709 = vmatprep.subr.bf16.mxu0 0
        %2710 = vmatpush1.bf16.msra.mxu0 %v2591
        %2711 = vmatprep.subr.bf16.mxu0 0
        %2712 = vmatpush1.bf16.msra.mxu0 %v2590
        %2713 = vmatprep.subr.bf16.mxu0 0
        %2714 = vmatpush1.bf16.msra.mxu0 %v2589
        %2715 = vmatprep.subr.bf16.mxu0 0
        %2716 = vmatpush1.bf16.msra.mxu0 %v2588
        %2717 = vmatprep.subr.bf16.mxu0 0
        %2718 = vmatpush2.bf16.msra.mxu0 0
        %2719 = vmatprep.subr.bf16.mxu0 0
        %2720 = vmatpush2.bf16.msra.mxu0 0
        %2721 = vmatprep.subr.bf16.mxu0 0
        %2722 = vmatpush2.bf16.msra.mxu0 0
        %2723 = vmatprep.subr.bf16.mxu0 0
        %2724 = vmatpush2.bf16.msra.mxu0 0
        %2725 = vmatprep.subr.bf16.mxu0 0
        %2726 = vmatpush2.bf16.msra.mxu0 0
        %2727 = vmatprep.subr.bf16.mxu0 0
        %2728 = vmatpush2.bf16.msra.mxu0 0
        %2729 = vmatprep.subr.bf16.mxu0 0
        %2730 = vmatpush2.bf16.msra.mxu0 0
        %2731 = vmatprep.subr.bf16.mxu0 0
        %2732 = vmatpush2.bf16.msra.mxu0 0
        %2733 = vmatprep.mubr.bf16.mxu0 0
        %2734 = vmatmul.mubr.bf16.gmra.mxu0 %v2177
        %v2735 = vpop.f32.mrf.mxu0
        %v2736 = vadd.f32 0.0, %v2735
        %v2737 = vpop.f32.mrf.mxu0
        %v2738 = vpop.f32.mrf.mxu0
        %v2739 = vadd.f32 0.0, %v2738
        %v2740 = vpop.f32.mrf.mxu0
        %2741 = vmatprep.mubr.bf16.mxu0 0
        %2742 = vmatmul.mubr.bf16.gmra.mxu0 %v2178
        %v2743 = vpop.f32.mrf.mxu0
        %v2744 = vadd.f32 0.0, %v2743
        %v2745 = vpop.f32.mrf.mxu0
        %v2746 = vpop.f32.mrf.mxu0
        %v2747 = vadd.f32 0.0, %v2746
        %v2748 = vpop.f32.mrf.mxu0
        %2749 = vmatprep.mubr.bf16.mxu0 0
        %2750 = vmatmul.mubr.bf16.gmra.mxu0 %v2179
        %v2751 = vpop.f32.mrf.mxu0
        %v2752 = vadd.f32 0.0, %v2751
        %v2753 = vpop.f32.mrf.mxu0
        %v2754 = vpop.f32.mrf.mxu0
        %v2755 = vadd.f32 0.0, %v2754
        %v2756 = vpop.f32.mrf.mxu0
        %2757 = vmatprep.mubr.bf16.mxu0 0
        %2758 = vmatmul.mubr.bf16.gmra.mxu0 %v2180
        %v2759 = vpop.f32.mrf.mxu0
        %v2760 = vadd.f32 0.0, %v2759
        %v2761 = vpop.f32.mrf.mxu0
        %v2762 = vpop.f32.mrf.mxu0
        %v2763 = vadd.f32 0.0, %v2762
        %v2764 = vpop.f32.mrf.mxu0
        %2765 = vmatprep.mubr.bf16.mxu0 0
        %2766 = vmatmul.mubr.bf16.gmra.mxu0 %v2181
        %v2767 = vpop.f32.mrf.mxu0
        %v2768 = vadd.f32 0.0, %v2767
        %v2769 = vpop.f32.mrf.mxu0
        %v2770 = vpop.f32.mrf.mxu0
        %v2771 = vadd.f32 0.0, %v2770
        %v2772 = vpop.f32.mrf.mxu0
        %2773 = vmatprep.mubr.bf16.mxu0 0
        %2774 = vmatmul.mubr.bf16.gmra.mxu0 %v2182
        %v2775 = vpop.f32.mrf.mxu0
        %v2776 = vadd.f32 0.0, %v2775
        %v2777 = vpop.f32.mrf.mxu0
        %v2778 = vpop.f32.mrf.mxu0
        %v2779 = vadd.f32 0.0, %v2778
        %v2780 = vpop.f32.mrf.mxu0
        %2781 = vmatprep.mubr.bf16.mxu0 0
        %2782 = vmatmul.mubr.bf16.gmra.mxu0 %v2183
        %v2783 = vpop.f32.mrf.mxu0
        %v2784 = vadd.f32 0.0, %v2783
        %v2785 = vpop.f32.mrf.mxu0
        %v2786 = vpop.f32.mrf.mxu0
        %v2787 = vadd.f32 0.0, %v2786
        %v2788 = vpop.f32.mrf.mxu0
        %2789 = vmatprep.mubr.bf16.mxu0 0
        %2790 = vmatmul.mubr.bf16.gmra.mxu0 %v2184
        %v2791 = vpop.f32.mrf.mxu0
        %v2792 = vadd.f32 0.0, %v2791
        %v2793 = vpop.f32.mrf.mxu0
        %v2794 = vpop.f32.mrf.mxu0
        %v2795 = vadd.f32 0.0, %v2794
        %v2796 = vpop.f32.mrf.mxu0
        %2797 = vdwg.mxu0
        %2798 = vmatprep.subr.bf16.mxu0 0
        %2799 = vmatpush1.bf16.msra.mxu0 %v2603
        %2800 = vmatprep.subr.bf16.mxu0 0
        %2801 = vmatpush1.bf16.msra.mxu0 %v2602
        %2802 = vmatprep.subr.bf16.mxu0 0
        %2803 = vmatpush1.bf16.msra.mxu0 %v2601
        %2804 = vmatprep.subr.bf16.mxu0 0
        %2805 = vmatpush1.bf16.msra.mxu0 %v2600
        %2806 = vmatprep.subr.bf16.mxu0 0
        %2807 = vmatpush1.bf16.msra.mxu0 %v2599
        %2808 = vmatprep.subr.bf16.mxu0 0
        %2809 = vmatpush1.bf16.msra.mxu0 %v2598
        %2810 = vmatprep.subr.bf16.mxu0 0
        %2811 = vmatpush1.bf16.msra.mxu0 %v2597
        %2812 = vmatprep.subr.bf16.mxu0 0
        %2813 = vmatpush1.bf16.msra.mxu0 %v2596
        %2814 = vmatprep.subr.bf16.mxu0 0
        %2815 = vmatpush2.bf16.msra.mxu0 0
        %2816 = vmatprep.subr.bf16.mxu0 0
        %2817 = vmatpush2.bf16.msra.mxu0 0
        %2818 = vmatprep.subr.bf16.mxu0 0
        %2819 = vmatpush2.bf16.msra.mxu0 0
        %2820 = vmatprep.subr.bf16.mxu0 0
        %2821 = vmatpush2.bf16.msra.mxu0 0
        %2822 = vmatprep.subr.bf16.mxu0 0
        %2823 = vmatpush2.bf16.msra.mxu0 0
        %2824 = vmatprep.subr.bf16.mxu0 0
        %2825 = vmatpush2.bf16.msra.mxu0 0
        %2826 = vmatprep.subr.bf16.mxu0 0
        %2827 = vmatpush2.bf16.msra.mxu0 0
        %2828 = vmatprep.subr.bf16.mxu0 0
        %2829 = vmatpush2.bf16.msra.mxu0 0
        %2830 = vmatprep.mubr.bf16.mxu0 0
        %2831 = vmatmul.mubr.bf16.gmra.mxu0 %v2185
        %v2832 = vpop.f32.mrf.mxu0
        %v2833 = vadd.f32 0.0, %v2832
        %v2834 = vpop.f32.mrf.mxu0
        %v2835 = vpop.f32.mrf.mxu0
        %v2836 = vadd.f32 0.0, %v2835
        %v2837 = vpop.f32.mrf.mxu0
        %2838 = vmatprep.mubr.bf16.mxu0 0
        %2839 = vmatmul.mubr.bf16.gmra.mxu0 %v2186
        %v2840 = vpop.f32.mrf.mxu0
        %v2841 = vadd.f32 0.0, %v2840
        %v2842 = vpop.f32.mrf.mxu0
        %v2843 = vpop.f32.mrf.mxu0
        %v2844 = vadd.f32 0.0, %v2843
        %v2845 = vpop.f32.mrf.mxu0
        %2846 = vmatprep.mubr.bf16.mxu0 0
        %2847 = vmatmul.mubr.bf16.gmra.mxu0 %v2187
        %v2848 = vpop.f32.mrf.mxu0
        %v2849 = vadd.f32 0.0, %v2848
        %v2850 = vpop.f32.mrf.mxu0
        %v2851 = vpop.f32.mrf.mxu0
        %v2852 = vadd.f32 0.0, %v2851
        %v2853 = vpop.f32.mrf.mxu0
        %2854 = vmatprep.mubr.bf16.mxu0 0
        %2855 = vmatmul.mubr.bf16.gmra.mxu0 %v2188
        %v2856 = vpop.f32.mrf.mxu0
        %v2857 = vadd.f32 0.0, %v2856
        %v2858 = vpop.f32.mrf.mxu0
        %v2859 = vpop.f32.mrf.mxu0
        %v2860 = vadd.f32 0.0, %v2859
        %v2861 = vpop.f32.mrf.mxu0
        %2862 = vmatprep.mubr.bf16.mxu0 0
        %2863 = vmatmul.mubr.bf16.gmra.mxu0 %v2189
        %v2864 = vpop.f32.mrf.mxu0
        %v2865 = vadd.f32 0.0, %v2864
        %v2866 = vpop.f32.mrf.mxu0
        %v2867 = vpop.f32.mrf.mxu0
        %v2868 = vadd.f32 0.0, %v2867
        %v2869 = vpop.f32.mrf.mxu0
        %2870 = vmatprep.mubr.bf16.mxu0 0
        %2871 = vmatmul.mubr.bf16.gmra.mxu0 %v2190
        %v2872 = vpop.f32.mrf.mxu0
        %v2873 = vadd.f32 0.0, %v2872
        %v2874 = vpop.f32.mrf.mxu0
        %v2875 = vpop.f32.mrf.mxu0
        %v2876 = vadd.f32 0.0, %v2875
        %v2877 = vpop.f32.mrf.mxu0
        %2878 = vmatprep.mubr.bf16.mxu0 0
        %2879 = vmatmul.mubr.bf16.gmra.mxu0 %v2191
        %v2880 = vpop.f32.mrf.mxu0
        %v2881 = vadd.f32 0.0, %v2880
        %v2882 = vpop.f32.mrf.mxu0
        %v2883 = vpop.f32.mrf.mxu0
        %v2884 = vadd.f32 0.0, %v2883
        %v2885 = vpop.f32.mrf.mxu0
        %2886 = vmatprep.mubr.bf16.mxu0 0
        %2887 = vmatmul.mubr.bf16.gmra.mxu0 %v2192
        %v2888 = vpop.f32.mrf.mxu0
        %v2889 = vadd.f32 0.0, %v2888
        %v2890 = vpop.f32.mrf.mxu0
        %v2891 = vpop.f32.mrf.mxu0
        %v2892 = vadd.f32 0.0, %v2891
        %v2893 = vpop.f32.mrf.mxu0
        %2894 = vdwg.mxu0
        %2895 = vmatprep.subr.bf16.mxu0 0
        %2896 = vmatpush1.bf16.msra.mxu0 %v1861
        %2897 = vmatprep.subr.bf16.mxu0 0
        %2898 = vmatpush1.bf16.msra.mxu0 %v1860
        %2899 = vmatprep.subr.bf16.mxu0 0
        %2900 = vmatpush1.bf16.msra.mxu0 %v1859
        %2901 = vmatprep.subr.bf16.mxu0 0
        %2902 = vmatpush1.bf16.msra.mxu0 %v1858
        %2903 = vmatprep.subr.bf16.mxu0 0
        %2904 = vmatpush1.bf16.msra.mxu0 %v1857
        %2905 = vmatprep.subr.bf16.mxu0 0
        %2906 = vmatpush1.bf16.msra.mxu0 %v1856
        %2907 = vmatprep.subr.bf16.mxu0 0
        %2908 = vmatpush1.bf16.msra.mxu0 %v1855
        %2909 = vmatprep.subr.bf16.mxu0 0
        %2910 = vmatpush1.bf16.msra.mxu0 %v1854
        %2911 = vmatprep.subr.bf16.mxu0 0
        %2912 = vmatpush2.bf16.msra.mxu0 0
        %2913 = vmatprep.subr.bf16.mxu0 0
        %2914 = vmatpush2.bf16.msra.mxu0 0
        %2915 = vmatprep.subr.bf16.mxu0 0
        %2916 = vmatpush2.bf16.msra.mxu0 0
        %2917 = vmatprep.subr.bf16.mxu0 0
        %2918 = vmatpush2.bf16.msra.mxu0 0
        %2919 = vmatprep.subr.bf16.mxu0 0
        %2920 = vmatpush2.bf16.msra.mxu0 0
        %2921 = vmatprep.subr.bf16.mxu0 0
        %2922 = vmatpush2.bf16.msra.mxu0 0
        %2923 = vmatprep.subr.bf16.mxu0 0
        %2924 = vmatpush2.bf16.msra.mxu0 0
        %2925 = vmatprep.subr.bf16.mxu0 0
        %2926 = vmatpush2.bf16.msra.mxu0 0
        %2927 = vmatprep.mubr.bf16.mxu0 0
        %2928 = vmatmul.mubr.bf16.gmra.mxu0 %v2580
        %v2929 = vpop.f32.mrf.mxu0
        %v2930 = vadd.f32 0.0, %v2929
        %v2931 = vpop.f32.mrf.mxu0
        %v2932 = vpop.f32.mrf.mxu0
        %v2933 = vadd.f32 0.0, %v2932
        %v2934 = vpop.f32.mrf.mxu0
        %2935 = vmatprep.mubr.bf16.mxu0 0
        %2936 = vmatmul.mubr.bf16.gmra.mxu0 %v2581
        %v2937 = vpop.f32.mrf.mxu0
        %v2938 = vadd.f32 0.0, %v2937
        %v2939 = vpop.f32.mrf.mxu0
        %v2940 = vpop.f32.mrf.mxu0
        %v2941 = vadd.f32 0.0, %v2940
        %v2942 = vpop.f32.mrf.mxu0
        %2943 = vmatprep.mubr.bf16.mxu0 0
        %2944 = vmatmul.mubr.bf16.gmra.mxu0 %v2582
        %v2945 = vpop.f32.mrf.mxu0
        %v2946 = vadd.f32 0.0, %v2945
        %v2947 = vpop.f32.mrf.mxu0
        %v2948 = vpop.f32.mrf.mxu0
        %v2949 = vadd.f32 0.0, %v2948
        %v2950 = vpop.f32.mrf.mxu0
        %2951 = vmatprep.mubr.bf16.mxu0 0
        %2952 = vmatmul.mubr.bf16.gmra.mxu0 %v2583
        %v2953 = vpop.f32.mrf.mxu0
        %v2954 = vadd.f32 0.0, %v2953
        %v2955 = vpop.f32.mrf.mxu0
        %v2956 = vpop.f32.mrf.mxu0
        %v2957 = vadd.f32 0.0, %v2956
        %v2958 = vpop.f32.mrf.mxu0
        %2959 = vmatprep.mubr.bf16.mxu0 0
        %2960 = vmatmul.mubr.bf16.gmra.mxu0 %v2584
        %v2961 = vpop.f32.mrf.mxu0
        %v2962 = vadd.f32 0.0, %v2961
        %v2963 = vpop.f32.mrf.mxu0
        %v2964 = vpop.f32.mrf.mxu0
        %v2965 = vadd.f32 0.0, %v2964
        %v2966 = vpop.f32.mrf.mxu0
        %2967 = vmatprep.mubr.bf16.mxu0 0
        %2968 = vmatmul.mubr.bf16.gmra.mxu0 %v2585
        %v2969 = vpop.f32.mrf.mxu0
        %v2970 = vadd.f32 0.0, %v2969
        %v2971 = vpop.f32.mrf.mxu0
        %v2972 = vpop.f32.mrf.mxu0
        %v2973 = vadd.f32 0.0, %v2972
        %v2974 = vpop.f32.mrf.mxu0
        %2975 = vmatprep.mubr.bf16.mxu0 0
        %2976 = vmatmul.mubr.bf16.gmra.mxu0 %v2586
        %v2977 = vpop.f32.mrf.mxu0
        %v2978 = vadd.f32 0.0, %v2977
        %v2979 = vpop.f32.mrf.mxu0
        %v2980 = vpop.f32.mrf.mxu0
        %v2981 = vadd.f32 0.0, %v2980
        %v2982 = vpop.f32.mrf.mxu0
        %2983 = vmatprep.mubr.bf16.mxu0 0
        %2984 = vmatmul.mubr.bf16.gmra.mxu0 %v2587
        %v2985 = vpop.f32.mrf.mxu0
        %v2986 = vadd.f32 0.0, %v2985
        %v2987 = vpop.f32.mrf.mxu0
        %v2988 = vpop.f32.mrf.mxu0
        %v2989 = vadd.f32 0.0, %v2988
        %v2990 = vpop.f32.mrf.mxu0
        %2991 = vdwg.mxu0
        %2992 = vmatprep.subr.bf16.mxu0 0
        %2993 = vmatpush1.bf16.msra.mxu0 %v1869
        %2994 = vmatprep.subr.bf16.mxu0 0
        %2995 = vmatpush1.bf16.msra.mxu0 %v1868
        %2996 = vmatprep.subr.bf16.mxu0 0
        %2997 = vmatpush1.bf16.msra.mxu0 %v1867
        %2998 = vmatprep.subr.bf16.mxu0 0
        %2999 = vmatpush1.bf16.msra.mxu0 %v1866
        %3000 = vmatprep.subr.bf16.mxu0 0
        %3001 = vmatpush1.bf16.msra.mxu0 %v1865
        %3002 = vmatprep.subr.bf16.mxu0 0
        %3003 = vmatpush1.bf16.msra.mxu0 %v1864
        %3004 = vmatprep.subr.bf16.mxu0 0
        %3005 = vmatpush1.bf16.msra.mxu0 %v1863
        %3006 = vmatprep.subr.bf16.mxu0 0
        %3007 = vmatpush1.bf16.msra.mxu0 %v1862
        %3008 = vmatprep.subr.bf16.mxu0 0
        %3009 = vmatpush2.bf16.msra.mxu0 0
        %3010 = vmatprep.subr.bf16.mxu0 0
        %3011 = vmatpush2.bf16.msra.mxu0 0
        %3012 = vmatprep.subr.bf16.mxu0 0
        %3013 = vmatpush2.bf16.msra.mxu0 0
        %3014 = vmatprep.subr.bf16.mxu0 0
        %3015 = vmatpush2.bf16.msra.mxu0 0
        %3016 = vmatprep.subr.bf16.mxu0 0
        %3017 = vmatpush2.bf16.msra.mxu0 0
        %3018 = vmatprep.subr.bf16.mxu0 0
        %3019 = vmatpush2.bf16.msra.mxu0 0
        %3020 = vmatprep.subr.bf16.mxu0 0
        %3021 = vmatpush2.bf16.msra.mxu0 0
        %3022 = vmatprep.subr.bf16.mxu0 0
        %3023 = vmatpush2.bf16.msra.mxu0 0
        %3024 = vmatprep.mubr.bf16.mxu0 0
        %3025 = vmatmul.mubr.bf16.gmra.mxu0 %v2588
        %v3026 = vpop.f32.mrf.mxu0
        %v3027 = vadd.f32 0.0, %v3026
        %v3028 = vpop.f32.mrf.mxu0
        %v3029 = vpop.f32.mrf.mxu0
        %v3030 = vadd.f32 0.0, %v3029
        %v3031 = vpop.f32.mrf.mxu0
        %3032 = vmatprep.mubr.bf16.mxu0 0
        %3033 = vmatmul.mubr.bf16.gmra.mxu0 %v2589
        %v3034 = vpop.f32.mrf.mxu0
        %v3035 = vadd.f32 0.0, %v3034
        %v3036 = vpop.f32.mrf.mxu0
        %v3037 = vpop.f32.mrf.mxu0
        %v3038 = vadd.f32 0.0, %v3037
        %v3039 = vpop.f32.mrf.mxu0
        %3040 = vmatprep.mubr.bf16.mxu0 0
        %3041 = vmatmul.mubr.bf16.gmra.mxu0 %v2590
        %v3042 = vpop.f32.mrf.mxu0
        %v3043 = vadd.f32 0.0, %v3042
        %v3044 = vpop.f32.mrf.mxu0
        %v3045 = vpop.f32.mrf.mxu0
        %v3046 = vadd.f32 0.0, %v3045
        %v3047 = vpop.f32.mrf.mxu0
        %3048 = vmatprep.mubr.bf16.mxu0 0
        %3049 = vmatmul.mubr.bf16.gmra.mxu0 %v2591
        %v3050 = vpop.f32.mrf.mxu0
        %v3051 = vadd.f32 0.0, %v3050
        %v3052 = vpop.f32.mrf.mxu0
        %v3053 = vpop.f32.mrf.mxu0
        %v3054 = vadd.f32 0.0, %v3053
        %v3055 = vpop.f32.mrf.mxu0
        %3056 = vmatprep.mubr.bf16.mxu0 0
        %3057 = vmatmul.mubr.bf16.gmra.mxu0 %v2592
        %v3058 = vpop.f32.mrf.mxu0
        %v3059 = vadd.f32 0.0, %v3058
        %v3060 = vpop.f32.mrf.mxu0
        %v3061 = vpop.f32.mrf.mxu0
        %v3062 = vadd.f32 0.0, %v3061
        %v3063 = vpop.f32.mrf.mxu0
        %3064 = vmatprep.mubr.bf16.mxu0 0
        %3065 = vmatmul.mubr.bf16.gmra.mxu0 %v2593
        %v3066 = vpop.f32.mrf.mxu0
        %v3067 = vadd.f32 0.0, %v3066
        %v3068 = vpop.f32.mrf.mxu0
        %v3069 = vpop.f32.mrf.mxu0
        %v3070 = vadd.f32 0.0, %v3069
        %v3071 = vpop.f32.mrf.mxu0
        %3072 = vmatprep.mubr.bf16.mxu0 0
        %3073 = vmatmul.mubr.bf16.gmra.mxu0 %v2594
        %v3074 = vpop.f32.mrf.mxu0
        %v3075 = vadd.f32 0.0, %v3074
        %v3076 = vpop.f32.mrf.mxu0
        %v3077 = vpop.f32.mrf.mxu0
        %v3078 = vadd.f32 0.0, %v3077
        %v3079 = vpop.f32.mrf.mxu0
        %3080 = vmatprep.mubr.bf16.mxu0 0
        %3081 = vmatmul.mubr.bf16.gmra.mxu0 %v2595
        %v3082 = vpop.f32.mrf.mxu0
        %v3083 = vadd.f32 0.0, %v3082
        %v3084 = vpop.f32.mrf.mxu0
        %v3085 = vpop.f32.mrf.mxu0
        %v3086 = vadd.f32 0.0, %v3085
        %v3087 = vpop.f32.mrf.mxu0
        %3088 = vdwg.mxu0
        %3089 = vmatprep.subr.bf16.mxu0 0
        %3090 = vmatpush1.bf16.msra.mxu0 %v1877
        %3091 = vmatprep.subr.bf16.mxu0 0
        %3092 = vmatpush1.bf16.msra.mxu0 %v1876
        %3093 = vmatprep.subr.bf16.mxu0 0
        %3094 = vmatpush1.bf16.msra.mxu0 %v1875
        %3095 = vmatprep.subr.bf16.mxu0 0
        %3096 = vmatpush1.bf16.msra.mxu0 %v1874
        %3097 = vmatprep.subr.bf16.mxu0 0
        %3098 = vmatpush1.bf16.msra.mxu0 %v1873
        %3099 = vmatprep.subr.bf16.mxu0 0
        %3100 = vmatpush1.bf16.msra.mxu0 %v1872
        %3101 = vmatprep.subr.bf16.mxu0 0
        %3102 = vmatpush1.bf16.msra.mxu0 %v1871
        %3103 = vmatprep.subr.bf16.mxu0 0
        %3104 = vmatpush1.bf16.msra.mxu0 %v1870
        %3105 = vmatprep.subr.bf16.mxu0 0
        %3106 = vmatpush2.bf16.msra.mxu0 0
        %3107 = vmatprep.subr.bf16.mxu0 0
        %3108 = vmatpush2.bf16.msra.mxu0 0
        %3109 = vmatprep.subr.bf16.mxu0 0
        %3110 = vmatpush2.bf16.msra.mxu0 0
        %3111 = vmatprep.subr.bf16.mxu0 0
        %3112 = vmatpush2.bf16.msra.mxu0 0
        %3113 = vmatprep.subr.bf16.mxu0 0
        %3114 = vmatpush2.bf16.msra.mxu0 0
        %3115 = vmatprep.subr.bf16.mxu0 0
        %3116 = vmatpush2.bf16.msra.mxu0 0
        %3117 = vmatprep.subr.bf16.mxu0 0
        %3118 = vmatpush2.bf16.msra.mxu0 0
        %3119 = vmatprep.subr.bf16.mxu0 0
        %3120 = vmatpush2.bf16.msra.mxu0 0
        %3121 = vmatprep.mubr.bf16.mxu0 0
        %3122 = vmatmul.mubr.bf16.gmra.mxu0 %v2596
        %v3123 = vpop.f32.mrf.mxu0
        %v3124 = vadd.f32 0.0, %v3123
        %v3125 = vpop.f32.mrf.mxu0
        %v3126 = vpop.f32.mrf.mxu0
        %v3127 = vadd.f32 0.0, %v3126
        %v3128 = vpop.f32.mrf.mxu0
        %3129 = vmatprep.mubr.bf16.mxu0 0
        %3130 = vmatmul.mubr.bf16.gmra.mxu0 %v2597
        %v3131 = vpop.f32.mrf.mxu0
        %v3132 = vadd.f32 0.0, %v3131
        %v3133 = vpop.f32.mrf.mxu0
        %v3134 = vpop.f32.mrf.mxu0
        %v3135 = vadd.f32 0.0, %v3134
        %v3136 = vpop.f32.mrf.mxu0
        %3137 = vmatprep.mubr.bf16.mxu0 0
        %3138 = vmatmul.mubr.bf16.gmra.mxu0 %v2598
        %v3139 = vpop.f32.mrf.mxu0
        %v3140 = vadd.f32 0.0, %v3139
        %v3141 = vpop.f32.mrf.mxu0
        %v3142 = vpop.f32.mrf.mxu0
        %v3143 = vadd.f32 0.0, %v3142
        %v3144 = vpop.f32.mrf.mxu0
        %3145 = vmatprep.mubr.bf16.mxu0 0
        %3146 = vmatmul.mubr.bf16.gmra.mxu0 %v2599
        %v3147 = vpop.f32.mrf.mxu0
        %v3148 = vadd.f32 0.0, %v3147
        %v3149 = vpop.f32.mrf.mxu0
        %v3150 = vpop.f32.mrf.mxu0
        %v3151 = vadd.f32 0.0, %v3150
        %v3152 = vpop.f32.mrf.mxu0
        %3153 = vmatprep.mubr.bf16.mxu0 0
        %3154 = vmatmul.mubr.bf16.gmra.mxu0 %v2600
        %v3155 = vpop.f32.mrf.mxu0
        %v3156 = vadd.f32 0.0, %v3155
        %v3157 = vpop.f32.mrf.mxu0
        %v3158 = vpop.f32.mrf.mxu0
        %v3159 = vadd.f32 0.0, %v3158
        %v3160 = vpop.f32.mrf.mxu0
        %3161 = vmatprep.mubr.bf16.mxu0 0
        %3162 = vmatmul.mubr.bf16.gmra.mxu0 %v2601
        %v3163 = vpop.f32.mrf.mxu0
        %v3164 = vadd.f32 0.0, %v3163
        %v3165 = vpop.f32.mrf.mxu0
        %v3166 = vpop.f32.mrf.mxu0
        %v3167 = vadd.f32 0.0, %v3166
        %v3168 = vpop.f32.mrf.mxu0
        %3169 = vmatprep.mubr.bf16.mxu0 0
        %3170 = vmatmul.mubr.bf16.gmra.mxu0 %v2602
        %v3171 = vpop.f32.mrf.mxu0
        %v3172 = vadd.f32 0.0, %v3171
        %v3173 = vpop.f32.mrf.mxu0
        %v3174 = vpop.f32.mrf.mxu0
        %v3175 = vadd.f32 0.0, %v3174
        %v3176 = vpop.f32.mrf.mxu0
        %3177 = vmatprep.mubr.bf16.mxu0 0
        %3178 = vmatmul.mubr.bf16.gmra.mxu0 %v2603
        %v3179 = vpop.f32.mrf.mxu0
        %v3180 = vadd.f32 0.0, %v3179
        %v3181 = vpop.f32.mrf.mxu0
        %v3182 = vpop.f32.mrf.mxu0
        %v3183 = vadd.f32 0.0, %v3182
        %v3184 = vpop.f32.mrf.mxu0
        %3185 = vdwg.mxu0
        %v3186 = vpack.c.bf16 %v2933, %v2930
        %v3187 = vpack.c.bf16 %v2941, %v2938
        %v3188 = vpack.c.bf16 %v2949, %v2946
        %v3189 = vpack.c.bf16 %v2957, %v2954
        %v3190 = vpack.c.bf16 %v2965, %v2962
        %v3191 = vpack.c.bf16 %v2973, %v2970
        %v3192 = vpack.c.bf16 %v2981, %v2978
        %v3193 = vpack.c.bf16 %v2989, %v2986
        %v3194 = vpack.c.bf16 %v3030, %v3027
        %v3195 = vpack.c.bf16 %v3038, %v3035
        %v3196 = vpack.c.bf16 %v3046, %v3043
        %v3197 = vpack.c.bf16 %v3054, %v3051
        %v3198 = vpack.c.bf16 %v3062, %v3059
        %v3199 = vpack.c.bf16 %v3070, %v3067
        %v3200 = vpack.c.bf16 %v3078, %v3075
        %v3201 = vpack.c.bf16 %v3086, %v3083
        %v3202 = vpack.c.bf16 %v3127, %v3124
        %v3203 = vpack.c.bf16 %v3135, %v3132
        %v3204 = vpack.c.bf16 %v3143, %v3140
        %v3205 = vpack.c.bf16 %v3151, %v3148
        %v3206 = vpack.c.bf16 %v3159, %v3156
        %v3207 = vpack.c.bf16 %v3167, %v3164
        %v3208 = vpack.c.bf16 %v3175, %v3172
        %v3209 = vpack.c.bf16 %v3183, %v3180
        %v3210 = vpack.c.bf16 %v2642, %v2639
        %v3211 = vpack.c.bf16 %v2650, %v2647
        %v3212 = vpack.c.bf16 %v2658, %v2655
        %v3213 = vpack.c.bf16 %v2666, %v2663
        %v3214 = vpack.c.bf16 %v2674, %v2671
        %v3215 = vpack.c.bf16 %v2682, %v2679
        %v3216 = vpack.c.bf16 %v2690, %v2687
        %v3217 = vpack.c.bf16 %v2698, %v2695
        %v3218 = vpack.c.bf16 %v2739, %v2736
        %v3219 = vpack.c.bf16 %v2747, %v2744
        %v3220 = vpack.c.bf16 %v2755, %v2752
        %v3221 = vpack.c.bf16 %v2763, %v2760
        %v3222 = vpack.c.bf16 %v2771, %v2768
        %v3223 = vpack.c.bf16 %v2779, %v2776
        %v3224 = vpack.c.bf16 %v2787, %v2784
        %v3225 = vpack.c.bf16 %v2795, %v2792
        %v3226 = vpack.c.bf16 %v2836, %v2833
        %v3227 = vpack.c.bf16 %v2844, %v2841
        %v3228 = vpack.c.bf16 %v2852, %v2849
        %v3229 = vpack.c.bf16 %v2860, %v2857
        %v3230 = vpack.c.bf16 %v2868, %v2865
        %v3231 = vpack.c.bf16 %v2876, %v2873
        %v3232 = vpack.c.bf16 %v2884, %v2881
        %v3233 = vpack.c.bf16 %v2892, %v2889
        %3234 = vmatprep.subr.bf16.mxu0 0
        %3235 = vmatpush1.bf16.msra.mxu0 %v3217
        %3236 = vmatprep.subr.bf16.mxu0 0
        %3237 = vmatpush1.bf16.msra.mxu0 %v3216
        %3238 = vmatprep.subr.bf16.mxu0 0
        %3239 = vmatpush1.bf16.msra.mxu0 %v3215
        %3240 = vmatprep.subr.bf16.mxu0 0
        %3241 = vmatpush1.bf16.msra.mxu0 %v3214
        %3242 = vmatprep.subr.bf16.mxu0 0
        %3243 = vmatpush1.bf16.msra.mxu0 %v3213
        %3244 = vmatprep.subr.bf16.mxu0 0
        %3245 = vmatpush1.bf16.msra.mxu0 %v3212
        %3246 = vmatprep.subr.bf16.mxu0 0
        %3247 = vmatpush1.bf16.msra.mxu0 %v3211
        %3248 = vmatprep.subr.bf16.mxu0 0
        %3249 = vmatpush1.bf16.msra.mxu0 %v3210
        %3250 = vmatprep.subr.bf16.mxu0 0
        %3251 = vmatpush2.bf16.msra.mxu0 0
        %3252 = vmatprep.subr.bf16.mxu0 0
        %3253 = vmatpush2.bf16.msra.mxu0 0
        %3254 = vmatprep.subr.bf16.mxu0 0
        %3255 = vmatpush2.bf16.msra.mxu0 0
        %3256 = vmatprep.subr.bf16.mxu0 0
        %3257 = vmatpush2.bf16.msra.mxu0 0
        %3258 = vmatprep.subr.bf16.mxu0 0
        %3259 = vmatpush2.bf16.msra.mxu0 0
        %3260 = vmatprep.subr.bf16.mxu0 0
        %3261 = vmatpush2.bf16.msra.mxu0 0
        %3262 = vmatprep.subr.bf16.mxu0 0
        %3263 = vmatpush2.bf16.msra.mxu0 0
        %3264 = vmatprep.subr.bf16.mxu0 0
        %3265 = vmatpush2.bf16.msra.mxu0 0
        %3266 = vmatprep.mubr.bf16.mxu0 0
        %3267 = vmatmul.mubr.bf16.gmra.mxu0 %v3186
        %v3268 = vpop.f32.mrf.mxu0
        %v3269 = vadd.f32 0.0, %v3268
        %v3270 = vpop.f32.mrf.mxu0
        %v3271 = vpop.f32.mrf.mxu0
        %v3272 = vadd.f32 0.0, %v3271
        %v3273 = vpop.f32.mrf.mxu0
        %3274 = vmatprep.mubr.bf16.mxu0 0
        %3275 = vmatmul.mubr.bf16.gmra.mxu0 %v3187
        %v3276 = vpop.f32.mrf.mxu0
        %v3277 = vadd.f32 0.0, %v3276
        %v3278 = vpop.f32.mrf.mxu0
        %v3279 = vpop.f32.mrf.mxu0
        %v3280 = vadd.f32 0.0, %v3279
        %v3281 = vpop.f32.mrf.mxu0
        %3282 = vmatprep.mubr.bf16.mxu0 0
        %3283 = vmatmul.mubr.bf16.gmra.mxu0 %v3188
        %v3284 = vpop.f32.mrf.mxu0
        %v3285 = vadd.f32 0.0, %v3284
        %v3286 = vpop.f32.mrf.mxu0
        %v3287 = vpop.f32.mrf.mxu0
        %v3288 = vadd.f32 0.0, %v3287
        %v3289 = vpop.f32.mrf.mxu0
        %3290 = vmatprep.mubr.bf16.mxu0 0
        %3291 = vmatmul.mubr.bf16.gmra.mxu0 %v3189
        %v3292 = vpop.f32.mrf.mxu0
        %v3293 = vadd.f32 0.0, %v3292
        %v3294 = vpop.f32.mrf.mxu0
        %v3295 = vpop.f32.mrf.mxu0
        %v3296 = vadd.f32 0.0, %v3295
        %v3297 = vpop.f32.mrf.mxu0
        %3298 = vmatprep.mubr.bf16.mxu0 0
        %3299 = vmatmul.mubr.bf16.gmra.mxu0 %v3190
        %v3300 = vpop.f32.mrf.mxu0
        %v3301 = vadd.f32 0.0, %v3300
        %v3302 = vpop.f32.mrf.mxu0
        %v3303 = vpop.f32.mrf.mxu0
        %v3304 = vadd.f32 0.0, %v3303
        %v3305 = vpop.f32.mrf.mxu0
        %3306 = vmatprep.mubr.bf16.mxu0 0
        %3307 = vmatmul.mubr.bf16.gmra.mxu0 %v3191
        %v3308 = vpop.f32.mrf.mxu0
        %v3309 = vadd.f32 0.0, %v3308
        %v3310 = vpop.f32.mrf.mxu0
        %v3311 = vpop.f32.mrf.mxu0
        %v3312 = vadd.f32 0.0, %v3311
        %v3313 = vpop.f32.mrf.mxu0
        %3314 = vmatprep.mubr.bf16.mxu0 0
        %3315 = vmatmul.mubr.bf16.gmra.mxu0 %v3192
        %v3316 = vpop.f32.mrf.mxu0
        %v3317 = vadd.f32 0.0, %v3316
        %v3318 = vpop.f32.mrf.mxu0
        %v3319 = vpop.f32.mrf.mxu0
        %v3320 = vadd.f32 0.0, %v3319
        %v3321 = vpop.f32.mrf.mxu0
        %3322 = vmatprep.mubr.bf16.mxu0 0
        %3323 = vmatmul.mubr.bf16.gmra.mxu0 %v3193
        %v3324 = vpop.f32.mrf.mxu0
        %v3325 = vadd.f32 0.0, %v3324
        %v3326 = vpop.f32.mrf.mxu0
        %v3327 = vpop.f32.mrf.mxu0
        %v3328 = vadd.f32 0.0, %v3327
        %v3329 = vpop.f32.mrf.mxu0
        %3330 = vdwg.mxu0
        %3331 = vmatprep.subr.bf16.mxu0 0
        %3332 = vmatpush1.bf16.msra.mxu0 %v3225
        %3333 = vmatprep.subr.bf16.mxu0 0
        %3334 = vmatpush1.bf16.msra.mxu0 %v3224
        %3335 = vmatprep.subr.bf16.mxu0 0
        %3336 = vmatpush1.bf16.msra.mxu0 %v3223
        %3337 = vmatprep.subr.bf16.mxu0 0
        %3338 = vmatpush1.bf16.msra.mxu0 %v3222
        %3339 = vmatprep.subr.bf16.mxu0 0
        %3340 = vmatpush1.bf16.msra.mxu0 %v3221
        %3341 = vmatprep.subr.bf16.mxu0 0
        %3342 = vmatpush1.bf16.msra.mxu0 %v3220
        %3343 = vmatprep.subr.bf16.mxu0 0
        %3344 = vmatpush1.bf16.msra.mxu0 %v3219
        %3345 = vmatprep.subr.bf16.mxu0 0
        %3346 = vmatpush1.bf16.msra.mxu0 %v3218
        %3347 = vmatprep.subr.bf16.mxu0 0
        %3348 = vmatpush2.bf16.msra.mxu0 0
        %3349 = vmatprep.subr.bf16.mxu0 0
        %3350 = vmatpush2.bf16.msra.mxu0 0
        %3351 = vmatprep.subr.bf16.mxu0 0
        %3352 = vmatpush2.bf16.msra.mxu0 0
        %3353 = vmatprep.subr.bf16.mxu0 0
        %3354 = vmatpush2.bf16.msra.mxu0 0
        %3355 = vmatprep.subr.bf16.mxu0 0
        %3356 = vmatpush2.bf16.msra.mxu0 0
        %3357 = vmatprep.subr.bf16.mxu0 0
        %3358 = vmatpush2.bf16.msra.mxu0 0
        %3359 = vmatprep.subr.bf16.mxu0 0
        %3360 = vmatpush2.bf16.msra.mxu0 0
        %3361 = vmatprep.subr.bf16.mxu0 0
        %3362 = vmatpush2.bf16.msra.mxu0 0
        %3363 = vmatprep.mubr.bf16.mxu0 0
        %3364 = vmatmul.mubr.bf16.gmra.mxu0 %v3194
        %v3365 = vpop.f32.mrf.mxu0
        %v3366 = vadd.f32 0.0, %v3365
        %v3367 = vpop.f32.mrf.mxu0
        %v3368 = vpop.f32.mrf.mxu0
        %v3369 = vadd.f32 0.0, %v3368
        %v3370 = vpop.f32.mrf.mxu0
        %3371 = vmatprep.mubr.bf16.mxu0 0
        %3372 = vmatmul.mubr.bf16.gmra.mxu0 %v3195
        %v3373 = vpop.f32.mrf.mxu0
        %v3374 = vadd.f32 0.0, %v3373
        %v3375 = vpop.f32.mrf.mxu0
        %v3376 = vpop.f32.mrf.mxu0
        %v3377 = vadd.f32 0.0, %v3376
        %v3378 = vpop.f32.mrf.mxu0
        %3379 = vmatprep.mubr.bf16.mxu0 0
        %3380 = vmatmul.mubr.bf16.gmra.mxu0 %v3196
        %v3381 = vpop.f32.mrf.mxu0
        %v3382 = vadd.f32 0.0, %v3381
        %v3383 = vpop.f32.mrf.mxu0
        %v3384 = vpop.f32.mrf.mxu0
        %v3385 = vadd.f32 0.0, %v3384
        %v3386 = vpop.f32.mrf.mxu0
        %3387 = vmatprep.mubr.bf16.mxu0 0
        %3388 = vmatmul.mubr.bf16.gmra.mxu0 %v3197
        %v3389 = vpop.f32.mrf.mxu0
        %v3390 = vadd.f32 0.0, %v3389
        %v3391 = vpop.f32.mrf.mxu0
        %v3392 = vpop.f32.mrf.mxu0
        %v3393 = vadd.f32 0.0, %v3392
        %v3394 = vpop.f32.mrf.mxu0
        %3395 = vmatprep.mubr.bf16.mxu0 0
        %3396 = vmatmul.mubr.bf16.gmra.mxu0 %v3198
        %v3397 = vpop.f32.mrf.mxu0
        %v3398 = vadd.f32 0.0, %v3397
        %v3399 = vpop.f32.mrf.mxu0
        %v3400 = vpop.f32.mrf.mxu0
        %v3401 = vadd.f32 0.0, %v3400
        %v3402 = vpop.f32.mrf.mxu0
        %3403 = vmatprep.mubr.bf16.mxu0 0
        %3404 = vmatmul.mubr.bf16.gmra.mxu0 %v3199
        %v3405 = vpop.f32.mrf.mxu0
        %v3406 = vadd.f32 0.0, %v3405
        %v3407 = vpop.f32.mrf.mxu0
        %v3408 = vpop.f32.mrf.mxu0
        %v3409 = vadd.f32 0.0, %v3408
        %v3410 = vpop.f32.mrf.mxu0
        %3411 = vmatprep.mubr.bf16.mxu0 0
        %3412 = vmatmul.mubr.bf16.gmra.mxu0 %v3200
        %v3413 = vpop.f32.mrf.mxu0
        %v3414 = vadd.f32 0.0, %v3413
        %v3415 = vpop.f32.mrf.mxu0
        %v3416 = vpop.f32.mrf.mxu0
        %v3417 = vadd.f32 0.0, %v3416
        %v3418 = vpop.f32.mrf.mxu0
        %3419 = vmatprep.mubr.bf16.mxu0 0
        %3420 = vmatmul.mubr.bf16.gmra.mxu0 %v3201
        %v3421 = vpop.f32.mrf.mxu0
        %v3422 = vadd.f32 0.0, %v3421
        %v3423 = vpop.f32.mrf.mxu0
        %v3424 = vpop.f32.mrf.mxu0
        %v3425 = vadd.f32 0.0, %v3424
        %v3426 = vpop.f32.mrf.mxu0
        %3427 = vdwg.mxu0
        %3428 = vmatprep.subr.bf16.mxu0 0
        %3429 = vmatpush1.bf16.msra.mxu0 %v3233
        %3430 = vmatprep.subr.bf16.mxu0 0
        %3431 = vmatpush1.bf16.msra.mxu0 %v3232
        %3432 = vmatprep.subr.bf16.mxu0 0
        %3433 = vmatpush1.bf16.msra.mxu0 %v3231
        %3434 = vmatprep.subr.bf16.mxu0 0
        %3435 = vmatpush1.bf16.msra.mxu0 %v3230
        %3436 = vmatprep.subr.bf16.mxu0 0
        %3437 = vmatpush1.bf16.msra.mxu0 %v3229
        %3438 = vmatprep.subr.bf16.mxu0 0
        %3439 = vmatpush1.bf16.msra.mxu0 %v3228
        %3440 = vmatprep.subr.bf16.mxu0 0
        %3441 = vmatpush1.bf16.msra.mxu0 %v3227
        %3442 = vmatprep.subr.bf16.mxu0 0
        %3443 = vmatpush1.bf16.msra.mxu0 %v3226
        %3444 = vmatprep.subr.bf16.mxu0 0
        %3445 = vmatpush2.bf16.msra.mxu0 0
        %3446 = vmatprep.subr.bf16.mxu0 0
        %3447 = vmatpush2.bf16.msra.mxu0 0
        %3448 = vmatprep.subr.bf16.mxu0 0
        %3449 = vmatpush2.bf16.msra.mxu0 0
        %3450 = vmatprep.subr.bf16.mxu0 0
        %3451 = vmatpush2.bf16.msra.mxu0 0
        %3452 = vmatprep.subr.bf16.mxu0 0
        %3453 = vmatpush2.bf16.msra.mxu0 0
        %3454 = vmatprep.subr.bf16.mxu0 0
        %3455 = vmatpush2.bf16.msra.mxu0 0
        %3456 = vmatprep.subr.bf16.mxu0 0
        %3457 = vmatpush2.bf16.msra.mxu0 0
        %3458 = vmatprep.subr.bf16.mxu0 0
        %3459 = vmatpush2.bf16.msra.mxu0 0
        %3460 = vmatprep.mubr.bf16.mxu0 0
        %3461 = vmatmul.mubr.bf16.gmra.mxu0 %v3202
        %v3462 = vpop.f32.mrf.mxu0
        %v3463 = vadd.f32 0.0, %v3462
        %v3464 = vpop.f32.mrf.mxu0
        %v3465 = vpop.f32.mrf.mxu0
        %v3466 = vadd.f32 0.0, %v3465
        %v3467 = vpop.f32.mrf.mxu0
        %3468 = vmatprep.mubr.bf16.mxu0 0
        %3469 = vmatmul.mubr.bf16.gmra.mxu0 %v3203
        %v3470 = vpop.f32.mrf.mxu0
        %v3471 = vadd.f32 0.0, %v3470
        %v3472 = vpop.f32.mrf.mxu0
        %v3473 = vpop.f32.mrf.mxu0
        %v3474 = vadd.f32 0.0, %v3473
        %v3475 = vpop.f32.mrf.mxu0
        %3476 = vmatprep.mubr.bf16.mxu0 0
        %3477 = vmatmul.mubr.bf16.gmra.mxu0 %v3204
        %v3478 = vpop.f32.mrf.mxu0
        %v3479 = vadd.f32 0.0, %v3478
        %v3480 = vpop.f32.mrf.mxu0
        %v3481 = vpop.f32.mrf.mxu0
        %v3482 = vadd.f32 0.0, %v3481
        %v3483 = vpop.f32.mrf.mxu0
        %3484 = vmatprep.mubr.bf16.mxu0 0
        %3485 = vmatmul.mubr.bf16.gmra.mxu0 %v3205
        %v3486 = vpop.f32.mrf.mxu0
        %v3487 = vadd.f32 0.0, %v3486
        %v3488 = vpop.f32.mrf.mxu0
        %v3489 = vpop.f32.mrf.mxu0
        %v3490 = vadd.f32 0.0, %v3489
        %v3491 = vpop.f32.mrf.mxu0
        %3492 = vmatprep.mubr.bf16.mxu0 0
        %3493 = vmatmul.mubr.bf16.gmra.mxu0 %v3206
        %v3494 = vpop.f32.mrf.mxu0
        %v3495 = vadd.f32 0.0, %v3494
        %v3496 = vpop.f32.mrf.mxu0
        %v3497 = vpop.f32.mrf.mxu0
        %v3498 = vadd.f32 0.0, %v3497
        %v3499 = vpop.f32.mrf.mxu0
        %3500 = vmatprep.mubr.bf16.mxu0 0
        %3501 = vmatmul.mubr.bf16.gmra.mxu0 %v3207
        %v3502 = vpop.f32.mrf.mxu0
        %v3503 = vadd.f32 0.0, %v3502
        %v3504 = vpop.f32.mrf.mxu0
        %v3505 = vpop.f32.mrf.mxu0
        %v3506 = vadd.f32 0.0, %v3505
        %v3507 = vpop.f32.mrf.mxu0
        %3508 = vmatprep.mubr.bf16.mxu0 0
        %3509 = vmatmul.mubr.bf16.gmra.mxu0 %v3208
        %v3510 = vpop.f32.mrf.mxu0
        %v3511 = vadd.f32 0.0, %v3510
        %v3512 = vpop.f32.mrf.mxu0
        %v3513 = vpop.f32.mrf.mxu0
        %v3514 = vadd.f32 0.0, %v3513
        %v3515 = vpop.f32.mrf.mxu0
        %3516 = vmatprep.mubr.bf16.mxu0 0
        %3517 = vmatmul.mubr.bf16.gmra.mxu0 %v3209
        %v3518 = vpop.f32.mrf.mxu0
        %v3519 = vadd.f32 0.0, %v3518
        %v3520 = vpop.f32.mrf.mxu0
        %v3521 = vpop.f32.mrf.mxu0
        %v3522 = vadd.f32 0.0, %v3521
        %v3523 = vpop.f32.mrf.mxu0
        %3524 = vdwg.mxu0
        %v3525 = vsub.f32 %v1718, %v3269
        %v3526 = vsub.f32 %v1719, %v3272
        %v3527 = vsub.f32 %v1720, %v3277
        %v3528 = vsub.f32 %v1721, %v3280
        %v3529 = vsub.f32 %v1722, %v3285
        %v3530 = vsub.f32 %v1723, %v3288
        %v3531 = vsub.f32 %v1724, %v3293
        %v3532 = vsub.f32 %v1725, %v3296
        %v3533 = vsub.f32 %v1726, %v3301
        %v3534 = vsub.f32 %v1727, %v3304
        %v3535 = vsub.f32 %v1728, %v3309
        %v3536 = vsub.f32 %v1729, %v3312
        %v3537 = vsub.f32 %v1730, %v3317
        %v3538 = vsub.f32 %v1731, %v3320
        %v3539 = vsub.f32 %v1732, %v3325
        %v3540 = vsub.f32 %v1733, %v3328
        %v3541 = vsub.f32 %v1718, %v3366
        %v3542 = vsub.f32 %v1719, %v3369
        %v3543 = vsub.f32 %v1720, %v3374
        %v3544 = vsub.f32 %v1721, %v3377
        %v3545 = vsub.f32 %v1722, %v3382
        %v3546 = vsub.f32 %v1723, %v3385
        %v3547 = vsub.f32 %v1724, %v3390
        %v3548 = vsub.f32 %v1725, %v3393
        %v3549 = vsub.f32 %v1726, %v3398
        %v3550 = vsub.f32 %v1727, %v3401
        %v3551 = vsub.f32 %v1728, %v3406
        %v3552 = vsub.f32 %v1729, %v3409
        %v3553 = vsub.f32 %v1730, %v3414
        %v3554 = vsub.f32 %v1731, %v3417
        %v3555 = vsub.f32 %v1732, %v3422
        %v3556 = vsub.f32 %v1733, %v3425
        %v3557 = vsub.f32 %v1718, %v3463
        %v3558 = vsub.f32 %v1719, %v3466
        %v3559 = vsub.f32 %v1720, %v3471
        %v3560 = vsub.f32 %v1721, %v3474
        %v3561 = vsub.f32 %v1722, %v3479
        %v3562 = vsub.f32 %v1723, %v3482
        %v3563 = vsub.f32 %v1724, %v3487
        %v3564 = vsub.f32 %v1725, %v3490
        %v3565 = vsub.f32 %v1726, %v3495
        %v3566 = vsub.f32 %v1727, %v3498
        %v3567 = vsub.f32 %v1728, %v3503
        %v3568 = vsub.f32 %v1729, %v3506
        %v3569 = vsub.f32 %v1730, %v3511
        %v3570 = vsub.f32 %v1731, %v3514
        %v3571 = vsub.f32 %v1732, %v3519
        %v3572 = vsub.f32 %v1733, %v3522
        %v3573 = vpack.c.bf16 %v3526, %v3525
        %v3574 = vpack.c.bf16 %v3528, %v3527
        %v3575 = vpack.c.bf16 %v3530, %v3529
        %v3576 = vpack.c.bf16 %v3532, %v3531
        %v3577 = vpack.c.bf16 %v3534, %v3533
        %v3578 = vpack.c.bf16 %v3536, %v3535
        %v3579 = vpack.c.bf16 %v3538, %v3537
        %v3580 = vpack.c.bf16 %v3540, %v3539
        %v3581 = vpack.c.bf16 %v3542, %v3541
        %v3582 = vpack.c.bf16 %v3544, %v3543
        %v3583 = vpack.c.bf16 %v3546, %v3545
        %v3584 = vpack.c.bf16 %v3548, %v3547
        %v3585 = vpack.c.bf16 %v3550, %v3549
        %v3586 = vpack.c.bf16 %v3552, %v3551
        %v3587 = vpack.c.bf16 %v3554, %v3553
        %v3588 = vpack.c.bf16 %v3556, %v3555
        %v3589 = vpack.c.bf16 %v3558, %v3557
        %v3590 = vpack.c.bf16 %v3560, %v3559
        %v3591 = vpack.c.bf16 %v3562, %v3561
        %v3592 = vpack.c.bf16 %v3564, %v3563
        %v3593 = vpack.c.bf16 %v3566, %v3565
        %v3594 = vpack.c.bf16 %v3568, %v3567
        %v3595 = vpack.c.bf16 %v3570, %v3569
        %v3596 = vpack.c.bf16 %v3572, %v3571
        %3597 = vmatprep.subr.bf16.mxu0 0
        %3598 = vmatpush1.bf16.msra.mxu0 %v3580
        %3599 = vmatprep.subr.bf16.mxu0 0
        %3600 = vmatpush1.bf16.msra.mxu0 %v3579
        %3601 = vmatprep.subr.bf16.mxu0 0
        %3602 = vmatpush1.bf16.msra.mxu0 %v3578
        %3603 = vmatprep.subr.bf16.mxu0 0
        %3604 = vmatpush1.bf16.msra.mxu0 %v3577
        %3605 = vmatprep.subr.bf16.mxu0 0
        %3606 = vmatpush1.bf16.msra.mxu0 %v3576
        %3607 = vmatprep.subr.bf16.mxu0 0
        %3608 = vmatpush1.bf16.msra.mxu0 %v3575
        %3609 = vmatprep.subr.bf16.mxu0 0
        %3610 = vmatpush1.bf16.msra.mxu0 %v3574
        %3611 = vmatprep.subr.bf16.mxu0 0
        %3612 = vmatpush1.bf16.msra.mxu0 %v3573
        %3613 = vmatprep.subr.bf16.mxu0 0
        %3614 = vmatpush2.bf16.msra.mxu0 0
        %3615 = vmatprep.subr.bf16.mxu0 0
        %3616 = vmatpush2.bf16.msra.mxu0 0
        %3617 = vmatprep.subr.bf16.mxu0 0
        %3618 = vmatpush2.bf16.msra.mxu0 0
        %3619 = vmatprep.subr.bf16.mxu0 0
        %3620 = vmatpush2.bf16.msra.mxu0 0
        %3621 = vmatprep.subr.bf16.mxu0 0
        %3622 = vmatpush2.bf16.msra.mxu0 0
        %3623 = vmatprep.subr.bf16.mxu0 0
        %3624 = vmatpush2.bf16.msra.mxu0 0
        %3625 = vmatprep.subr.bf16.mxu0 0
        %3626 = vmatpush2.bf16.msra.mxu0 0
        %3627 = vmatprep.subr.bf16.mxu0 0
        %3628 = vmatpush2.bf16.msra.mxu0 0
        %3629 = vmatprep.mubr.bf16.mxu0 0
        %3630 = vmatmul.mubr.bf16.gmra.mxu0 %v3210
        %v3631 = vpop.f32.mrf.mxu0
        %v3632 = vadd.f32 0.0, %v3631
        %v3633 = vpop.f32.mrf.mxu0
        %v3634 = vpop.f32.mrf.mxu0
        %v3635 = vadd.f32 0.0, %v3634
        %v3636 = vpop.f32.mrf.mxu0
        %3637 = vmatprep.mubr.bf16.mxu0 0
        %3638 = vmatmul.mubr.bf16.gmra.mxu0 %v3211
        %v3639 = vpop.f32.mrf.mxu0
        %v3640 = vadd.f32 0.0, %v3639
        %v3641 = vpop.f32.mrf.mxu0
        %v3642 = vpop.f32.mrf.mxu0
        %v3643 = vadd.f32 0.0, %v3642
        %v3644 = vpop.f32.mrf.mxu0
        %3645 = vmatprep.mubr.bf16.mxu0 0
        %3646 = vmatmul.mubr.bf16.gmra.mxu0 %v3212
        %v3647 = vpop.f32.mrf.mxu0
        %v3648 = vadd.f32 0.0, %v3647
        %v3649 = vpop.f32.mrf.mxu0
        %v3650 = vpop.f32.mrf.mxu0
        %v3651 = vadd.f32 0.0, %v3650
        %v3652 = vpop.f32.mrf.mxu0
        %3653 = vmatprep.mubr.bf16.mxu0 0
        %3654 = vmatmul.mubr.bf16.gmra.mxu0 %v3213
        %v3655 = vpop.f32.mrf.mxu0
        %v3656 = vadd.f32 0.0, %v3655
        %v3657 = vpop.f32.mrf.mxu0
        %v3658 = vpop.f32.mrf.mxu0
        %v3659 = vadd.f32 0.0, %v3658
        %v3660 = vpop.f32.mrf.mxu0
        %3661 = vmatprep.mubr.bf16.mxu0 0
        %3662 = vmatmul.mubr.bf16.gmra.mxu0 %v3214
        %v3663 = vpop.f32.mrf.mxu0
        %v3664 = vadd.f32 0.0, %v3663
        %v3665 = vpop.f32.mrf.mxu0
        %v3666 = vpop.f32.mrf.mxu0
        %v3667 = vadd.f32 0.0, %v3666
        %v3668 = vpop.f32.mrf.mxu0
        %3669 = vmatprep.mubr.bf16.mxu0 0
        %3670 = vmatmul.mubr.bf16.gmra.mxu0 %v3215
        %v3671 = vpop.f32.mrf.mxu0
        %v3672 = vadd.f32 0.0, %v3671
        %v3673 = vpop.f32.mrf.mxu0
        %v3674 = vpop.f32.mrf.mxu0
        %v3675 = vadd.f32 0.0, %v3674
        %v3676 = vpop.f32.mrf.mxu0
        %3677 = vmatprep.mubr.bf16.mxu0 0
        %3678 = vmatmul.mubr.bf16.gmra.mxu0 %v3216
        %v3679 = vpop.f32.mrf.mxu0
        %v3680 = vadd.f32 0.0, %v3679
        %v3681 = vpop.f32.mrf.mxu0
        %v3682 = vpop.f32.mrf.mxu0
        %v3683 = vadd.f32 0.0, %v3682
        %v3684 = vpop.f32.mrf.mxu0
        %3685 = vmatprep.mubr.bf16.mxu0 0
        %3686 = vmatmul.mubr.bf16.gmra.mxu0 %v3217
        %v3687 = vpop.f32.mrf.mxu0
        %v3688 = vadd.f32 0.0, %v3687
        %v3689 = vpop.f32.mrf.mxu0
        %v3690 = vpop.f32.mrf.mxu0
        %v3691 = vadd.f32 0.0, %v3690
        %v3692 = vpop.f32.mrf.mxu0
        %3693 = vdwg.mxu0
        %3694 = vmatprep.subr.bf16.mxu0 0
        %3695 = vmatpush1.bf16.msra.mxu0 %v3588
        %3696 = vmatprep.subr.bf16.mxu0 0
        %3697 = vmatpush1.bf16.msra.mxu0 %v3587
        %3698 = vmatprep.subr.bf16.mxu0 0
        %3699 = vmatpush1.bf16.msra.mxu0 %v3586
        %3700 = vmatprep.subr.bf16.mxu0 0
        %3701 = vmatpush1.bf16.msra.mxu0 %v3585
        %3702 = vmatprep.subr.bf16.mxu0 0
        %3703 = vmatpush1.bf16.msra.mxu0 %v3584
        %3704 = vmatprep.subr.bf16.mxu0 0
        %3705 = vmatpush1.bf16.msra.mxu0 %v3583
        %3706 = vmatprep.subr.bf16.mxu0 0
        %3707 = vmatpush1.bf16.msra.mxu0 %v3582
        %3708 = vmatprep.subr.bf16.mxu0 0
        %3709 = vmatpush1.bf16.msra.mxu0 %v3581
        %3710 = vmatprep.subr.bf16.mxu0 0
        %3711 = vmatpush2.bf16.msra.mxu0 0
        %3712 = vmatprep.subr.bf16.mxu0 0
        %3713 = vmatpush2.bf16.msra.mxu0 0
        %3714 = vmatprep.subr.bf16.mxu0 0
        %3715 = vmatpush2.bf16.msra.mxu0 0
        %3716 = vmatprep.subr.bf16.mxu0 0
        %3717 = vmatpush2.bf16.msra.mxu0 0
        %3718 = vmatprep.subr.bf16.mxu0 0
        %3719 = vmatpush2.bf16.msra.mxu0 0
        %3720 = vmatprep.subr.bf16.mxu0 0
        %3721 = vmatpush2.bf16.msra.mxu0 0
        %3722 = vmatprep.subr.bf16.mxu0 0
        %3723 = vmatpush2.bf16.msra.mxu0 0
        %3724 = vmatprep.subr.bf16.mxu0 0
        %3725 = vmatpush2.bf16.msra.mxu0 0
        %3726 = vmatprep.mubr.bf16.mxu0 0
        %3727 = vmatmul.mubr.bf16.gmra.mxu0 %v3218
        %v3728 = vpop.f32.mrf.mxu0
        %v3729 = vadd.f32 0.0, %v3728
        %v3730 = vpop.f32.mrf.mxu0
        %v3731 = vpop.f32.mrf.mxu0
        %v3732 = vadd.f32 0.0, %v3731
        %v3733 = vpop.f32.mrf.mxu0
        %3734 = vmatprep.mubr.bf16.mxu0 0
        %3735 = vmatmul.mubr.bf16.gmra.mxu0 %v3219
        %v3736 = vpop.f32.mrf.mxu0
        %v3737 = vadd.f32 0.0, %v3736
        %v3738 = vpop.f32.mrf.mxu0
        %v3739 = vpop.f32.mrf.mxu0
        %v3740 = vadd.f32 0.0, %v3739
        %v3741 = vpop.f32.mrf.mxu0
        %3742 = vmatprep.mubr.bf16.mxu0 0
        %3743 = vmatmul.mubr.bf16.gmra.mxu0 %v3220
        %v3744 = vpop.f32.mrf.mxu0
        %v3745 = vadd.f32 0.0, %v3744
        %v3746 = vpop.f32.mrf.mxu0
        %v3747 = vpop.f32.mrf.mxu0
        %v3748 = vadd.f32 0.0, %v3747
        %v3749 = vpop.f32.mrf.mxu0
        %3750 = vmatprep.mubr.bf16.mxu0 0
        %3751 = vmatmul.mubr.bf16.gmra.mxu0 %v3221
        %v3752 = vpop.f32.mrf.mxu0
        %v3753 = vadd.f32 0.0, %v3752
        %v3754 = vpop.f32.mrf.mxu0
        %v3755 = vpop.f32.mrf.mxu0
        %v3756 = vadd.f32 0.0, %v3755
        %v3757 = vpop.f32.mrf.mxu0
        %3758 = vmatprep.mubr.bf16.mxu0 0
        %3759 = vmatmul.mubr.bf16.gmra.mxu0 %v3222
        %v3760 = vpop.f32.mrf.mxu0
        %v3761 = vadd.f32 0.0, %v3760
        %v3762 = vpop.f32.mrf.mxu0
        %v3763 = vpop.f32.mrf.mxu0
        %v3764 = vadd.f32 0.0, %v3763
        %v3765 = vpop.f32.mrf.mxu0
        %3766 = vmatprep.mubr.bf16.mxu0 0
        %3767 = vmatmul.mubr.bf16.gmra.mxu0 %v3223
        %v3768 = vpop.f32.mrf.mxu0
        %v3769 = vadd.f32 0.0, %v3768
        %v3770 = vpop.f32.mrf.mxu0
        %v3771 = vpop.f32.mrf.mxu0
        %v3772 = vadd.f32 0.0, %v3771
        %v3773 = vpop.f32.mrf.mxu0
        %3774 = vmatprep.mubr.bf16.mxu0 0
        %3775 = vmatmul.mubr.bf16.gmra.mxu0 %v3224
        %v3776 = vpop.f32.mrf.mxu0
        %v3777 = vadd.f32 0.0, %v3776
        %v3778 = vpop.f32.mrf.mxu0
        %v3779 = vpop.f32.mrf.mxu0
        %v3780 = vadd.f32 0.0, %v3779
        %v3781 = vpop.f32.mrf.mxu0
        %3782 = vmatprep.mubr.bf16.mxu0 0
        %3783 = vmatmul.mubr.bf16.gmra.mxu0 %v3225
        %v3784 = vpop.f32.mrf.mxu0
        %v3785 = vadd.f32 0.0, %v3784
        %v3786 = vpop.f32.mrf.mxu0
        %v3787 = vpop.f32.mrf.mxu0
        %v3788 = vadd.f32 0.0, %v3787
        %v3789 = vpop.f32.mrf.mxu0
        %3790 = vdwg.mxu0
        %3791 = vmatprep.subr.bf16.mxu0 0
        %3792 = vmatpush1.bf16.msra.mxu0 %v3596
        %3793 = vmatprep.subr.bf16.mxu0 0
        %3794 = vmatpush1.bf16.msra.mxu0 %v3595
        %3795 = vmatprep.subr.bf16.mxu0 0
        %3796 = vmatpush1.bf16.msra.mxu0 %v3594
        %3797 = vmatprep.subr.bf16.mxu0 0
        %3798 = vmatpush1.bf16.msra.mxu0 %v3593
        %3799 = vmatprep.subr.bf16.mxu0 0
        %3800 = vmatpush1.bf16.msra.mxu0 %v3592
        %3801 = vmatprep.subr.bf16.mxu0 0
        %3802 = vmatpush1.bf16.msra.mxu0 %v3591
        %3803 = vmatprep.subr.bf16.mxu0 0
        %3804 = vmatpush1.bf16.msra.mxu0 %v3590
        %3805 = vmatprep.subr.bf16.mxu0 0
        %3806 = vmatpush1.bf16.msra.mxu0 %v3589
        %3807 = vmatprep.subr.bf16.mxu0 0
        %3808 = vmatpush2.bf16.msra.mxu0 0
        %3809 = vmatprep.subr.bf16.mxu0 0
        %3810 = vmatpush2.bf16.msra.mxu0 0
        %3811 = vmatprep.subr.bf16.mxu0 0
        %3812 = vmatpush2.bf16.msra.mxu0 0
        %3813 = vmatprep.subr.bf16.mxu0 0
        %3814 = vmatpush2.bf16.msra.mxu0 0
        %3815 = vmatprep.subr.bf16.mxu0 0
        %3816 = vmatpush2.bf16.msra.mxu0 0
        %3817 = vmatprep.subr.bf16.mxu0 0
        %3818 = vmatpush2.bf16.msra.mxu0 0
        %3819 = vmatprep.subr.bf16.mxu0 0
        %3820 = vmatpush2.bf16.msra.mxu0 0
        %3821 = vmatprep.subr.bf16.mxu0 0
        %3822 = vmatpush2.bf16.msra.mxu0 0
        %3823 = vmatprep.mubr.bf16.mxu0 0
        %3824 = vmatmul.mubr.bf16.gmra.mxu0 %v3226
        %v3825 = vpop.f32.mrf.mxu0
        %v3826 = vadd.f32 0.0, %v3825
        %v3827 = vpop.f32.mrf.mxu0
        %v3828 = vpop.f32.mrf.mxu0
        %v3829 = vadd.f32 0.0, %v3828
        %v3830 = vpop.f32.mrf.mxu0
        %3831 = vmatprep.mubr.bf16.mxu0 0
        %3832 = vmatmul.mubr.bf16.gmra.mxu0 %v3227
        %v3833 = vpop.f32.mrf.mxu0
        %v3834 = vadd.f32 0.0, %v3833
        %v3835 = vpop.f32.mrf.mxu0
        %v3836 = vpop.f32.mrf.mxu0
        %v3837 = vadd.f32 0.0, %v3836
        %v3838 = vpop.f32.mrf.mxu0
        %3839 = vmatprep.mubr.bf16.mxu0 0
        %3840 = vmatmul.mubr.bf16.gmra.mxu0 %v3228
        %v3841 = vpop.f32.mrf.mxu0
        %v3842 = vadd.f32 0.0, %v3841
        %v3843 = vpop.f32.mrf.mxu0
        %v3844 = vpop.f32.mrf.mxu0
        %v3845 = vadd.f32 0.0, %v3844
        %v3846 = vpop.f32.mrf.mxu0
        %3847 = vmatprep.mubr.bf16.mxu0 0
        %3848 = vmatmul.mubr.bf16.gmra.mxu0 %v3229
        %v3849 = vpop.f32.mrf.mxu0
        %v3850 = vadd.f32 0.0, %v3849
        %v3851 = vpop.f32.mrf.mxu0
        %v3852 = vpop.f32.mrf.mxu0
        %v3853 = vadd.f32 0.0, %v3852
        %v3854 = vpop.f32.mrf.mxu0
        %3855 = vmatprep.mubr.bf16.mxu0 0
        %3856 = vmatmul.mubr.bf16.gmra.mxu0 %v3230
        %v3857 = vpop.f32.mrf.mxu0
        %v3858 = vadd.f32 0.0, %v3857
        %v3859 = vpop.f32.mrf.mxu0
        %v3860 = vpop.f32.mrf.mxu0
        %v3861 = vadd.f32 0.0, %v3860
        %v3862 = vpop.f32.mrf.mxu0
        %3863 = vmatprep.mubr.bf16.mxu0 0
        %3864 = vmatmul.mubr.bf16.gmra.mxu0 %v3231
        %v3865 = vpop.f32.mrf.mxu0
        %v3866 = vadd.f32 0.0, %v3865
        %v3867 = vpop.f32.mrf.mxu0
        %v3868 = vpop.f32.mrf.mxu0
        %v3869 = vadd.f32 0.0, %v3868
        %v3870 = vpop.f32.mrf.mxu0
        %3871 = vmatprep.mubr.bf16.mxu0 0
        %3872 = vmatmul.mubr.bf16.gmra.mxu0 %v3232
        %v3873 = vpop.f32.mrf.mxu0
        %v3874 = vadd.f32 0.0, %v3873
        %v3875 = vpop.f32.mrf.mxu0
        %v3876 = vpop.f32.mrf.mxu0
        %v3877 = vadd.f32 0.0, %v3876
        %v3878 = vpop.f32.mrf.mxu0
        %3879 = vmatprep.mubr.bf16.mxu0 0
        %3880 = vmatmul.mubr.bf16.gmra.mxu0 %v3233
        %v3881 = vpop.f32.mrf.mxu0
        %v3882 = vadd.f32 0.0, %v3881
        %v3883 = vpop.f32.mrf.mxu0
        %v3884 = vpop.f32.mrf.mxu0
        %v3885 = vadd.f32 0.0, %v3884
        %v3886 = vpop.f32.mrf.mxu0
        %3887 = vdwg.mxu0
        %v3888 = vmul.f32 %v3632, 0.5
        %v3889 = vmul.f32 %v3635, 0.5
        %v3890 = vmul.f32 %v3640, 0.5
        %v3891 = vmul.f32 %v3643, 0.5
        %v3892 = vmul.f32 %v3648, 0.5
        %v3893 = vmul.f32 %v3651, 0.5
        %v3894 = vmul.f32 %v3656, 0.5
        %v3895 = vmul.f32 %v3659, 0.5
        %v3896 = vmul.f32 %v3664, 0.5
        %v3897 = vmul.f32 %v3667, 0.5
        %v3898 = vmul.f32 %v3672, 0.5
        %v3899 = vmul.f32 %v3675, 0.5
        %v3900 = vmul.f32 %v3680, 0.5
        %v3901 = vmul.f32 %v3683, 0.5
        %v3902 = vmul.f32 %v3688, 0.5
        %v3903 = vmul.f32 %v3691, 0.5
        %v3904 = vmul.f32 %v3729, 0.5
        %v3905 = vmul.f32 %v3732, 0.5
        %v3906 = vmul.f32 %v3737, 0.5
        %v3907 = vmul.f32 %v3740, 0.5
        %v3908 = vmul.f32 %v3745, 0.5
        %v3909 = vmul.f32 %v3748, 0.5
        %v3910 = vmul.f32 %v3753, 0.5
        %v3911 = vmul.f32 %v3756, 0.5
        %v3912 = vmul.f32 %v3761, 0.5
        %v3913 = vmul.f32 %v3764, 0.5
        %v3914 = vmul.f32 %v3769, 0.5
        %v3915 = vmul.f32 %v3772, 0.5
        %v3916 = vmul.f32 %v3777, 0.5
        %v3917 = vmul.f32 %v3780, 0.5
        %v3918 = vmul.f32 %v3785, 0.5
        %v3919 = vmul.f32 %v3788, 0.5
        %v3920 = vmul.f32 %v3826, 0.5
        %v3921 = vmul.f32 %v3829, 0.5
        %v3922 = vmul.f32 %v3834, 0.5
        %v3923 = vmul.f32 %v3837, 0.5
        %v3924 = vmul.f32 %v3842, 0.5
        %v3925 = vmul.f32 %v3845, 0.5
        %v3926 = vmul.f32 %v3850, 0.5
        %v3927 = vmul.f32 %v3853, 0.5
        %v3928 = vmul.f32 %v3858, 0.5
        %v3929 = vmul.f32 %v3861, 0.5
        %v3930 = vmul.f32 %v3866, 0.5
        %v3931 = vmul.f32 %v3869, 0.5
        %v3932 = vmul.f32 %v3874, 0.5
        %v3933 = vmul.f32 %v3877, 0.5
        %v3934 = vmul.f32 %v3882, 0.5
        %v3935 = vmul.f32 %v3885, 0.5
        %v3936 = vrsqrt.pop %v1661
        %v3937 = vmul.f32 %v1661, %v3936
        %vm3938 = vcmp.eq.f32.partialorder %v1661, inf
        %v3939 = vsel %vm3938, %v1661, %v3937
        %vm3940 = vcmp.eq.f32.partialorder %v1661, 0.0
        %v3941 = vand.u32 %v1661, 2147483648
        %v3942 = vsel %vm3940, %v3941, %v3939
        %v3943 = vrsqrt.pop %v1662
        %v3944 = vmul.f32 %v1662, %v3943
        %vm3945 = vcmp.eq.f32.partialorder %v1662, inf
        %v3946 = vsel %vm3945, %v1662, %v3944
        %vm3947 = vcmp.eq.f32.partialorder %v1662, 0.0
        %v3948 = vand.u32 %v1662, 2147483648
        %v3949 = vsel %vm3947, %v3948, %v3946
        %v3950 = vrsqrt.pop %v1663
        %v3951 = vmul.f32 %v1663, %v3950
        %vm3952 = vcmp.eq.f32.partialorder %v1663, inf
        %v3953 = vsel %vm3952, %v1663, %v3951
        %vm3954 = vcmp.eq.f32.partialorder %v1663, 0.0
        %v3955 = vand.u32 %v1663, 2147483648
        %v3956 = vsel %vm3954, %v3955, %v3953
        %v3957 = vmul.f32 %v3888, %v3942
        %v3958 = vmul.f32 %v3889, %v3942
        %v3959 = vmul.f32 %v3890, %v3942
        %v3960 = vmul.f32 %v3891, %v3942
        %v3961 = vmul.f32 %v3892, %v3942
        %v3962 = vmul.f32 %v3893, %v3942
        %v3963 = vmul.f32 %v3894, %v3942
        %v3964 = vmul.f32 %v3895, %v3942
        %v3965 = vmul.f32 %v3896, %v3942
        %v3966 = vmul.f32 %v3897, %v3942
        %v3967 = vmul.f32 %v3898, %v3942
        %v3968 = vmul.f32 %v3899, %v3942
        %v3969 = vmul.f32 %v3900, %v3942
        %v3970 = vmul.f32 %v3901, %v3942
        %v3971 = vmul.f32 %v3902, %v3942
        %v3972 = vmul.f32 %v3903, %v3942
        %v3973 = vmul.f32 %v3904, %v3949
        %v3974 = vmul.f32 %v3905, %v3949
        %v3975 = vmul.f32 %v3906, %v3949
        %v3976 = vmul.f32 %v3907, %v3949
        %v3977 = vmul.f32 %v3908, %v3949
        %v3978 = vmul.f32 %v3909, %v3949
        %v3979 = vmul.f32 %v3910, %v3949
        %v3980 = vmul.f32 %v3911, %v3949
        %v3981 = vmul.f32 %v3912, %v3949
        %v3982 = vmul.f32 %v3913, %v3949
        %v3983 = vmul.f32 %v3914, %v3949
        %v3984 = vmul.f32 %v3915, %v3949
        %v3985 = vmul.f32 %v3916, %v3949
        %v3986 = vmul.f32 %v3917, %v3949
        %v3987 = vmul.f32 %v3918, %v3949
        %v3988 = vmul.f32 %v3919, %v3949
        %v3989 = vmul.f32 %v3920, %v3956
        %v3990 = vmul.f32 %v3921, %v3956
        %v3991 = vmul.f32 %v3922, %v3956
        %v3992 = vmul.f32 %v3923, %v3956
        %v3993 = vmul.f32 %v3924, %v3956
        %v3994 = vmul.f32 %v3925, %v3956
        %v3995 = vmul.f32 %v3926, %v3956
        %v3996 = vmul.f32 %v3927, %v3956
        %v3997 = vmul.f32 %v3928, %v3956
        %v3998 = vmul.f32 %v3929, %v3956
        %v3999 = vmul.f32 %v3930, %v3956
        %v4000 = vmul.f32 %v3931, %v3956
        %v4001 = vmul.f32 %v3932, %v3956
        %v4002 = vmul.f32 %v3933, %v3956
        %v4003 = vmul.f32 %v3934, %v3956
        %v4004 = vmul.f32 %v3935, %v3956
        %4005 = vst [vmem:[%s126] sm:$0xff] %v3957
        %4006 = vst [vmem:[%s126 + $0x8] sm:$0xff] %v3958
        %4007 = vst [vmem:[%s126 + $0x10] sm:$0xff] %v3959
        %4008 = vst [vmem:[%s126 + $0x18] sm:$0xff] %v3960
        %4009 = vst [vmem:[%s126 + $0x20] sm:$0xff] %v3961
        %4010 = vst [vmem:[%s126 + $0x28] sm:$0xff] %v3962
        %4011 = vst [vmem:[%s126 + $0x30] sm:$0xff] %v3963
        %4012 = vst [vmem:[%s126 + $0x38] sm:$0xff] %v3964
        %4013 = vst [vmem:[%s126 + $0x40] sm:$0xff] %v3965
        %4014 = vst [vmem:[%s126 + $0x48] sm:$0xff] %v3966
        %4015 = vst [vmem:[%s126 + $0x50] sm:$0xff] %v3967
        %4016 = vst [vmem:[%s126 + $0x58] sm:$0xff] %v3968
        %4017 = vst [vmem:[%s126 + $0x60] sm:$0xff] %v3969
        %4018 = vst [vmem:[%s126 + $0x68] sm:$0xff] %v3970
        %4019 = vst [vmem:[%s126 + $0x70] sm:$0xff] %v3971
        %4020 = vst [vmem:[%s126 + $0x78] sm:$0xff] %v3972
        %4021 = vst [vmem:[%s126 + $0x80] sm:$0xff] %v3973
        %4022 = vst [vmem:[%s126 + $0x88] sm:$0xff] %v3974
        %4023 = vst [vmem:[%s126 + $0x90] sm:$0xff] %v3975
        %4024 = vst [vmem:[%s126 + $0x98] sm:$0xff] %v3976
        %4025 = vst [vmem:[%s126 + $0xa0] sm:$0xff] %v3977
        %4026 = vst [vmem:[%s126 + $0xa8] sm:$0xff] %v3978
        %4027 = vst [vmem:[%s126 + $0xb0] sm:$0xff] %v3979
        %4028 = vst [vmem:[%s126 + $0xb8] sm:$0xff] %v3980
        %4029 = vst [vmem:[%s126 + $0xc0] sm:$0xff] %v3981
        %4030 = vst [vmem:[%s126 + $0xc8] sm:$0xff] %v3982
        %4031 = vst [vmem:[%s126 + $0xd0] sm:$0xff] %v3983
        %4032 = vst [vmem:[%s126 + $0xd8] sm:$0xff] %v3984
        %4033 = vst [vmem:[%s126 + $0xe0] sm:$0xff] %v3985
        %4034 = vst [vmem:[%s126 + $0xe8] sm:$0xff] %v3986
        %4035 = vst [vmem:[%s126 + $0xf0] sm:$0xff] %v3987
        %4036 = vst [vmem:[%s126 + $0xf8] sm:$0xff] %v3988
        %4037 = vst [vmem:[%s126 + $0x100] sm:$0xff] %v3989
        %4038 = vst [vmem:[%s126 + $0x108] sm:$0xff] %v3990
        %4039 = vst [vmem:[%s126 + $0x110] sm:$0xff] %v3991
        %4040 = vst [vmem:[%s126 + $0x118] sm:$0xff] %v3992
        %4041 = vst [vmem:[%s126 + $0x120] sm:$0xff] %v3993
        %4042 = vst [vmem:[%s126 + $0x128] sm:$0xff] %v3994
        %4043 = vst [vmem:[%s126 + $0x130] sm:$0xff] %v3995
        %4044 = vst [vmem:[%s126 + $0x138] sm:$0xff] %v3996
        %4045 = vst [vmem:[%s126 + $0x140] sm:$0xff] %v3997
        %4046 = vst [vmem:[%s126 + $0x148] sm:$0xff] %v3998
        %4047 = vst [vmem:[%s126 + $0x150] sm:$0xff] %v3999
        %4048 = vst [vmem:[%s126 + $0x158] sm:$0xff] %v4000
        %4049 = vst [vmem:[%s126 + $0x160] sm:$0xff] %v4001
        %4050 = vst [vmem:[%s126 + $0x168] sm:$0xff] %v4002
        %4051 = vst [vmem:[%s126 + $0x170] sm:$0xff] %v4003
        %4052 = vst [vmem:[%s126 + $0x178] sm:$0xff] %v4004
        %s4053 = sand.u32 %s46, 1
        %s4054 = sand.u32 %s46, 1
        %s4055 = smul.addr %s4054, 384
        %s4056 = scalar_lea.vmem [#allocation2], %s4055
        // Predicated region
        $region25: #{a_mpncov_forward.1} parent=23 // pred_check
          %p4057 = pneg %p56
        $region26: #{a_mpncov_forward.1} parent=23 // pred_check_branch
          %4059 = sbr.rel (%p4057) target = $region28
        $region27: #{a_mpncov_forward.1} parent=23 // pred_region
          %s4060 = smul.u32 3, %s12
          %s4061 = ssub.s32 5, %s4060
          %p4062 = scmp.lt.s32.totalorder %s4061, 3
          %s4063 = scalar_select %p4062, %s4061, 3
          %s4064 = smul.u32 128, %s4063
          %s4065 = smul.u32 %s4064, 16
          %p4066 = scmp.ne.s32.totalorder 0, %s4065
          %s4067 = smul.addr %s4060, 16
          %s4068 = smul.addr %s4067, 8
          %s4069 = scalar_lea.vmem %s1, %s4068
          %s4070 = smul.u32 %s4063, 16
          // Predicated region
          $region29: #{a_mpncov_forward.1} parent=27 // pred_check
            %p4071 = pneg %p4066
          $region30: #{a_mpncov_forward.1} parent=27 // pred_check_branch
            %4073 = sbr.rel (%p4071) target = $region32
          $region31: #{a_mpncov_forward.1} parent=27 // pred_region
            // Predicated region
            $region33: #{a_mpncov_forward.1} parent=31 // pred_check
              _
            $region34: #{a_mpncov_forward.1} parent=31 // pred_check_branch
              %4075 = sbr.rel (0) target = $region36
            $region35: #{a_mpncov_forward.1} parent=31 // pred_region
              // Predicated region
              $region55: #{a_mpncov_forward.1} parent=35 // pred_check
                _
              $region56: #{a_mpncov_forward.1} parent=35 // pred_check_branch
                %4220 = sbr.rel (0) target = $region58
              $region57: #{a_mpncov_forward.1} parent=35 // pred_region
                %s4221 = sdiv.u32.pop %s4070, 48
                %s4222 = srem.u32.pop %s4070, 48
                // While loop
                $region59: #{a_mpncov_forward.1} parent=57 // loop_pre_header
                  _
                $region60: #{a_mpncov_forward.1} parent=57 // loop_header
                  %s4224 = sphi 0, %s4226
                  %p4225 = scmp.ge.s32.totalorder %s4224, %s4221
                  %s4229 = sphi 0, %s4330
                  %s4230 = sphi %s4056, %s4333
                  %s4231 = sphi %s4069, %s4334
                $region61: #{a_mpncov_forward.1} parent=57 // loop_header_branch
                  %4228 = sbr.rel (%p4225) target = $region65
                $region62: #{a_mpncov_forward.1} parent=57 // loop_body
                  %v4232 = vld [vmem:[%s4230] sm:$0xff]
                  %4233 = vst [vmem:[%s4231] sm:$0xff] %v4232
                  %v4234 = vld [vmem:[%s4230 + $0x8] sm:$0xff]
                  %4235 = vst [vmem:[%s4231 + $0x8] sm:$0xff] %v4234
                  %v4236 = vld [vmem:[%s4230 + $0x10] sm:$0xff]
                  %4237 = vst [vmem:[%s4231 + $0x10] sm:$0xff] %v4236
                  %v4238 = vld [vmem:[%s4230 + $0x18] sm:$0xff]
                  %4239 = vst [vmem:[%s4231 + $0x18] sm:$0xff] %v4238
                  %v4240 = vld [vmem:[%s4230 + $0x20] sm:$0xff]
                  %4241 = vst [vmem:[%s4231 + $0x20] sm:$0xff] %v4240
                  %v4242 = vld [vmem:[%s4230 + $0x28] sm:$0xff]
                  %4243 = vst [vmem:[%s4231 + $0x28] sm:$0xff] %v4242
                  %v4244 = vld [vmem:[%s4230 + $0x30] sm:$0xff]
                  %4245 = vst [vmem:[%s4231 + $0x30] sm:$0xff] %v4244
                  %v4246 = vld [vmem:[%s4230 + $0x38] sm:$0xff]
                  %4247 = vst [vmem:[%s4231 + $0x38] sm:$0xff] %v4246
                  %v4248 = vld [vmem:[%s4230 + $0x40] sm:$0xff]
                  %4249 = vst [vmem:[%s4231 + $0x40] sm:$0xff] %v4248
                  %v4250 = vld [vmem:[%s4230 + $0x48] sm:$0xff]
                  %4251 = vst [vmem:[%s4231 + $0x48] sm:$0xff] %v4250
                  %v4252 = vld [vmem:[%s4230 + $0x50] sm:$0xff]
                  %4253 = vst [vmem:[%s4231 + $0x50] sm:$0xff] %v4252
                  %v4254 = vld [vmem:[%s4230 + $0x58] sm:$0xff]
                  %4255 = vst [vmem:[%s4231 + $0x58] sm:$0xff] %v4254
                  %v4256 = vld [vmem:[%s4230 + $0x60] sm:$0xff]
                  %4257 = vst [vmem:[%s4231 + $0x60] sm:$0xff] %v4256
                  %v4258 = vld [vmem:[%s4230 + $0x68] sm:$0xff]
                  %4259 = vst [vmem:[%s4231 + $0x68] sm:$0xff] %v4258
                  %v4260 = vld [vmem:[%s4230 + $0x70] sm:$0xff]
                  %4261 = vst [vmem:[%s4231 + $0x70] sm:$0xff] %v4260
                  %v4262 = vld [vmem:[%s4230 + $0x78] sm:$0xff]
                  %4263 = vst [vmem:[%s4231 + $0x78] sm:$0xff] %v4262
                  %v4264 = vld [vmem:[%s4230 + $0x80] sm:$0xff]
                  %4265 = vst [vmem:[%s4231 + $0x80] sm:$0xff] %v4264
                  %v4266 = vld [vmem:[%s4230 + $0x88] sm:$0xff]
                  %4267 = vst [vmem:[%s4231 + $0x88] sm:$0xff] %v4266
                  %v4268 = vld [vmem:[%s4230 + $0x90] sm:$0xff]
                  %4269 = vst [vmem:[%s4231 + $0x90] sm:$0xff] %v4268
                  %v4270 = vld [vmem:[%s4230 + $0x98] sm:$0xff]
                  %4271 = vst [vmem:[%s4231 + $0x98] sm:$0xff] %v4270
                  %v4272 = vld [vmem:[%s4230 + $0xa0] sm:$0xff]
                  %4273 = vst [vmem:[%s4231 + $0xa0] sm:$0xff] %v4272
                  %v4274 = vld [vmem:[%s4230 + $0xa8] sm:$0xff]
                  %4275 = vst [vmem:[%s4231 + $0xa8] sm:$0xff] %v4274
                  %v4276 = vld [vmem:[%s4230 + $0xb0] sm:$0xff]
                  %4277 = vst [vmem:[%s4231 + $0xb0] sm:$0xff] %v4276
                  %v4278 = vld [vmem:[%s4230 + $0xb8] sm:$0xff]
                  %4279 = vst [vmem:[%s4231 + $0xb8] sm:$0xff] %v4278
                  %v4280 = vld [vmem:[%s4230 + $0xc0] sm:$0xff]
                  %4281 = vst [vmem:[%s4231 + $0xc0] sm:$0xff] %v4280
                  %v4282 = vld [vmem:[%s4230 + $0xc8] sm:$0xff]
                  %4283 = vst [vmem:[%s4231 + $0xc8] sm:$0xff] %v4282
                  %v4284 = vld [vmem:[%s4230 + $0xd0] sm:$0xff]
                  %4285 = vst [vmem:[%s4231 + $0xd0] sm:$0xff] %v4284
                  %v4286 = vld [vmem:[%s4230 + $0xd8] sm:$0xff]
                  %4287 = vst [vmem:[%s4231 + $0xd8] sm:$0xff] %v4286
                  %v4288 = vld [vmem:[%s4230 + $0xe0] sm:$0xff]
                  %4289 = vst [vmem:[%s4231 + $0xe0] sm:$0xff] %v4288
                  %v4290 = vld [vmem:[%s4230 + $0xe8] sm:$0xff]
                  %4291 = vst [vmem:[%s4231 + $0xe8] sm:$0xff] %v4290
                  %v4292 = vld [vmem:[%s4230 + $0xf0] sm:$0xff]
                  %4293 = vst [vmem:[%s4231 + $0xf0] sm:$0xff] %v4292
                  %v4294 = vld [vmem:[%s4230 + $0xf8] sm:$0xff]
                  %4295 = vst [vmem:[%s4231 + $0xf8] sm:$0xff] %v4294
                  %v4296 = vld [vmem:[%s4230 + $0x100] sm:$0xff]
                  %4297 = vst [vmem:[%s4231 + $0x100] sm:$0xff] %v4296
                  %v4298 = vld [vmem:[%s4230 + $0x108] sm:$0xff]
                  %4299 = vst [vmem:[%s4231 + $0x108] sm:$0xff] %v4298
                  %v4300 = vld [vmem:[%s4230 + $0x110] sm:$0xff]
                  %4301 = vst [vmem:[%s4231 + $0x110] sm:$0xff] %v4300
                  %v4302 = vld [vmem:[%s4230 + $0x118] sm:$0xff]
                  %4303 = vst [vmem:[%s4231 + $0x118] sm:$0xff] %v4302
                  %v4304 = vld [vmem:[%s4230 + $0x120] sm:$0xff]
                  %4305 = vst [vmem:[%s4231 + $0x120] sm:$0xff] %v4304
                  %v4306 = vld [vmem:[%s4230 + $0x128] sm:$0xff]
                  %4307 = vst [vmem:[%s4231 + $0x128] sm:$0xff] %v4306
                  %v4308 = vld [vmem:[%s4230 + $0x130] sm:$0xff]
                  %4309 = vst [vmem:[%s4231 + $0x130] sm:$0xff] %v4308
                  %v4310 = vld [vmem:[%s4230 + $0x138] sm:$0xff]
                  %4311 = vst [vmem:[%s4231 + $0x138] sm:$0xff] %v4310
                  %v4312 = vld [vmem:[%s4230 + $0x140] sm:$0xff]
                  %4313 = vst [vmem:[%s4231 + $0x140] sm:$0xff] %v4312
                  %v4314 = vld [vmem:[%s4230 + $0x148] sm:$0xff]
                  %4315 = vst [vmem:[%s4231 + $0x148] sm:$0xff] %v4314
                  %v4316 = vld [vmem:[%s4230 + $0x150] sm:$0xff]
                  %4317 = vst [vmem:[%s4231 + $0x150] sm:$0xff] %v4316
                  %v4318 = vld [vmem:[%s4230 + $0x158] sm:$0xff]
                  %4319 = vst [vmem:[%s4231 + $0x158] sm:$0xff] %v4318
                  %v4320 = vld [vmem:[%s4230 + $0x160] sm:$0xff]
                  %4321 = vst [vmem:[%s4231 + $0x160] sm:$0xff] %v4320
                  %v4322 = vld [vmem:[%s4230 + $0x168] sm:$0xff]
                  %4323 = vst [vmem:[%s4231 + $0x168] sm:$0xff] %v4322
                  %v4324 = vld [vmem:[%s4230 + $0x170] sm:$0xff]
                  %4325 = vst [vmem:[%s4231 + $0x170] sm:$0xff] %v4324
                  %v4326 = vld [vmem:[%s4230 + $0x178] sm:$0xff]
                  %4327 = vst [vmem:[%s4231 + $0x178] sm:$0xff] %v4326
                  %s4328 = sadd.s32 1, %s4229
                  %p4329 = scmp.ge.s32.totalorder %s4328, %s4221
                  %s4330 = scalar_select %p4329, 0, %s4328
                  %s4331 = smul.u32 %s4330, 384
                  %s4332 = smul.u32 %s4330, 384
                  %s4333 = scalar_lea.vmem %s4056, %s4331 [#allocation2]
                  %s4334 = scalar_lea.vmem %s4069, %s4332
                $region63: #{a_mpncov_forward.1} parent=57 // loop_footer
                  %s4226 = sadd.s32 %s4224, 1
                $region64: #{a_mpncov_forward.1} parent=57 // loop_footer_branch
                  %4223 = sbr.rel target = $region60
                $region65: #{a_mpncov_forward.1} parent=57 // loop_exit
                  _
                %s4335 = sdiv.u32.pop %s4070, 48
                %s4336 = srem.u32.pop %s4070, 48
                %s4337 = smul.u32 %s4335, 48
                %s4338 = smul.u32 8, %s4337
                %s4339 = scalar_lea.vmem %s4056, %s4338 [#allocation2]
                %s4340 = smul.u32 8, %s4337
                %s4341 = scalar_lea.vmem %s4069, %s4340
                // While loop
                $region66: #{a_mpncov_forward.1} parent=57 // loop_pre_header
                  _
                $region67: #{a_mpncov_forward.1} parent=57 // loop_header
                  %s4343 = sphi 0, %s4345
                  %p4344 = scmp.ge.s32.totalorder %s4343, %s4336
                  %s4348 = sphi 0, %s4355
                  %s4349 = sphi %s4339, %s4358
                  %s4350 = sphi %s4341, %s4359
                $region68: #{a_mpncov_forward.1} parent=57 // loop_header_branch
                  %4347 = sbr.rel (%p4344) target = $region72
                $region69: #{a_mpncov_forward.1} parent=57 // loop_body
                  %v4351 = vld [vmem:[%s4349] sm:$0xff]
                  %4352 = vst [vmem:[%s4350] sm:$0xff] %v4351
                  %s4353 = sadd.s32 1, %s4348
                  %p4354 = scmp.ge.s32.totalorder %s4353, %s4336
                  %s4355 = scalar_select %p4354, 0, %s4353
                  %s4356 = smul.u32 %s4355, 8
                  %s4357 = smul.u32 %s4355, 8
                  %s4358 = scalar_lea.vmem %s4339, %s4356 [#allocation2]
                  %s4359 = scalar_lea.vmem %s4341, %s4357
                $region70: #{a_mpncov_forward.1} parent=57 // loop_footer
                  %s4345 = sadd.s32 %s4343, 1
                $region71: #{a_mpncov_forward.1} parent=57 // loop_footer_branch
                  %4342 = sbr.rel target = $region67
                $region72: #{a_mpncov_forward.1} parent=57 // loop_exit
                  _
              $region58: #{a_mpncov_forward.1} parent=35 // pred_fallthru
                _
              // Predicated region
              $region73: #{a_mpncov_forward.1} parent=35 // pred_check
                _
              $region74: #{a_mpncov_forward.1} parent=35 // pred_check_branch
                %4361 = sbr.rel target = $region76
              $region75: #{a_mpncov_forward.1} parent=35 // pred_region
                _
              $region76: #{a_mpncov_forward.1} parent=35 // pred_fallthru
                _
            $region36: #{a_mpncov_forward.1} parent=31 // pred_fallthru
              _
            // Predicated region
            $region37: #{a_mpncov_forward.1} parent=31 // pred_check
              _
            $region38: #{a_mpncov_forward.1} parent=31 // pred_check_branch
              %4077 = sbr.rel target = $region40
            $region39: #{a_mpncov_forward.1} parent=31 // pred_region
              %s4079 = ssub.s32 256, 1
              %s4080 = sdiv.u32.pop %s4070, 48
              %s4081 = srem.u32.pop %s4070, 48
              // While loop
              $region41: #{a_mpncov_forward.1} parent=39 // loop_pre_header
                _
              $region42: #{a_mpncov_forward.1} parent=39 // loop_header
                %s4083 = sphi 0, %s4085
                %p4084 = scmp.ge.s32.totalorder %s4083, %s4080
                %s4088 = sphi 0, %s4189
                %s4089 = sphi %s4056, %s4192
                %s4090 = sphi %s4069, %s4193
              $region43: #{a_mpncov_forward.1} parent=39 // loop_header_branch
                %4087 = sbr.rel (%p4084) target = $region47
              $region44: #{a_mpncov_forward.1} parent=39 // loop_body
                %v4091 = vld [vmem:[%s4089] sm:%s4079]
                %4092 = vst [vmem:[%s4090] sm:%s4079] %v4091
                %v4093 = vld [vmem:[%s4089 + $0x8] sm:%s4079]
                %4094 = vst [vmem:[%s4090 + $0x8] sm:%s4079] %v4093
                %v4095 = vld [vmem:[%s4089 + $0x10] sm:%s4079]
                %4096 = vst [vmem:[%s4090 + $0x10] sm:%s4079] %v4095
                %v4097 = vld [vmem:[%s4089 + $0x18] sm:%s4079]
                %4098 = vst [vmem:[%s4090 + $0x18] sm:%s4079] %v4097
                %v4099 = vld [vmem:[%s4089 + $0x20] sm:%s4079]
                %4100 = vst [vmem:[%s4090 + $0x20] sm:%s4079] %v4099
                %v4101 = vld [vmem:[%s4089 + $0x28] sm:%s4079]
                %4102 = vst [vmem:[%s4090 + $0x28] sm:%s4079] %v4101
                %v4103 = vld [vmem:[%s4089 + $0x30] sm:%s4079]
                %4104 = vst [vmem:[%s4090 + $0x30] sm:%s4079] %v4103
                %v4105 = vld [vmem:[%s4089 + $0x38] sm:%s4079]
                %4106 = vst [vmem:[%s4090 + $0x38] sm:%s4079] %v4105
                %v4107 = vld [vmem:[%s4089 + $0x40] sm:%s4079]
                %4108 = vst [vmem:[%s4090 + $0x40] sm:%s4079] %v4107
                %v4109 = vld [vmem:[%s4089 + $0x48] sm:%s4079]
                %4110 = vst [vmem:[%s4090 + $0x48] sm:%s4079] %v4109
                %v4111 = vld [vmem:[%s4089 + $0x50] sm:%s4079]
                %4112 = vst [vmem:[%s4090 + $0x50] sm:%s4079] %v4111
                %v4113 = vld [vmem:[%s4089 + $0x58] sm:%s4079]
                %4114 = vst [vmem:[%s4090 + $0x58] sm:%s4079] %v4113
                %v4115 = vld [vmem:[%s4089 + $0x60] sm:%s4079]
                %4116 = vst [vmem:[%s4090 + $0x60] sm:%s4079] %v4115
                %v4117 = vld [vmem:[%s4089 + $0x68] sm:%s4079]
                %4118 = vst [vmem:[%s4090 + $0x68] sm:%s4079] %v4117
                %v4119 = vld [vmem:[%s4089 + $0x70] sm:%s4079]
                %4120 = vst [vmem:[%s4090 + $0x70] sm:%s4079] %v4119
                %v4121 = vld [vmem:[%s4089 + $0x78] sm:%s4079]
                %4122 = vst [vmem:[%s4090 + $0x78] sm:%s4079] %v4121
                %v4123 = vld [vmem:[%s4089 + $0x80] sm:%s4079]
                %4124 = vst [vmem:[%s4090 + $0x80] sm:%s4079] %v4123
                %v4125 = vld [vmem:[%s4089 + $0x88] sm:%s4079]
                %4126 = vst [vmem:[%s4090 + $0x88] sm:%s4079] %v4125
                %v4127 = vld [vmem:[%s4089 + $0x90] sm:%s4079]
                %4128 = vst [vmem:[%s4090 + $0x90] sm:%s4079] %v4127
                %v4129 = vld [vmem:[%s4089 + $0x98] sm:%s4079]
                %4130 = vst [vmem:[%s4090 + $0x98] sm:%s4079] %v4129
                %v4131 = vld [vmem:[%s4089 + $0xa0] sm:%s4079]
                %4132 = vst [vmem:[%s4090 + $0xa0] sm:%s4079] %v4131
                %v4133 = vld [vmem:[%s4089 + $0xa8] sm:%s4079]
                %4134 = vst [vmem:[%s4090 + $0xa8] sm:%s4079] %v4133
                %v4135 = vld [vmem:[%s4089 + $0xb0] sm:%s4079]
                %4136 = vst [vmem:[%s4090 + $0xb0] sm:%s4079] %v4135
                %v4137 = vld [vmem:[%s4089 + $0xb8] sm:%s4079]
                %4138 = vst [vmem:[%s4090 + $0xb8] sm:%s4079] %v4137
                %v4139 = vld [vmem:[%s4089 + $0xc0] sm:%s4079]
                %4140 = vst [vmem:[%s4090 + $0xc0] sm:%s4079] %v4139
                %v4141 = vld [vmem:[%s4089 + $0xc8] sm:%s4079]
                %4142 = vst [vmem:[%s4090 + $0xc8] sm:%s4079] %v4141
                %v4143 = vld [vmem:[%s4089 + $0xd0] sm:%s4079]
                %4144 = vst [vmem:[%s4090 + $0xd0] sm:%s4079] %v4143
                %v4145 = vld [vmem:[%s4089 + $0xd8] sm:%s4079]
                %4146 = vst [vmem:[%s4090 + $0xd8] sm:%s4079] %v4145
                %v4147 = vld [vmem:[%s4089 + $0xe0] sm:%s4079]
                %4148 = vst [vmem:[%s4090 + $0xe0] sm:%s4079] %v4147
                %v4149 = vld [vmem:[%s4089 + $0xe8] sm:%s4079]
                %4150 = vst [vmem:[%s4090 + $0xe8] sm:%s4079] %v4149
                %v4151 = vld [vmem:[%s4089 + $0xf0] sm:%s4079]
                %4152 = vst [vmem:[%s4090 + $0xf0] sm:%s4079] %v4151
                %v4153 = vld [vmem:[%s4089 + $0xf8] sm:%s4079]
                %4154 = vst [vmem:[%s4090 + $0xf8] sm:%s4079] %v4153
                %v4155 = vld [vmem:[%s4089 + $0x100] sm:%s4079]
                %4156 = vst [vmem:[%s4090 + $0x100] sm:%s4079] %v4155
                %v4157 = vld [vmem:[%s4089 + $0x108] sm:%s4079]
                %4158 = vst [vmem:[%s4090 + $0x108] sm:%s4079] %v4157
                %v4159 = vld [vmem:[%s4089 + $0x110] sm:%s4079]
                %4160 = vst [vmem:[%s4090 + $0x110] sm:%s4079] %v4159
                %v4161 = vld [vmem:[%s4089 + $0x118] sm:%s4079]
                %4162 = vst [vmem:[%s4090 + $0x118] sm:%s4079] %v4161
                %v4163 = vld [vmem:[%s4089 + $0x120] sm:%s4079]
                %4164 = vst [vmem:[%s4090 + $0x120] sm:%s4079] %v4163
                %v4165 = vld [vmem:[%s4089 + $0x128] sm:%s4079]
                %4166 = vst [vmem:[%s4090 + $0x128] sm:%s4079] %v4165
                %v4167 = vld [vmem:[%s4089 + $0x130] sm:%s4079]
                %4168 = vst [vmem:[%s4090 + $0x130] sm:%s4079] %v4167
                %v4169 = vld [vmem:[%s4089 + $0x138] sm:%s4079]
                %4170 = vst [vmem:[%s4090 + $0x138] sm:%s4079] %v4169
                %v4171 = vld [vmem:[%s4089 + $0x140] sm:%s4079]
                %4172 = vst [vmem:[%s4090 + $0x140] sm:%s4079] %v4171
                %v4173 = vld [vmem:[%s4089 + $0x148] sm:%s4079]
                %4174 = vst [vmem:[%s4090 + $0x148] sm:%s4079] %v4173
                %v4175 = vld [vmem:[%s4089 + $0x150] sm:%s4079]
                %4176 = vst [vmem:[%s4090 + $0x150] sm:%s4079] %v4175
                %v4177 = vld [vmem:[%s4089 + $0x158] sm:%s4079]
                %4178 = vst [vmem:[%s4090 + $0x158] sm:%s4079] %v4177
                %v4179 = vld [vmem:[%s4089 + $0x160] sm:%s4079]
                %4180 = vst [vmem:[%s4090 + $0x160] sm:%s4079] %v4179
                %v4181 = vld [vmem:[%s4089 + $0x168] sm:%s4079]
                %4182 = vst [vmem:[%s4090 + $0x168] sm:%s4079] %v4181
                %v4183 = vld [vmem:[%s4089 + $0x170] sm:%s4079]
                %4184 = vst [vmem:[%s4090 + $0x170] sm:%s4079] %v4183
                %v4185 = vld [vmem:[%s4089 + $0x178] sm:%s4079]
                %4186 = vst [vmem:[%s4090 + $0x178] sm:%s4079] %v4185
                %s4187 = sadd.s32 1, %s4088
                %p4188 = scmp.ge.s32.totalorder %s4187, %s4080
                %s4189 = scalar_select %p4188, 0, %s4187
                %s4190 = smul.u32 %s4189, 384
                %s4191 = smul.u32 %s4189, 384
                %s4192 = scalar_lea.vmem %s4056, %s4190 [#allocation2]
                %s4193 = scalar_lea.vmem %s4069, %s4191
              $region45: #{a_mpncov_forward.1} parent=39 // loop_footer
                %s4085 = sadd.s32 %s4083, 1
              $region46: #{a_mpncov_forward.1} parent=39 // loop_footer_branch
                %4082 = sbr.rel target = $region42
              $region47: #{a_mpncov_forward.1} parent=39 // loop_exit
                _
              %s4194 = sdiv.u32.pop %s4070, 48
              %s4195 = srem.u32.pop %s4070, 48
              %s4196 = smul.u32 %s4194, 48
              %s4197 = smul.u32 8, %s4196
              %s4198 = scalar_lea.vmem %s4056, %s4197 [#allocation2]
              %s4199 = smul.u32 8, %s4196
              %s4200 = scalar_lea.vmem %s4069, %s4199
              // While loop
              $region48: #{a_mpncov_forward.1} parent=39 // loop_pre_header
                _
              $region49: #{a_mpncov_forward.1} parent=39 // loop_header
                %s4202 = sphi 0, %s4204
                %p4203 = scmp.ge.s32.totalorder %s4202, %s4195
                %s4207 = sphi 0, %s4214
                %s4208 = sphi %s4198, %s4217
                %s4209 = sphi %s4200, %s4218
              $region50: #{a_mpncov_forward.1} parent=39 // loop_header_branch
                %4206 = sbr.rel (%p4203) target = $region54
              $region51: #{a_mpncov_forward.1} parent=39 // loop_body
                %v4210 = vld [vmem:[%s4208] sm:%s4079]
                %4211 = vst [vmem:[%s4209] sm:%s4079] %v4210
                %s4212 = sadd.s32 1, %s4207
                %p4213 = scmp.ge.s32.totalorder %s4212, %s4195
                %s4214 = scalar_select %p4213, 0, %s4212
                %s4215 = smul.u32 %s4214, 8
                %s4216 = smul.u32 %s4214, 8
                %s4217 = scalar_lea.vmem %s4198, %s4215 [#allocation2]
                %s4218 = scalar_lea.vmem %s4200, %s4216
              $region52: #{a_mpncov_forward.1} parent=39 // loop_footer
                %s4204 = sadd.s32 %s4202, 1
              $region53: #{a_mpncov_forward.1} parent=39 // loop_footer_branch
                %4201 = sbr.rel target = $region49
              $region54: #{a_mpncov_forward.1} parent=39 // loop_exit
                _
            $region40: #{a_mpncov_forward.1} parent=31 // pred_fallthru
              _
          $region32: #{a_mpncov_forward.1} parent=27 // pred_fallthru
            _
          %4362 = vnop
        $region28: #{a_mpncov_forward.1} parent=23 // pred_fallthru
          _
      $region24: #{a_mpncov_forward.1} parent=5 // pred_fallthru
        _
      %p4363 = scmp.le.s32.totalorder 2, %s7
      // Predicated region
      $region77: #{a_mpncov_forward.1} parent=5 // pred_check
        %p4364 = pneg %p4363
      $region78: #{a_mpncov_forward.1} parent=5 // pred_check_branch
        %4366 = sbr.rel (%p4364) target = $region80
      $region79: #{a_mpncov_forward.1} parent=5 // pred_region
        %s4367 = ssub.s32 %s7, 2
        // Predicated region
        $region81: #{a_mpncov_forward.1} parent=79 // pred_check
          %p4368 = pneg %p62
        $region82: #{a_mpncov_forward.1} parent=79 // pred_check_branch
          %4370 = sbr.rel (%p4368) target = $region84
        $region83: #{a_mpncov_forward.1} parent=79 // pred_region
          %s4371 = sand.u32 %s47, 1
          %s4372 = sand.u32 %s47, 1
          %s4373 = smul.addr %s4372, 384
          %s4374 = scalar_lea.vmem [#allocation2], %s4373
        $region84: #{a_mpncov_forward.1} parent=79 // pred_fallthru
          _
      $region80: #{a_mpncov_forward.1} parent=5 // pred_fallthru
        _
    $region6: #{a_mpncov_forward.1} parent=1 // loop_footer
      %s11 = sadd.s32 1, %s7
    $region7: #{a_mpncov_forward.1} parent=1 // loop_footer_branch
      %6 = sbr.rel target = $region3
    $region8: #{a_mpncov_forward.1} parent=1 // loop_exit
      _

</llo_original>
